<compile_context>
chip_gen: v6e
topology: v6e:2x2x1
jax: 0.10.0
libtpu: 0.0.40
codegen_flags: <defaults>
</compile_context>

<pallas_src>
import jax
import jax.numpy as jnp
import numpy as np
from jax.experimental import pallas as pl
from jax.experimental.pallas import tpu as pltpu


def _round_up(x, m):
    return (x + m - 1) // m * m


# ---------------------------------------------------------------------------
# Kernel A: tiled (M, K) x (K, C) matmul + folded-BN shift + SiLU.
# bf16 operands on the MXU, f32 accumulation / epilogue, lane-dense bf16 out.
# ---------------------------------------------------------------------------
def matmul_bn_silu_kernel(p_ref, w_ref, shift_ref, o_ref):
    acc = jnp.dot(p_ref[...], w_ref[...], preferred_element_type=jnp.float32)
    y = acc + shift_ref[...]                  # (1, C) broadcast over rows
    o_ref[...] = (y * jax.nn.sigmoid(y)).astype(o_ref.dtype)


def conv_bn_silu_pallas(patches, w_flat, shift, tm):
    Mp, Kp = patches.shape
    _, Cp = w_flat.shape
    return pl.pallas_call(
        matmul_bn_silu_kernel,
        out_shape=jax.ShapeDtypeStruct((Mp, Cp), jnp.bfloat16),
        grid=(Mp // tm,),
        in_specs=[
            pl.BlockSpec((tm, Kp), lambda i: (i, 0)),
            pl.BlockSpec((Kp, Cp), lambda i: (0, 0)),
            pl.BlockSpec((1, Cp), lambda i: (0, 0)),
        ],
        out_specs=pl.BlockSpec((tm, Cp), lambda i: (i, 0)),
        compiler_params=pltpu.CompilerParams(dimension_semantics=("parallel",)),
    )(patches, w_flat, shift)


# ---------------------------------------------------------------------------
# Kernel B: last layer — same matmul + BN shift + SiLU, with the global
# AdaptiveAvgPool((1,1)) fused into the epilogue (grid over batch images).
# ---------------------------------------------------------------------------
def make_pool_kernel(valid_rows):
    inv = 1.0 / float(valid_rows)

    def kernel(p_ref, w_ref, shift_ref, o_ref):
        acc = jnp.dot(p_ref[0], w_ref[...], preferred_element_type=jnp.float32)
        y = acc + shift_ref[...]
        y = y * jax.nn.sigmoid(y)
        row = jax.lax.broadcasted_iota(jnp.int32, y.shape, 0)
        y = jnp.where(row < valid_rows, y, 0.0)   # mask padded patch rows
        o_ref[...] = (jnp.sum(y, axis=0, keepdims=True) * inv)[None].astype(o_ref.dtype)

    return kernel


def conv_bn_silu_pool_pallas(patches_img, w_flat, shift, valid_rows):
    N, Mi, Kp = patches_img.shape
    _, Cp = w_flat.shape
    kernel = make_pool_kernel(valid_rows)
    return pl.pallas_call(
        kernel,
        out_shape=jax.ShapeDtypeStruct((N, 1, Cp), jnp.float32),
        grid=(N,),
        in_specs=[
            pl.BlockSpec((1, Mi, Kp), lambda n: (n, 0, 0)),
            pl.BlockSpec((Kp, Cp), lambda n: (0, 0)),
            pl.BlockSpec((1, Cp), lambda n: (0, 0)),
        ],
        out_specs=pl.BlockSpec((1, 1, Cp), lambda n: (n, 0, 0)),
        compiler_params=pltpu.CompilerParams(dimension_semantics=("parallel",)),
    )(patches_img, w_flat, shift)


# ---------------------------------------------------------------------------
# Trace-time glue: im2col, BN folding, channel/K padding.
# ---------------------------------------------------------------------------
def im2col(x_nhwc, ksz, stride, pad):
    x = jnp.pad(x_nhwc, ((0, 0), (pad, pad), (pad, pad), (0, 0)))
    N, Hp, Wp, C = x.shape
    Hout = (Hp - ksz) // stride + 1
    Wout = (Wp - ksz) // stride + 1
    cols = []
    for i in range(ksz):
        for j in range(ksz):
            cols.append(x[:, i:i + stride * Hout:stride, j:j + stride * Wout:stride, :])
    patches = jnp.stack(cols, axis=-2)                    # (N, Hout, Wout, k*k, C)
    return patches.reshape(N, Hout * Wout, ksz * ksz * C), Hout, Wout


def pick_tm(M):
    Mp = _round_up(M, 8)
    if Mp >= 512:
        tm = 256                       # >=2 grid steps -> both TensorCores busy
        Mp = _round_up(Mp, tm)
    else:
        tm = Mp
    return tm, Mp


def prepare_layer(p, cin_p, eps=1e-5):
    # Fold eval-mode BN scale into the conv weights; keep only the shift.
    w = p["w"]
    cout, cin, ksz, _ = w.shape
    scale = p["gamma"] * jax.lax.rsqrt(p["var"] + eps)
    shift = p["beta"] - p["mean"] * scale
    cout_p = _round_up(cout, 128)
    w_fold = (w * scale[:, None, None, None]).astype(jnp.float32)
    w_hwio = jnp.transpose(w_fold, (2, 3, 1, 0))          # (kh, kw, cin, cout)
    w_hwio = jnp.pad(w_hwio, ((0, 0), (0, 0), (0, cin_p - cin), (0, cout_p - cout)))
    K = ksz * ksz * cin_p
    Kp = _round_up(K, 128)
    w_flat = jnp.pad(w_hwio.reshape(K, cout_p), ((0, Kp - K), (0, 0)))
    shift_p = jnp.pad(shift, (0, cout_p - cout)).reshape(1, cout_p)
    return dict(w_flat=w_flat.astype(jnp.bfloat16),
                shift=shift_p.astype(jnp.float32),
                cout=cout, cout_p=cout_p, Kp=Kp,
                ksz=ksz, stride=p["stride"], pad=p["pad"])


def init_params(key, hidden_dim):
    # (cin, cout, kernel, stride, pad) — mirrors Vision.__init__
    configs = [
        (3, 64, 7, 2, 3),
        (64, 128, 3, 2, 1),
        (128, 256, 3, 2, 1),
        (256, hidden_dim, 3, 2, 1),
    ]
    params = []
    for cin, cout, ksz, stride, pad in configs:
        key, k1, k2, k3, k4, k5 = jax.random.split(key, 6)
        fan_in = cin * ksz * ksz
        w = jax.random.normal(k1, (cout, cin, ksz, ksz), jnp.float32) / jnp.sqrt(fan_in)
        gamma = jax.random.uniform(k2, (cout,), jnp.float32, 0.5, 1.5)
        beta = jax.random.normal(k3, (cout,), jnp.float32) * 0.1
        rmean = jax.random.normal(k4, (cout,), jnp.float32) * 0.1
        rvar = jax.random.uniform(k5, (cout,), jnp.float32, 0.5, 1.5)
        params.append(dict(w=w, gamma=gamma, beta=beta, mean=rmean, var=rvar,
                           ksz=ksz, stride=stride, pad=pad))
    return params


# ---------------------------------------------------------------------------
# Forward passes
# ---------------------------------------------------------------------------
def vision_forward(x_nchw, params):
    x = jnp.transpose(x_nchw, (0, 2, 3, 1)).astype(jnp.bfloat16)   # NCHW -> NHWC bf16
    N = x.shape[0]
    cin_p = x.shape[-1]
    preps = []
    for p in params:
        pr = prepare_layer(p, cin_p)
        preps.append(pr)
        cin_p = pr["cout_p"]           # padded channels carried layer-to-layer

    # ---- layers 1..3: im2col + tiled MXU matmul (+ folded BN shift + SiLU) ----
    for pr in preps[:3]:
        patches, Hout, Wout = im2col(x, pr["ksz"], pr["stride"], pr["pad"])
        M = N * Hout * Wout
        patches = patches.reshape(M, -1)
        K = patches.shape[1]
        tm, Mp = pick_tm(M)
        patches = jnp.pad(patches, ((0, Mp - M), (0, pr["Kp"] - K)))
        y = conv_bn_silu_pallas(patches, pr["w_flat"], pr["shift"], tm)
        x = y[:M].reshape(N, Hout, Wout, pr["cout_p"])

    # ---- layer 4 with AdaptiveAvgPool((1,1)) fused into the epilogue ----
    pr = preps[3]
    patches, Hout, Wout = im2col(x, pr["ksz"], pr["stride"], pr["pad"])
    Mi = Hout * Wout
    Mi_p = _round_up(Mi, 8)
    K = patches.shape[-1]
    patches = jnp.pad(patches, ((0, 0), (0, Mi_p - Mi), (0, pr["Kp"] - K)))
    pooled = conv_bn_silu_pool_pallas(patches, pr["w_flat"], pr["shift"], Mi)
    pooled = pooled[:, 0, :pr["cout"]]                    # drop lane padding
    return pooled[:, :, None, None]                       # (N, C, 1, 1) like PyTorch


def vision_forward_ref(x_nchw, params, eps=1e-5):
    # Independent pure-JAX/f32 reference using XLA's conv.
    x = jnp.transpose(x_nchw, (0, 2, 3, 1))
    for p in params:
        w = jnp.transpose(p["w"], (2, 3, 1, 0))           # HWIO
        y = jax.lax.conv_general_dilated(
            x, w, window_strides=(p["stride"], p["stride"]),
            padding=[(p["pad"], p["pad"]), (p["pad"], p["pad"])],
            dimension_numbers=("NHWC", "HWIO", "NHWC"))
        scale = p["gamma"] * jax.lax.rsqrt(p["var"] + eps)
        shift = p["beta"] - p["mean"] * scale
        y = y * scale + shift
        x = y * jax.nn.sigmoid(y)
    pooled = jnp.mean(x, axis=(1, 2))                     # (N, C)
    return pooled[:, :, None, None]


# ---------------------------------------------------------------------------
if __name__ == "__main__":
    key = jax.random.PRNGKey(0)
    kx, kp = jax.random.split(key)

    hidden_dim = 128                    # args.encoder_vision_hidden_dim
    x = jax.random.normal(kx, (2, 3, 32, 32), jnp.float32)   # small NCHW input
    params = init_params(kp, hidden_dim)

    fwd = jax.jit(lambda inp: vision_forward(inp, params))
    out = jax.block_until_ready(fwd(x))
    assert out.shape == (2, hidden_dim, 1, 1), out.shape

    ref = jax.block_until_ready(vision_forward_ref(x, params))
    # Tolerance accounts for bf16 MXU operands / bf16 inter-layer activations
    # (accumulation stays f32).
    np.testing.assert_allclose(np.asarray(out, dtype=np.float32),
                               np.asarray(ref), rtol=3e-2, atol=3e-2)

    print("KERNEL_OK")
</pallas_src>

<mosaic_0001>
module attributes {stable_mosaic.version = 11 : i64} {
  func.func @matmul_bn_silu_kernel(%arg0: i32, %arg1: memref<256x256xbf16, #tpu.memory_space<vmem>>, %arg2: memref<256x128xbf16, #tpu.memory_space<vmem>>, %arg3: memref<1x128xf32, #tpu.memory_space<vmem>>, %arg4: memref<256x128xbf16, #tpu.memory_space<vmem>>) attributes {dimension_semantics = [#tpu.dimension_semantics<parallel>], iteration_bounds = array<i64: 2>, scalar_prefetch = 0 : i64, scratch_operands = 0 : i64, tpu.core_type = #tpu.core_type<tc>, window_params = [{transform_indices = @transform_0, window_bounds = array<i64: 256, 256>}, {pipeline_mode = #tpu.pipeline_mode<synchronous>, transform_indices = @transform_1, window_bounds = array<i64: 256, 128>}, {pipeline_mode = #tpu.pipeline_mode<synchronous>, transform_indices = @transform_2, window_bounds = array<i64: 1, 128>}, {transform_indices = @transform_3, window_bounds = array<i64: 256, 128>}]} {
    %c0 = arith.constant 0 : index
    %c0_0 = arith.constant 0 : index
    %0 = vector.load %arg1[%c0, %c0_0] : memref<256x256xbf16, #tpu.memory_space<vmem>>, vector<256x256xbf16>
    %c0_1 = arith.constant 0 : index
    %c0_2 = arith.constant 0 : index
    %1 = vector.load %arg2[%c0_1, %c0_2] : memref<256x128xbf16, #tpu.memory_space<vmem>>, vector<256x128xbf16>
    %cst = arith.constant dense<0.000000e+00> : vector<256x128xf32>
    %2 = tpu.matmul %0, %1, %cst {dimension_numbers = #tpu.dot_dimension_numbers<[1], [0], [0], [1], [0, 0, 1, 1], [], []>} : vector<256x256xbf16>, vector<256x128xbf16>, vector<256x128xf32> -> vector<256x128xf32>
    %c0_3 = arith.constant 0 : index
    %c0_4 = arith.constant 0 : index
    %3 = vector.load %arg3[%c0_3, %c0_4] : memref<1x128xf32, #tpu.memory_space<vmem>>, vector<1x128xf32>
    %4 = vector.broadcast %3 : vector<1x128xf32> to vector<256x128xf32>
    %5 = arith.addf %2, %4 : vector<256x128xf32>
    %6 = arith.negf %5 : vector<256x128xf32>
    %7 = math.exp %6 : vector<256x128xf32>
    %cst_5 = arith.constant 1.000000e+00 : f32
    %8 = vector.broadcast %cst_5 : f32 to vector<256x128xf32>
    %9 = arith.addf %8, %7 : vector<256x128xf32>
    %10 = arith.divf %8, %9 : vector<256x128xf32>
    %11 = arith.mulf %5, %10 : vector<256x128xf32>
    %12 = arith.truncf %11 : vector<256x128xf32> to vector<256x128xbf16>
    %c0_6 = arith.constant 0 : index
    %c0_7 = arith.constant 0 : index
    %13 = vector.load %arg4[%c0_6, %c0_7] : memref<256x128xbf16, #tpu.memory_space<vmem>>, vector<256x128xbf16>
    tpu.vector_store %arg4[%c0_6, %c0_7], %12 {strides = array<i32>} : memref<256x128xbf16, #tpu.memory_space<vmem>>, vector<256x128xbf16>,
    return
  }
  func.func @transform_0(%arg0: i32) -> (i32, i32) {
    %c0_i32 = arith.constant 0 : i32
    %c0_i32_0 = arith.constant 0 : i32
    return %arg0, %c0_i32 : i32, i32
  }
  func.func @transform_1(%arg0: i32) -> (i32, i32) {
    %c0_i32 = arith.constant 0 : i32
    %c0_i32_0 = arith.constant 0 : i32
    %c0_i32_1 = arith.constant 0 : i32
    return %c0_i32, %c0_i32_0 : i32, i32
  }
  func.func @transform_2(%arg0: i32) -> (i32, i32) {
    %c0_i32 = arith.constant 0 : i32
    %c0_i32_0 = arith.constant 0 : i32
    %c0_i32_1 = arith.constant 0 : i32
    return %c0_i32, %c0_i32_0 : i32, i32
  }
  func.func @transform_3(%arg0: i32) -> (i32, i32) {
    %c0_i32 = arith.constant 0 : i32
    %c0_i32_0 = arith.constant 0 : i32
    return %arg0, %c0_i32 : i32, i32
  }
}

module attributes {stable_mosaic.version = 11 : i64} {
  func.func @matmul_bn_silu_kernel(%arg0: i32, %arg1: memref<128x1152xbf16, #tpu.memory_space<vmem>>, %arg2: memref<1152x128xbf16, #tpu.memory_space<vmem>>, %arg3: memref<1x128xf32, #tpu.memory_space<vmem>>, %arg4: memref<128x128xbf16, #tpu.memory_space<vmem>>) attributes {dimension_semantics = [#tpu.dimension_semantics<parallel>], iteration_bounds = array<i64: 1>, scalar_prefetch = 0 : i64, scratch_operands = 0 : i64, tpu.core_type = #tpu.core_type<tc>, window_params = [{transform_indices = @transform_0, window_bounds = array<i64: 128, 1152>}, {pipeline_mode = #tpu.pipeline_mode<synchronous>, transform_indices = @transform_1, window_bounds = array<i64: 1152, 128>}, {pipeline_mode = #tpu.pipeline_mode<synchronous>, transform_indices = @transform_2, window_bounds = array<i64: 1, 128>}, {transform_indices = @transform_3, window_bounds = array<i64: 128, 128>}]} {
    %c0 = arith.constant 0 : index
    %c0_0 = arith.constant 0 : index
    %0 = vector.load %arg1[%c0, %c0_0] : memref<128x1152xbf16, #tpu.memory_space<vmem>>, vector<128x1152xbf16>
    %c0_1 = arith.constant 0 : index
    %c0_2 = arith.constant 0 : index
    %1 = vector.load %arg2[%c0_1, %c0_2] : memref<1152x128xbf16, #tpu.memory_space<vmem>>, vector<1152x128xbf16>
    %cst = arith.constant dense<0.000000e+00> : vector<128x128xf32>
    %2 = tpu.matmul %0, %1, %cst {dimension_numbers = #tpu.dot_dimension_numbers<[1], [0], [0], [1], [0, 0, 1, 1], [], []>} : vector<128x1152xbf16>, vector<1152x128xbf16>, vector<128x128xf32> -> vector<128x128xf32>
    %c0_3 = arith.constant 0 : index
    %c0_4 = arith.constant 0 : index
    %3 = vector.load %arg3[%c0_3, %c0_4] : memref<1x128xf32, #tpu.memory_space<vmem>>, vector<1x128xf32>
    %4 = vector.broadcast %3 : vector<1x128xf32> to vector<128x128xf32>
    %5 = arith.addf %2, %4 : vector<128x128xf32>
    %6 = arith.negf %5 : vector<128x128xf32>
    %7 = math.exp %6 : vector<128x128xf32>
    %cst_5 = arith.constant 1.000000e+00 : f32
    %8 = vector.broadcast %cst_5 : f32 to vector<128x128xf32>
    %9 = arith.addf %8, %7 : vector<128x128xf32>
    %10 = arith.divf %8, %9 : vector<128x128xf32>
    %11 = arith.mulf %5, %10 : vector<128x128xf32>
    %12 = arith.truncf %11 : vector<128x128xf32> to vector<128x128xbf16>
    %c0_6 = arith.constant 0 : index
    %c0_7 = arith.constant 0 : index
    %13 = vector.load %arg4[%c0_6, %c0_7] : memref<128x128xbf16, #tpu.memory_space<vmem>>, vector<128x128xbf16>
    tpu.vector_store %arg4[%c0_6, %c0_7], %12 {strides = array<i32>} : memref<128x128xbf16, #tpu.memory_space<vmem>>, vector<128x128xbf16>,
    return
  }
  func.func @transform_0(%arg0: i32) -> (i32, i32) {
    %c0_i32 = arith.constant 0 : i32
    %c0_i32_0 = arith.constant 0 : i32
    return %arg0, %c0_i32 : i32, i32
  }
  func.func @transform_1(%arg0: i32) -> (i32, i32) {
    %c0_i32 = arith.constant 0 : i32
    %c0_i32_0 = arith.constant 0 : i32
    %c0_i32_1 = arith.constant 0 : i32
    return %c0_i32, %c0_i32_0 : i32, i32
  }
  func.func @transform_2(%arg0: i32) -> (i32, i32) {
    %c0_i32 = arith.constant 0 : i32
    %c0_i32_0 = arith.constant 0 : i32
    %c0_i32_1 = arith.constant 0 : i32
    return %c0_i32, %c0_i32_0 : i32, i32
  }
  func.func @transform_3(%arg0: i32) -> (i32, i32) {
    %c0_i32 = arith.constant 0 : i32
    %c0_i32_0 = arith.constant 0 : i32
    return %arg0, %c0_i32 : i32, i32
  }
}

module attributes {stable_mosaic.version = 11 : i64} {
  func.func @matmul_bn_silu_kernel(%arg0: i32, %arg1: memref<32x1152xbf16, #tpu.memory_space<vmem>>, %arg2: memref<1152x256xbf16, #tpu.memory_space<vmem>>, %arg3: memref<1x256xf32, #tpu.memory_space<vmem>>, %arg4: memref<32x256xbf16, #tpu.memory_space<vmem>>) attributes {dimension_semantics = [#tpu.dimension_semantics<parallel>], iteration_bounds = array<i64: 1>, scalar_prefetch = 0 : i64, scratch_operands = 0 : i64, tpu.core_type = #tpu.core_type<tc>, window_params = [{transform_indices = @transform_0, window_bounds = array<i64: 32, 1152>}, {pipeline_mode = #tpu.pipeline_mode<synchronous>, transform_indices = @transform_1, window_bounds = array<i64: 1152, 256>}, {pipeline_mode = #tpu.pipeline_mode<synchronous>, transform_indices = @transform_2, window_bounds = array<i64: 1, 256>}, {transform_indices = @transform_3, window_bounds = array<i64: 32, 256>}]} {
    %c0 = arith.constant 0 : index
    %c0_0 = arith.constant 0 : index
    %0 = vector.load %arg1[%c0, %c0_0] : memref<32x1152xbf16, #tpu.memory_space<vmem>>, vector<32x1152xbf16>
    %c0_1 = arith.constant 0 : index
    %c0_2 = arith.constant 0 : index
    %1 = vector.load %arg2[%c0_1, %c0_2] : memref<1152x256xbf16, #tpu.memory_space<vmem>>, vector<1152x256xbf16>
    %cst = arith.constant dense<0.000000e+00> : vector<32x256xf32>
    %2 = tpu.matmul %0, %1, %cst {dimension_numbers = #tpu.dot_dimension_numbers<[1], [0], [0], [1], [0, 0, 1, 1], [], []>} : vector<32x1152xbf16>, vector<1152x256xbf16>, vector<32x256xf32> -> vector<32x256xf32>
    %c0_3 = arith.constant 0 : index
    %c0_4 = arith.constant 0 : index
    %3 = vector.load %arg3[%c0_3, %c0_4] : memref<1x256xf32, #tpu.memory_space<vmem>>, vector<1x256xf32>
    %4 = vector.broadcast %3 : vector<1x256xf32> to vector<32x256xf32>
    %5 = arith.addf %2, %4 : vector<32x256xf32>
    %6 = arith.negf %5 : vector<32x256xf32>
    %7 = math.exp %6 : vector<32x256xf32>
    %cst_5 = arith.constant 1.000000e+00 : f32
    %8 = vector.broadcast %cst_5 : f32 to vector<32x256xf32>
    %9 = arith.addf %8, %7 : vector<32x256xf32>
    %10 = arith.divf %8, %9 : vector<32x256xf32>
    %11 = arith.mulf %5, %10 : vector<32x256xf32>
    %12 = arith.truncf %11 : vector<32x256xf32> to vector<32x256xbf16>
    %c0_6 = arith.constant 0 : index
    %c0_7 = arith.constant 0 : index
    %13 = vector.load %arg4[%c0_6, %c0_7] : memref<32x256xbf16, #tpu.memory_space<vmem>>, vector<32x256xbf16>
    tpu.vector_store %arg4[%c0_6, %c0_7], %12 {strides = array<i32>} : memref<32x256xbf16, #tpu.memory_space<vmem>>, vector<32x256xbf16>,
    return
  }
  func.func @transform_0(%arg0: i32) -> (i32, i32) {
    %c0_i32 = arith.constant 0 : i32
    %c0_i32_0 = arith.constant 0 : i32
    return %arg0, %c0_i32 : i32, i32
  }
  func.func @transform_1(%arg0: i32) -> (i32, i32) {
    %c0_i32 = arith.constant 0 : i32
    %c0_i32_0 = arith.constant 0 : i32
    %c0_i32_1 = arith.constant 0 : i32
    return %c0_i32, %c0_i32_0 : i32, i32
  }
  func.func @transform_2(%arg0: i32) -> (i32, i32) {
    %c0_i32 = arith.constant 0 : i32
    %c0_i32_0 = arith.constant 0 : i32
    %c0_i32_1 = arith.constant 0 : i32
    return %c0_i32, %c0_i32_0 : i32, i32
  }
  func.func @transform_3(%arg0: i32) -> (i32, i32) {
    %c0_i32 = arith.constant 0 : i32
    %c0_i32_0 = arith.constant 0 : i32
    return %arg0, %c0_i32 : i32, i32
  }
}

module attributes {stable_mosaic.version = 11 : i64} {
  func.func @kernel(%arg0: i32, %arg1: memref<1x8x2304xbf16, #tpu.memory_space<vmem>>, %arg2: memref<2304x128xbf16, #tpu.memory_space<vmem>>, %arg3: memref<1x128xf32, #tpu.memory_space<vmem>>, %arg4: memref<1x1x128xf32, #tpu.memory_space<vmem>>) attributes {dimension_semantics = [#tpu.dimension_semantics<parallel>], iteration_bounds = array<i64: 2>, scalar_prefetch = 0 : i64, scratch_operands = 0 : i64, tpu.core_type = #tpu.core_type<tc>, window_params = [{transform_indices = @transform_0, window_bounds = array<i64: 1, 8, 2304>}, {pipeline_mode = #tpu.pipeline_mode<synchronous>, transform_indices = @transform_1, window_bounds = array<i64: 2304, 128>}, {pipeline_mode = #tpu.pipeline_mode<synchronous>, transform_indices = @transform_2, window_bounds = array<i64: 1, 128>}, {transform_indices = @transform_3, window_bounds = array<i64: 1, 1, 128>}]} {
    %c0 = arith.constant 0 : index
    %c0_0 = arith.constant 0 : index
    %c0_1 = arith.constant 0 : index
    %0 = vector.load %arg1[%c0, %c0_0, %c0_1] : memref<1x8x2304xbf16, #tpu.memory_space<vmem>>, vector<1x8x2304xbf16>
    %1 = vector.shape_cast %0 : vector<1x8x2304xbf16> to vector<8x2304xbf16>
    %c0_2 = arith.constant 0 : index
    %c0_3 = arith.constant 0 : index
    %2 = vector.load %arg2[%c0_2, %c0_3] : memref<2304x128xbf16, #tpu.memory_space<vmem>>, vector<2304x128xbf16>
    %cst = arith.constant dense<0.000000e+00> : vector<8x128xf32>
    %3 = tpu.matmul %1, %2, %cst {dimension_numbers = #tpu.dot_dimension_numbers<[1], [0], [0], [1], [0, 0, 1, 1], [], []>} : vector<8x2304xbf16>, vector<2304x128xbf16>, vector<8x128xf32> -> vector<8x128xf32>
    %c0_4 = arith.constant 0 : index
    %c0_5 = arith.constant 0 : index
    %4 = vector.load %arg3[%c0_4, %c0_5] : memref<1x128xf32, #tpu.memory_space<vmem>>, vector<1x128xf32>
    %5 = vector.broadcast %4 : vector<1x128xf32> to vector<8x128xf32>
    %6 = arith.addf %3, %5 : vector<8x128xf32>
    %7 = arith.negf %6 : vector<8x128xf32>
    %8 = math.exp %7 : vector<8x128xf32>
    %cst_6 = arith.constant 1.000000e+00 : f32
    %9 = vector.broadcast %cst_6 : f32 to vector<8x128xf32>
    %10 = arith.addf %9, %8 : vector<8x128xf32>
    %11 = arith.divf %9, %10 : vector<8x128xf32>
    %12 = arith.mulf %6, %11 : vector<8x128xf32>
    %13 = tpu.iota {dimensions = array<i32: 0>} : vector<8x128xi32>
    %c4_i32 = arith.constant 4 : i32
    %14 = vector.broadcast %c4_i32 : i32 to vector<8x128xi32>
    %15 = arith.cmpi slt, %13, %14 : vector<8x128xi32>
    %cst_7 = arith.constant 0.000000e+00 : f32
    %16 = vector.broadcast %cst_7 : f32 to vector<8x128xf32>
    %17 = arith.select %15, %12, %16 : vector<8x128xi1>, vector<8x128xf32>
    %cst_8 = arith.constant dense<0.000000e+00> : vector<128xf32>
    %18 = vector.multi_reduction <add>, %17, %cst_8 [0] : vector<8x128xf32> to vector<128xf32>
    %19 = vector.shape_cast %18 : vector<128xf32> to vector<1x128xf32>
    %cst_9 = arith.constant 2.500000e-01 : f32
    %20 = vector.broadcast %cst_9 : f32 to vector<1x128xf32>
    %21 = arith.mulf %19, %20 : vector<1x128xf32>
    %22 = vector.shape_cast %21 : vector<1x128xf32> to vector<1x1x128xf32>
    %c0_10 = arith.constant 0 : index
    %c0_11 = arith.constant 0 : index
    %c0_12 = arith.constant 0 : index
    %23 = vector.load %arg4[%c0_10, %c0_11, %c0_12] : memref<1x1x128xf32, #tpu.memory_space<vmem>>, vector<1x1x128xf32>
    tpu.vector_store %arg4[%c0_10, %c0_11, %c0_12], %22 {strides = array<i32>} : memref<1x1x128xf32, #tpu.memory_space<vmem>>, vector<1x1x128xf32>,
    return
  }
  func.func @transform_0(%arg0: i32) -> (i32, i32, i32) {
    %c0_i32 = arith.constant 0 : i32
    %c0_i32_0 = arith.constant 0 : i32
    %c0_i32_1 = arith.constant 0 : i32
    return %arg0, %c0_i32, %c0_i32_0 : i32, i32, i32
  }
  func.func @transform_1(%arg0: i32) -> (i32, i32) {
    %c0_i32 = arith.constant 0 : i32
    %c0_i32_0 = arith.constant 0 : i32
    %c0_i32_1 = arith.constant 0 : i32
    return %c0_i32, %c0_i32_0 : i32, i32
  }
  func.func @transform_2(%arg0: i32) -> (i32, i32) {
    %c0_i32 = arith.constant 0 : i32
    %c0_i32_0 = arith.constant 0 : i32
    %c0_i32_1 = arith.constant 0 : i32
    return %c0_i32, %c0_i32_0 : i32, i32
  }
  func.func @transform_3(%arg0: i32) -> (i32, i32, i32) {
    %c0_i32 = arith.constant 0 : i32
    %c0_i32_0 = arith.constant 0 : i32
    %c0_i32_1 = arith.constant 0 : i32
    return %arg0, %c0_i32, %c0_i32_0 : i32, i32, i32
  }
}

</mosaic_0001>

<llo_original>
// kernel: _lambda_.4
$region0: #{_lambda_.4}
  #allocation0 [shape = 'u32[]', space=smem, size = 0x4, offset = 0x4, fixed_abs, tag = 'smem constant byte address 0x4 - core index']
  #allocation1 [shape = 'u32[144,128]{1,0:T(1,128)}', space=vmem, size = 0x12000, scoped, tag = 'internal scratch']
  %s0 = inlined_call_operand.vmem [shape: bf16[512,256], index: 0, kind: input, shape index: {}]
  %s1 = inlined_call_operand.vmem [shape: bf16[256,128], index: 1, kind: input, shape index: {}]
  %s2 = inlined_call_operand.vmem [shape: f32[1,128], index: 2, kind: input, shape index: {}]
  %s3 = inlined_call_operand.vmem [shape: bf16[512,128], index: 3, kind: output, shape index: {}]
  %s4 = sld [smem:[#allocation0]]
  $region45: #{_lambda_.4} parent=0
    _
  %s6 = ssub.s32 1, %s4
  %s7 = scalar_select 0, %s6, %s4
  loop: start=0, step=1, limit=4
  $region2: #{_lambda_.4} parent=0 // loop_pre_header
    _
  $region3: #{_lambda_.4} parent=0 // loop_header
    %s9 = sphi 0, %s13
    %p10 = scmp.ge.s32.totalorder %s9, 4
    %s19 = sphi 0, %s21
    %s22 = sphi 0, %s19
    %s23 = sphi 0, %s22
    %s39 = sphi 0, %s23
    %s43 = sphi 0, %s43
    %s45 = sphi 0, %s43
    %s46 = sphi 0, %s45
    %s60 = sphi 0, %s46
    %s64 = sphi 0, %s64
    %s66 = sphi 0, %s64
    %s67 = sphi 0, %s66
    %s81 = sphi 0, %s67
    %s87 = sphi 0, %s89
    %s90 = sphi 0, %s87
    %s91 = sphi 0, %s90
    %s107 = sphi 0, %s91
  $region4: #{_lambda_.4} parent=0 // loop_header_branch
    %12 = sbr.rel (%p10) target = $region8
  $region5: #{_lambda_.4} parent=0 // loop_body
    %s14 = ssub.s32 %s9, 1
    %s15 = ssub.s32 %s9, 2
    %s16 = sadd.s32 %s9, 1
    %s17 = ssub.s32 %s9, %s16
    %p18 = scmp.eq.s32.totalorder %s17, 0
    %s20 = sadd.s32 %s19, 1
    %s21 = scalar_select %p18, %s19, %s20
    %p24 = pneg %p18
    %p25 = scmp.eq.s32.totalorder %s9, 1
    %p26 = por %p24, %p25
    %p27 = scmp.ne.s32.totalorder %s19, %s22
    %p28 = scmp.eq.s32.totalorder %s9, 0
    %p29 = por %p27, %p28
    %p30 = scmp.ne.s32.totalorder %s19, %s22
    %p31 = scmp.eq.s32.totalorder %s14, 1
    %p32 = por %p30, %p31
    %p33 = scmp.ne.s32.totalorder %s22, %s23
    %p34 = scmp.eq.s32.totalorder %s14, 0
    %p35 = por %p33, %p34
    %p36 = scmp.ne.s32.totalorder %s22, %s23
    %p37 = scmp.eq.s32.totalorder %s15, 1
    %p38 = por %p36, %p37
    %p40 = scmp.ne.s32.totalorder %s23, %s39
    %p41 = scmp.eq.s32.totalorder %s15, 0
    %p42 = por %p40, %p41
    %s44 = sadd.s32 %s43, 1
    %p47 = scmp.eq.s32.totalorder %s9, 1
    %p48 = scmp.ne.s32.totalorder %s43, %s45
    %p49 = scmp.eq.s32.totalorder %s9, 0
    %p50 = por %p48, %p49
    %p51 = scmp.ne.s32.totalorder %s43, %s45
    %p52 = scmp.eq.s32.totalorder %s14, 1
    %p53 = por %p51, %p52
    %p54 = scmp.ne.s32.totalorder %s45, %s46
    %p55 = scmp.eq.s32.totalorder %s14, 0
    %p56 = por %p54, %p55
    %p57 = scmp.ne.s32.totalorder %s45, %s46
    %p58 = scmp.eq.s32.totalorder %s15, 1
    %p59 = por %p57, %p58
    %p61 = scmp.ne.s32.totalorder %s46, %s60
    %p62 = scmp.eq.s32.totalorder %s15, 0
    %p63 = por %p61, %p62
    %s65 = sadd.s32 %s64, 1
    %p68 = scmp.eq.s32.totalorder %s9, 1
    %p69 = scmp.ne.s32.totalorder %s64, %s66
    %p70 = scmp.eq.s32.totalorder %s9, 0
    %p71 = por %p69, %p70
    %p72 = scmp.ne.s32.totalorder %s64, %s66
    %p73 = scmp.eq.s32.totalorder %s14, 1
    %p74 = por %p72, %p73
    %p75 = scmp.ne.s32.totalorder %s66, %s67
    %p76 = scmp.eq.s32.totalorder %s14, 0
    %p77 = por %p75, %p76
    %p78 = scmp.ne.s32.totalorder %s66, %s67
    %p79 = scmp.eq.s32.totalorder %s15, 1
    %p80 = por %p78, %p79
    %p82 = scmp.ne.s32.totalorder %s67, %s81
    %p83 = scmp.eq.s32.totalorder %s15, 0
    %p84 = por %p82, %p83
    %s85 = ssub.s32 %s9, %s16
    %p86 = scmp.eq.s32.totalorder %s85, 0
    %s88 = sadd.s32 %s87, 1
    %s89 = scalar_select %p86, %s87, %s88
    %p92 = pneg %p86
    %p93 = scmp.eq.s32.totalorder %s9, 1
    %p94 = por %p92, %p93
    %p95 = scmp.ne.s32.totalorder %s87, %s90
    %p96 = scmp.eq.s32.totalorder %s9, 0
    %p97 = por %p95, %p96
    %p98 = scmp.ne.s32.totalorder %s87, %s90
    %p99 = scmp.eq.s32.totalorder %s14, 1
    %p100 = por %p98, %p99
    %p101 = scmp.ne.s32.totalorder %s90, %s91
    %p102 = scmp.eq.s32.totalorder %s14, 0
    %p103 = por %p101, %p102
    %p104 = scmp.ne.s32.totalorder %s90, %s91
    %p105 = scmp.eq.s32.totalorder %s15, 1
    %p106 = por %p104, %p105
    %p108 = scmp.ne.s32.totalorder %s91, %s107
    %p109 = scmp.eq.s32.totalorder %s15, 0
    %p110 = por %p108, %p109
    %p111 = scmp.le.s32.totalorder 1, %s9
    %p112 = scmp.lt.s32.totalorder %s9, 3
    %p113 = pnand %p111, %p112
    %p114 = pneg %p113
    // Predicated region
    $region9: #{_lambda_.4} parent=5 // pred_check
      _
    $region10: #{_lambda_.4} parent=5 // pred_check_branch
      %116 = sbr.rel (%p113) target = $region12
    $region11: #{_lambda_.4} parent=5 // pred_region
      %s117 = ssub.s32 %s9, 1
      // Predicated region
      $region13: #{_lambda_.4} parent=11 // pred_check
        %p118 = pneg %p56
      $region14: #{_lambda_.4} parent=11 // pred_check_branch
        %120 = sbr.rel (%p118) target = $region16
      $region15: #{_lambda_.4} parent=11 // pred_region
        _
      $region16: #{_lambda_.4} parent=11 // pred_fallthru
        _
      // Predicated region
      $region17: #{_lambda_.4} parent=11 // pred_check
        %p121 = pneg %p77
      $region18: #{_lambda_.4} parent=11 // pred_check_branch
        %123 = sbr.rel (%p121) target = $region20
      $region19: #{_lambda_.4} parent=11 // pred_region
        _
      $region20: #{_lambda_.4} parent=11 // pred_fallthru
        _
    $region12: #{_lambda_.4} parent=5 // pred_fallthru
      _
    %p124 = scmp.lt.s32.totalorder %s9, 2
    // Predicated region
    $region21: #{_lambda_.4} parent=5 // pred_check
      %p125 = pneg %p124
    $region22: #{_lambda_.4} parent=5 // pred_check_branch
      %127 = sbr.rel (%p125) target = $region24
    $region23: #{_lambda_.4} parent=5 // pred_region
      // Predicated region
      $region25: #{_lambda_.4} parent=23 // pred_check
        %p128 = pneg %p29
      $region26: #{_lambda_.4} parent=23 // pred_check_branch
        %130 = sbr.rel (%p128) target = $region28
      $region27: #{_lambda_.4} parent=23 // pred_region
        %s131 = smul.u32 32, %s9
        %p132 = scmp.lt.s32.totalorder %s131, 63
        %s133 = scalar_select %p132, %s131, 63
        %s134 = smul.addr %s133, 2
        %s135 = smul.addr %s134, 4
        %s136 = scalar_lea.vmem %s0, %s135
        %s137 = smul.u32 32, %s9
      $region28: #{_lambda_.4} parent=23 // pred_fallthru
        _
    $region24: #{_lambda_.4} parent=5 // pred_fallthru
      _
    %p138 = scmp.le.s32.totalorder 1, %s9
    %p139 = scmp.lt.s32.totalorder %s9, 3
    %p140 = pnand %p138, %p139
    %p141 = pneg %p140
    // Predicated region
    $region29: #{_lambda_.4} parent=5 // pred_check
      _
    $region30: #{_lambda_.4} parent=5 // pred_check_branch
      %143 = sbr.rel (%p140) target = $region32
    $region31: #{_lambda_.4} parent=5 // pred_region
      %s144 = ssub.s32 %s9, 1
      %s145 = smul.u32 32, %s14
      %p146 = scmp.lt.s32.totalorder %s145, 63
      %s147 = scalar_select %p146, %s145, 63
      %s148 = smul.addr %s147, 2
      %s149 = smul.addr %s148, 4
      %s150 = scalar_lea.vmem %s0, %s149
      %p151 = pneg %p35
      %p152 = pneg %p32
      %p153 = pneg %p56
      %p154 = pneg %p53
      %p155 = pneg %p77
      %p156 = pneg %p74
      %p157 = pneg %p103
      %p158 = pneg %p100
      %s159 = smul.u32 32, %s14
      %p160 = scmp.lt.s32.totalorder %s159, 63
      %s161 = scalar_select %p160, %s159, 63
      %s162 = smul.addr %s161, 4
      %s163 = scalar_lea.vmem %s3, %s162
      %s164 = smul.u32 32, %s14
      %p165 = scmp.lt.s32.totalorder %s164, 63
      %s166 = scalar_select %p165, %s164, 63
      %s167 = smul.addr %s166, 2
      %s168 = smul.addr %s167, 4
      %s169 = scalar_lea.vmem %s0, %s168
      %s170 = smul.u32 32, %s14
      %s171 = smul.u32 32, %s14
      %p172 = scmp.lt.s32.totalorder %s171, 63
      %s173 = scalar_select %p172, %s171, 63
      %s174 = smul.addr %s173, 4
      %s175 = scalar_lea.vmem %s3, %s174
      %s176 = smul.u32 32, %s14
      %v178 = vld [vmem:[%s169] sm:$0xff]
      %v179 = vld [vmem:[%s169 + $0x8] sm:$0xff]
      %v180 = vld [vmem:[%s169 + $0x10] sm:$0xff]
      %v181 = vld [vmem:[%s169 + $0x18] sm:$0xff]
      %v182 = vld [vmem:[%s169 + $0x20] sm:$0xff]
      %v183 = vld [vmem:[%s169 + $0x28] sm:$0xff]
      %v184 = vld [vmem:[%s169 + $0x30] sm:$0xff]
      %v185 = vld [vmem:[%s169 + $0x38] sm:$0xff]
      %v186 = vld [vmem:[%s169 + $0x40] sm:$0xff]
      %v187 = vld [vmem:[%s169 + $0x48] sm:$0xff]
      %v188 = vld [vmem:[%s169 + $0x50] sm:$0xff]
      %v189 = vld [vmem:[%s169 + $0x58] sm:$0xff]
      %v190 = vld [vmem:[%s169 + $0x60] sm:$0xff]
      %v191 = vld [vmem:[%s169 + $0x68] sm:$0xff]
      %v192 = vld [vmem:[%s169 + $0x70] sm:$0xff]
      %v193 = vld [vmem:[%s169 + $0x78] sm:$0xff]
      %v194 = vld [vmem:[%s169 + $0x80] sm:$0xff]
      %v195 = vld [vmem:[%s169 + $0x88] sm:$0xff]
      %v196 = vld [vmem:[%s169 + $0x90] sm:$0xff]
      %v197 = vld [vmem:[%s169 + $0x98] sm:$0xff]
      %v198 = vld [vmem:[%s169 + $0xa0] sm:$0xff]
      %v199 = vld [vmem:[%s169 + $0xa8] sm:$0xff]
      %v200 = vld [vmem:[%s169 + $0xb0] sm:$0xff]
      %v201 = vld [vmem:[%s169 + $0xb8] sm:$0xff]
      %v202 = vld [vmem:[%s169 + $0xc0] sm:$0xff]
      %v203 = vld [vmem:[%s169 + $0xc8] sm:$0xff]
      %v204 = vld [vmem:[%s169 + $0xd0] sm:$0xff]
      %v205 = vld [vmem:[%s169 + $0xd8] sm:$0xff]
      %v206 = vld [vmem:[%s169 + $0xe0] sm:$0xff]
      %v207 = vld [vmem:[%s169 + $0xe8] sm:$0xff]
      %v208 = vld [vmem:[%s169 + $0xf0] sm:$0xff]
      %v209 = vld [vmem:[%s169 + $0xf8] sm:$0xff]
      %v210 = vld [vmem:[%s1] sm:$0xf]
      %v211 = vld [vmem:[%s1 + $0x4] sm:$0xf]
      %v212 = vld [vmem:[%s1 + $0x8] sm:$0xf]
      %v213 = vld [vmem:[%s1 + $0xc] sm:$0xf]
      %v214 = vld [vmem:[%s1 + $0x10] sm:$0xf]
      %v215 = vld [vmem:[%s1 + $0x14] sm:$0xf]
      %v216 = vld [vmem:[%s1 + $0x18] sm:$0xf]
      %v217 = vld [vmem:[%s1 + $0x1c] sm:$0xf]
      %v218 = vld [vmem:[%s1 + $0x20] sm:$0xf]
      %v219 = vld [vmem:[%s1 + $0x24] sm:$0xf]
      %v220 = vld [vmem:[%s1 + $0x28] sm:$0xf]
      %v221 = vld [vmem:[%s1 + $0x2c] sm:$0xf]
      %v222 = vld [vmem:[%s1 + $0x30] sm:$0xf]
      %v223 = vld [vmem:[%s1 + $0x34] sm:$0xf]
      %v224 = vld [vmem:[%s1 + $0x38] sm:$0xf]
      %v225 = vld [vmem:[%s1 + $0x3c] sm:$0xf]
      %v226 = vld [vmem:[%s1 + $0x40] sm:$0xf]
      %v227 = vld [vmem:[%s1 + $0x44] sm:$0xf]
      %v228 = vld [vmem:[%s1 + $0x48] sm:$0xf]
      %v229 = vld [vmem:[%s1 + $0x4c] sm:$0xf]
      %v230 = vld [vmem:[%s1 + $0x50] sm:$0xf]
      %v231 = vld [vmem:[%s1 + $0x54] sm:$0xf]
      %v232 = vld [vmem:[%s1 + $0x58] sm:$0xf]
      %v233 = vld [vmem:[%s1 + $0x5c] sm:$0xf]
      %v234 = vld [vmem:[%s1 + $0x60] sm:$0xf]
      %v235 = vld [vmem:[%s1 + $0x64] sm:$0xf]
      %v236 = vld [vmem:[%s1 + $0x68] sm:$0xf]
      %v237 = vld [vmem:[%s1 + $0x6c] sm:$0xf]
      %v238 = vld [vmem:[%s1 + $0x70] sm:$0xf]
      %v239 = vld [vmem:[%s1 + $0x74] sm:$0xf]
      %v240 = vld [vmem:[%s1 + $0x78] sm:$0xf]
      %v241 = vld [vmem:[%s1 + $0x7c] sm:$0xf]
      %v242 = vld [vmem:[%s2] sm:$0x1]
      %v244 = vlaneseq
      %v245 = vshrl.u32 %v244, 7
      %v246 = vsub.s32 0, %v245
      %v247 = vrot.slane %v242, %v246
      %v281 = vunpack.c.l.b16 %v178
      %v282 = vunpack.c.h.b16 %v178
      %v283 = vunpack.c.l.b16 %v179
      %v284 = vunpack.c.h.b16 %v179
      %v285 = vunpack.c.l.b16 %v180
      %v286 = vunpack.c.h.b16 %v180
      %v287 = vunpack.c.l.b16 %v181
      %v288 = vunpack.c.h.b16 %v181
      %v289 = vunpack.c.l.b16 %v182
      %v290 = vunpack.c.h.b16 %v182
      %v291 = vunpack.c.l.b16 %v183
      %v292 = vunpack.c.h.b16 %v183
      %v293 = vunpack.c.l.b16 %v184
      %v294 = vunpack.c.h.b16 %v184
      %v295 = vunpack.c.l.b16 %v185
      %v296 = vunpack.c.h.b16 %v185
      %v297 = vunpack.c.l.b16 %v186
      %v298 = vunpack.c.h.b16 %v186
      %v299 = vunpack.c.l.b16 %v187
      %v300 = vunpack.c.h.b16 %v187
      %v301 = vunpack.c.l.b16 %v188
      %v302 = vunpack.c.h.b16 %v188
      %v303 = vunpack.c.l.b16 %v189
      %v304 = vunpack.c.h.b16 %v189
      %v305 = vunpack.c.l.b16 %v190
      %v306 = vunpack.c.h.b16 %v190
      %v307 = vunpack.c.l.b16 %v191
      %v308 = vunpack.c.h.b16 %v191
      %v309 = vunpack.c.l.b16 %v192
      %v310 = vunpack.c.h.b16 %v192
      %v311 = vunpack.c.l.b16 %v193
      %v312 = vunpack.c.h.b16 %v193
      %v313 = vunpack.c.l.b16 %v194
      %v314 = vunpack.c.h.b16 %v194
      %v315 = vunpack.c.l.b16 %v195
      %v316 = vunpack.c.h.b16 %v195
      %v317 = vunpack.c.l.b16 %v196
      %v318 = vunpack.c.h.b16 %v196
      %v319 = vunpack.c.l.b16 %v197
      %v320 = vunpack.c.h.b16 %v197
      %v321 = vunpack.c.l.b16 %v198
      %v322 = vunpack.c.h.b16 %v198
      %v323 = vunpack.c.l.b16 %v199
      %v324 = vunpack.c.h.b16 %v199
      %v325 = vunpack.c.l.b16 %v200
      %v326 = vunpack.c.h.b16 %v200
      %v327 = vunpack.c.l.b16 %v201
      %v328 = vunpack.c.h.b16 %v201
      %v329 = vunpack.c.l.b16 %v202
      %v330 = vunpack.c.h.b16 %v202
      %v331 = vunpack.c.l.b16 %v203
      %v332 = vunpack.c.h.b16 %v203
      %v333 = vunpack.c.l.b16 %v204
      %v334 = vunpack.c.h.b16 %v204
      %v335 = vunpack.c.l.b16 %v205
      %v336 = vunpack.c.h.b16 %v205
      %v337 = vunpack.c.l.b16 %v206
      %v338 = vunpack.c.h.b16 %v206
      %v339 = vunpack.c.l.b16 %v207
      %v340 = vunpack.c.h.b16 %v207
      %v341 = vunpack.c.l.b16 %v208
      %v342 = vunpack.c.h.b16 %v208
      %v343 = vunpack.c.l.b16 %v209
      %v344 = vunpack.c.h.b16 %v209
      %v345 = vpack.c.b16 %v283, %v281
      %v346 = vpack.c.b16 %v284, %v282
      %v347 = vpack.c.b16 %v287, %v285
      %v348 = vpack.c.b16 %v288, %v286
      %v349 = vpack.c.b16 %v291, %v289
      %v350 = vpack.c.b16 %v292, %v290
      %v351 = vpack.c.b16 %v295, %v293
      %v352 = vpack.c.b16 %v296, %v294
      %v353 = vpack.c.b16 %v299, %v297
      %v354 = vpack.c.b16 %v300, %v298
      %v355 = vpack.c.b16 %v303, %v301
      %v356 = vpack.c.b16 %v304, %v302
      %v357 = vpack.c.b16 %v307, %v305
      %v358 = vpack.c.b16 %v308, %v306
      %v359 = vpack.c.b16 %v311, %v309
      %v360 = vpack.c.b16 %v312, %v310
      %v361 = vpack.c.b16 %v315, %v313
      %v362 = vpack.c.b16 %v316, %v314
      %v363 = vpack.c.b16 %v319, %v317
      %v364 = vpack.c.b16 %v320, %v318
      %v365 = vpack.c.b16 %v323, %v321
      %v366 = vpack.c.b16 %v324, %v322
      %v367 = vpack.c.b16 %v327, %v325
      %v368 = vpack.c.b16 %v328, %v326
      %v369 = vpack.c.b16 %v331, %v329
      %v370 = vpack.c.b16 %v332, %v330
      %v371 = vpack.c.b16 %v335, %v333
      %v372 = vpack.c.b16 %v336, %v334
      %v373 = vpack.c.b16 %v339, %v337
      %v374 = vpack.c.b16 %v340, %v338
      %v375 = vpack.c.b16 %v343, %v341
      %v376 = vpack.c.b16 %v344, %v342
      %v441 = vunpack.c.l.b16 %v210
      %v442 = vunpack.c.l.b16 %v211
      %v443 = vunpack.c.l.b16 %v212
      %v444 = vunpack.c.l.b16 %v213
      %v445 = vunpack.c.l.b16 %v214
      %v446 = vunpack.c.l.b16 %v215
      %v447 = vunpack.c.l.b16 %v216
      %v448 = vunpack.c.l.b16 %v217
      %v449 = vunpack.c.l.b16 %v218
      %v450 = vunpack.c.l.b16 %v219
      %v451 = vunpack.c.l.b16 %v220
      %v452 = vunpack.c.l.b16 %v221
      %v453 = vunpack.c.l.b16 %v222
      %v454 = vunpack.c.l.b16 %v223
      %v455 = vunpack.c.l.b16 %v224
      %v456 = vunpack.c.l.b16 %v225
      %v457 = vunpack.c.l.b16 %v226
      %v458 = vunpack.c.l.b16 %v227
      %v459 = vunpack.c.l.b16 %v228
      %v460 = vunpack.c.l.b16 %v229
      %v461 = vunpack.c.l.b16 %v230
      %v462 = vunpack.c.l.b16 %v231
      %v463 = vunpack.c.l.b16 %v232
      %v464 = vunpack.c.l.b16 %v233
      %v465 = vunpack.c.l.b16 %v234
      %v466 = vunpack.c.l.b16 %v235
      %v467 = vunpack.c.l.b16 %v236
      %v468 = vunpack.c.l.b16 %v237
      %v469 = vunpack.c.l.b16 %v238
      %v470 = vunpack.c.l.b16 %v239
      %v471 = vunpack.c.l.b16 %v240
      %v472 = vunpack.c.l.b16 %v241
      %v473 = vpack.c.b16 %v442, %v441
      %v474 = vpack.c.b16 %v444, %v443
      %v475 = vpack.c.b16 %v446, %v445
      %v476 = vpack.c.b16 %v448, %v447
      %v477 = vpack.c.b16 %v450, %v449
      %v478 = vpack.c.b16 %v452, %v451
      %v479 = vpack.c.b16 %v454, %v453
      %v480 = vpack.c.b16 %v456, %v455
      %v481 = vpack.c.b16 %v458, %v457
      %v482 = vpack.c.b16 %v460, %v459
      %v483 = vpack.c.b16 %v462, %v461
      %v484 = vpack.c.b16 %v464, %v463
      %v485 = vpack.c.b16 %v466, %v465
      %v486 = vpack.c.b16 %v468, %v467
      %v487 = vpack.c.b16 %v470, %v469
      %v488 = vpack.c.b16 %v472, %v471
      %505 = vmatprep.subr.bf16.mxu0 0
      %506 = vmatpush1.bf16.msra.mxu0 %v480
      %507 = vmatprep.subr.bf16.mxu0 0
      %508 = vmatpush1.bf16.msra.mxu0 %v479
      %509 = vmatprep.subr.bf16.mxu0 0
      %510 = vmatpush1.bf16.msra.mxu0 %v478
      %511 = vmatprep.subr.bf16.mxu0 0
      %512 = vmatpush1.bf16.msra.mxu0 %v477
      %513 = vmatprep.subr.bf16.mxu0 0
      %514 = vmatpush1.bf16.msra.mxu0 %v476
      %515 = vmatprep.subr.bf16.mxu0 0
      %516 = vmatpush1.bf16.msra.mxu0 %v475
      %517 = vmatprep.subr.bf16.mxu0 0
      %518 = vmatpush1.bf16.msra.mxu0 %v474
      %519 = vmatprep.subr.bf16.mxu0 0
      %520 = vmatpush1.bf16.msra.mxu0 %v473
      %521 = vmatprep.subr.bf16.mxu0 0
      %522 = vmatpush2.bf16.msra.mxu0 %v488
      %523 = vmatprep.subr.bf16.mxu0 0
      %524 = vmatpush2.bf16.msra.mxu0 %v487
      %525 = vmatprep.subr.bf16.mxu0 0
      %526 = vmatpush2.bf16.msra.mxu0 %v486
      %527 = vmatprep.subr.bf16.mxu0 0
      %528 = vmatpush2.bf16.msra.mxu0 %v485
      %529 = vmatprep.subr.bf16.mxu0 0
      %530 = vmatpush2.bf16.msra.mxu0 %v484
      %531 = vmatprep.subr.bf16.mxu0 0
      %532 = vmatpush2.bf16.msra.mxu0 %v483
      %533 = vmatprep.subr.bf16.mxu0 0
      %534 = vmatpush2.bf16.msra.mxu0 %v482
      %535 = vmatprep.subr.bf16.mxu0 0
      %536 = vmatpush2.bf16.msra.mxu0 %v481
      %537 = vmatprep.mubr.bf16.mxu0 %v346
      %538 = vmatmul.mubr.bf16.gmra.mxu0 %v345
      %v539 = vpop.f32.mrf.mxu0
      %v540 = vadd.f32 %v247, %v539
      %v541 = vpop.f32.mrf.mxu0
      %v542 = vpop.f32.mrf.mxu0
      %v543 = vadd.f32 %v247, %v542
      %v544 = vpop.f32.mrf.mxu0
      %545 = vmatprep.mubr.bf16.mxu0 %v348
      %546 = vmatmul.mubr.bf16.gmra.mxu0 %v347
      %v547 = vpop.f32.mrf.mxu0
      %v548 = vadd.f32 %v247, %v547
      %v549 = vpop.f32.mrf.mxu0
      %v550 = vpop.f32.mrf.mxu0
      %v551 = vadd.f32 %v247, %v550
      %v552 = vpop.f32.mrf.mxu0
      %553 = vmatprep.mubr.bf16.mxu0 %v350
      %554 = vmatmul.mubr.bf16.gmra.mxu0 %v349
      %v555 = vpop.f32.mrf.mxu0
      %v556 = vadd.f32 %v247, %v555
      %v557 = vpop.f32.mrf.mxu0
      %v558 = vpop.f32.mrf.mxu0
      %v559 = vadd.f32 %v247, %v558
      %v560 = vpop.f32.mrf.mxu0
      %561 = vmatprep.mubr.bf16.mxu0 %v352
      %562 = vmatmul.mubr.bf16.gmra.mxu0 %v351
      %v563 = vpop.f32.mrf.mxu0
      %v564 = vadd.f32 %v247, %v563
      %v565 = vpop.f32.mrf.mxu0
      %v566 = vpop.f32.mrf.mxu0
      %v567 = vadd.f32 %v247, %v566
      %v568 = vpop.f32.mrf.mxu0
      %569 = vmatprep.mubr.bf16.mxu0 %v354
      %570 = vmatmul.mubr.bf16.gmra.mxu0 %v353
      %v571 = vpop.f32.mrf.mxu0
      %v572 = vadd.f32 %v247, %v571
      %v573 = vpop.f32.mrf.mxu0
      %v574 = vpop.f32.mrf.mxu0
      %v575 = vadd.f32 %v247, %v574
      %v576 = vpop.f32.mrf.mxu0
      %577 = vmatprep.mubr.bf16.mxu0 %v356
      %578 = vmatmul.mubr.bf16.gmra.mxu0 %v355
      %v579 = vpop.f32.mrf.mxu0
      %v580 = vadd.f32 %v247, %v579
      %v581 = vpop.f32.mrf.mxu0
      %v582 = vpop.f32.mrf.mxu0
      %v583 = vadd.f32 %v247, %v582
      %v584 = vpop.f32.mrf.mxu0
      %585 = vmatprep.mubr.bf16.mxu0 %v358
      %586 = vmatmul.mubr.bf16.gmra.mxu0 %v357
      %v587 = vpop.f32.mrf.mxu0
      %v588 = vadd.f32 %v247, %v587
      %v589 = vpop.f32.mrf.mxu0
      %v590 = vpop.f32.mrf.mxu0
      %v591 = vadd.f32 %v247, %v590
      %v592 = vpop.f32.mrf.mxu0
      %593 = vmatprep.mubr.bf16.mxu0 %v360
      %594 = vmatmul.mubr.bf16.gmra.mxu0 %v359
      %v595 = vpop.f32.mrf.mxu0
      %v596 = vadd.f32 %v247, %v595
      %v597 = vpop.f32.mrf.mxu0
      %v598 = vpop.f32.mrf.mxu0
      %v599 = vadd.f32 %v247, %v598
      %v600 = vpop.f32.mrf.mxu0
      %601 = vmatprep.mubr.bf16.mxu0 %v362
      %602 = vmatmul.mubr.bf16.gmra.mxu0 %v361
      %v603 = vpop.f32.mrf.mxu0
      %v604 = vadd.f32 %v247, %v603
      %v605 = vpop.f32.mrf.mxu0
      %v606 = vpop.f32.mrf.mxu0
      %v607 = vadd.f32 %v247, %v606
      %v608 = vpop.f32.mrf.mxu0
      %609 = vmatprep.mubr.bf16.mxu0 %v364
      %610 = vmatmul.mubr.bf16.gmra.mxu0 %v363
      %v611 = vpop.f32.mrf.mxu0
      %v612 = vadd.f32 %v247, %v611
      %v613 = vpop.f32.mrf.mxu0
      %v614 = vpop.f32.mrf.mxu0
      %v615 = vadd.f32 %v247, %v614
      %v616 = vpop.f32.mrf.mxu0
      %617 = vmatprep.mubr.bf16.mxu0 %v366
      %618 = vmatmul.mubr.bf16.gmra.mxu0 %v365
      %v619 = vpop.f32.mrf.mxu0
      %v620 = vadd.f32 %v247, %v619
      %v621 = vpop.f32.mrf.mxu0
      %v622 = vpop.f32.mrf.mxu0
      %v623 = vadd.f32 %v247, %v622
      %v624 = vpop.f32.mrf.mxu0
      %625 = vmatprep.mubr.bf16.mxu0 %v368
      %626 = vmatmul.mubr.bf16.gmra.mxu0 %v367
      %v627 = vpop.f32.mrf.mxu0
      %v628 = vadd.f32 %v247, %v627
      %v629 = vpop.f32.mrf.mxu0
      %v630 = vpop.f32.mrf.mxu0
      %v631 = vadd.f32 %v247, %v630
      %v632 = vpop.f32.mrf.mxu0
      %633 = vmatprep.mubr.bf16.mxu0 %v370
      %634 = vmatmul.mubr.bf16.gmra.mxu0 %v369
      %v635 = vpop.f32.mrf.mxu0
      %v636 = vadd.f32 %v247, %v635
      %v637 = vpop.f32.mrf.mxu0
      %v638 = vpop.f32.mrf.mxu0
      %v639 = vadd.f32 %v247, %v638
      %v640 = vpop.f32.mrf.mxu0
      %641 = vmatprep.mubr.bf16.mxu0 %v372
      %642 = vmatmul.mubr.bf16.gmra.mxu0 %v371
      %v643 = vpop.f32.mrf.mxu0
      %v644 = vadd.f32 %v247, %v643
      %v645 = vpop.f32.mrf.mxu0
      %v646 = vpop.f32.mrf.mxu0
      %v647 = vadd.f32 %v247, %v646
      %v648 = vpop.f32.mrf.mxu0
      %649 = vmatprep.mubr.bf16.mxu0 %v374
      %650 = vmatmul.mubr.bf16.gmra.mxu0 %v373
      %v651 = vpop.f32.mrf.mxu0
      %v652 = vadd.f32 %v247, %v651
      %v653 = vpop.f32.mrf.mxu0
      %v654 = vpop.f32.mrf.mxu0
      %v655 = vadd.f32 %v247, %v654
      %v656 = vpop.f32.mrf.mxu0
      %657 = vmatprep.mubr.bf16.mxu0 %v376
      %658 = vmatmul.mubr.bf16.gmra.mxu0 %v375
      %v659 = vpop.f32.mrf.mxu0
      %v660 = vadd.f32 %v247, %v659
      %v661 = vpop.f32.mrf.mxu0
      %v662 = vpop.f32.mrf.mxu0
      %v663 = vadd.f32 %v247, %v662
      %v664 = vpop.f32.mrf.mxu0
      %665 = vdwg.mxu0
      %v666 = vxor.u32 %v540, 2147483648
      %v667 = vxor.u32 %v543, 2147483648
      %v668 = vxor.u32 %v548, 2147483648
      %v669 = vxor.u32 %v551, 2147483648
      %v670 = vxor.u32 %v556, 2147483648
      %v671 = vxor.u32 %v559, 2147483648
      %v672 = vxor.u32 %v564, 2147483648
      %v673 = vxor.u32 %v567, 2147483648
      %v674 = vxor.u32 %v572, 2147483648
      %v675 = vxor.u32 %v575, 2147483648
      %v676 = vxor.u32 %v580, 2147483648
      %v677 = vxor.u32 %v583, 2147483648
      %v678 = vxor.u32 %v588, 2147483648
      %v679 = vxor.u32 %v591, 2147483648
      %v680 = vxor.u32 %v596, 2147483648
      %v681 = vxor.u32 %v599, 2147483648
      %v682 = vxor.u32 %v604, 2147483648
      %v683 = vxor.u32 %v607, 2147483648
      %v684 = vxor.u32 %v612, 2147483648
      %v685 = vxor.u32 %v615, 2147483648
      %v686 = vxor.u32 %v620, 2147483648
      %v687 = vxor.u32 %v623, 2147483648
      %v688 = vxor.u32 %v628, 2147483648
      %v689 = vxor.u32 %v631, 2147483648
      %v690 = vxor.u32 %v636, 2147483648
      %v691 = vxor.u32 %v639, 2147483648
      %v692 = vxor.u32 %v644, 2147483648
      %v693 = vxor.u32 %v647, 2147483648
      %v694 = vxor.u32 %v652, 2147483648
      %v695 = vxor.u32 %v655, 2147483648
      %v696 = vxor.u32 %v660, 2147483648
      %v697 = vxor.u32 %v663, 2147483648
      %v698 = vmul.f32 %v666, 1.442695
      %v699 = vpow.pop %v698
      %v700 = vmul.f32 %v667, 1.442695
      %v701 = vpow.pop %v700
      %v702 = vmul.f32 %v668, 1.442695
      %v703 = vpow.pop %v702
      %v704 = vmul.f32 %v669, 1.442695
      %v705 = vpow.pop %v704
      %v706 = vmul.f32 %v670, 1.442695
      %v707 = vpow.pop %v706
      %v708 = vmul.f32 %v671, 1.442695
      %v709 = vpow.pop %v708
      %v710 = vmul.f32 %v672, 1.442695
      %v711 = vpow.pop %v710
      %v712 = vmul.f32 %v673, 1.442695
      %v713 = vpow.pop %v712
      %v714 = vmul.f32 %v674, 1.442695
      %v715 = vpow.pop %v714
      %v716 = vmul.f32 %v675, 1.442695
      %v717 = vpow.pop %v716
      %v718 = vmul.f32 %v676, 1.442695
      %v719 = vpow.pop %v718
      %v720 = vmul.f32 %v677, 1.442695
      %v721 = vpow.pop %v720
      %v722 = vmul.f32 %v678, 1.442695
      %v723 = vpow.pop %v722
      %v724 = vmul.f32 %v679, 1.442695
      %v725 = vpow.pop %v724
      %v726 = vmul.f32 %v680, 1.442695
      %v727 = vpow.pop %v726
      %v728 = vmul.f32 %v681, 1.442695
      %v729 = vpow.pop %v728
      %v730 = vmul.f32 %v682, 1.442695
      %v731 = vpow.pop %v730
      %v732 = vmul.f32 %v683, 1.442695
      %v733 = vpow.pop %v732
      %v734 = vmul.f32 %v684, 1.442695
      %v735 = vpow.pop %v734
      %v736 = vmul.f32 %v685, 1.442695
      %v737 = vpow.pop %v736
      %v738 = vmul.f32 %v686, 1.442695
      %v739 = vpow.pop %v738
      %v740 = vmul.f32 %v687, 1.442695
      %v741 = vpow.pop %v740
      %v742 = vmul.f32 %v688, 1.442695
      %v743 = vpow.pop %v742
      %v744 = vmul.f32 %v689, 1.442695
      %v745 = vpow.pop %v744
      %v746 = vmul.f32 %v690, 1.442695
      %v747 = vpow.pop %v746
      %v748 = vmul.f32 %v691, 1.442695
      %v749 = vpow.pop %v748
      %v750 = vmul.f32 %v692, 1.442695
      %v751 = vpow.pop %v750
      %v752 = vmul.f32 %v693, 1.442695
      %v753 = vpow.pop %v752
      %v754 = vmul.f32 %v694, 1.442695
      %v755 = vpow.pop %v754
      %v756 = vmul.f32 %v695, 1.442695
      %v757 = vpow.pop %v756
      %v758 = vmul.f32 %v696, 1.442695
      %v759 = vpow.pop %v758
      %v760 = vmul.f32 %v697, 1.442695
      %v761 = vpow.pop %v760
      %v762 = vadd.f32 %v699, 1.0
      %v763 = vadd.f32 %v701, 1.0
      %v764 = vadd.f32 %v703, 1.0
      %v765 = vadd.f32 %v705, 1.0
      %v766 = vadd.f32 %v707, 1.0
      %v767 = vadd.f32 %v709, 1.0
      %v768 = vadd.f32 %v711, 1.0
      %v769 = vadd.f32 %v713, 1.0
      %v770 = vadd.f32 %v715, 1.0
      %v771 = vadd.f32 %v717, 1.0
      %v772 = vadd.f32 %v719, 1.0
      %v773 = vadd.f32 %v721, 1.0
      %v774 = vadd.f32 %v723, 1.0
      %v775 = vadd.f32 %v725, 1.0
      %v776 = vadd.f32 %v727, 1.0
      %v777 = vadd.f32 %v729, 1.0
      %v778 = vadd.f32 %v731, 1.0
      %v779 = vadd.f32 %v733, 1.0
      %v780 = vadd.f32 %v735, 1.0
      %v781 = vadd.f32 %v737, 1.0
      %v782 = vadd.f32 %v739, 1.0
      %v783 = vadd.f32 %v741, 1.0
      %v784 = vadd.f32 %v743, 1.0
      %v785 = vadd.f32 %v745, 1.0
      %v786 = vadd.f32 %v747, 1.0
      %v787 = vadd.f32 %v749, 1.0
      %v788 = vadd.f32 %v751, 1.0
      %v789 = vadd.f32 %v753, 1.0
      %v790 = vadd.f32 %v755, 1.0
      %v791 = vadd.f32 %v757, 1.0
      %v792 = vadd.f32 %v759, 1.0
      %v793 = vadd.f32 %v761, 1.0
      %v794 = vrcp.pop %v762
      %v795 = vmul.f32 1.0, %v794
      %v796 = vrcp.pop %v763
      %v797 = vmul.f32 1.0, %v796
      %v798 = vrcp.pop %v764
      %v799 = vmul.f32 1.0, %v798
      %v800 = vrcp.pop %v765
      %v801 = vmul.f32 1.0, %v800
      %v802 = vrcp.pop %v766
      %v803 = vmul.f32 1.0, %v802
      %v804 = vrcp.pop %v767
      %v805 = vmul.f32 1.0, %v804
      %v806 = vrcp.pop %v768
      %v807 = vmul.f32 1.0, %v806
      %v808 = vrcp.pop %v769
      %v809 = vmul.f32 1.0, %v808
      %v810 = vrcp.pop %v770
      %v811 = vmul.f32 1.0, %v810
      %v812 = vrcp.pop %v771
      %v813 = vmul.f32 1.0, %v812
      %v814 = vrcp.pop %v772
      %v815 = vmul.f32 1.0, %v814
      %v816 = vrcp.pop %v773
      %v817 = vmul.f32 1.0, %v816
      %v818 = vrcp.pop %v774
      %v819 = vmul.f32 1.0, %v818
      %v820 = vrcp.pop %v775
      %v821 = vmul.f32 1.0, %v820
      %v822 = vrcp.pop %v776
      %v823 = vmul.f32 1.0, %v822
      %v824 = vrcp.pop %v777
      %v825 = vmul.f32 1.0, %v824
      %v826 = vrcp.pop %v778
      %v827 = vmul.f32 1.0, %v826
      %v828 = vrcp.pop %v779
      %v829 = vmul.f32 1.0, %v828
      %v830 = vrcp.pop %v780
      %v831 = vmul.f32 1.0, %v830
      %v832 = vrcp.pop %v781
      %v833 = vmul.f32 1.0, %v832
      %v834 = vrcp.pop %v782
      %v835 = vmul.f32 1.0, %v834
      %v836 = vrcp.pop %v783
      %v837 = vmul.f32 1.0, %v836
      %v838 = vrcp.pop %v784
      %v839 = vmul.f32 1.0, %v838
      %v840 = vrcp.pop %v785
      %v841 = vmul.f32 1.0, %v840
      %v842 = vrcp.pop %v786
      %v843 = vmul.f32 1.0, %v842
      %v844 = vrcp.pop %v787
      %v845 = vmul.f32 1.0, %v844
      %v846 = vrcp.pop %v788
      %v847 = vmul.f32 1.0, %v846
      %v848 = vrcp.pop %v789
      %v849 = vmul.f32 1.0, %v848
      %v850 = vrcp.pop %v790
      %v851 = vmul.f32 1.0, %v850
      %v852 = vrcp.pop %v791
      %v853 = vmul.f32 1.0, %v852
      %v854 = vrcp.pop %v792
      %v855 = vmul.f32 1.0, %v854
      %v856 = vrcp.pop %v793
      %v857 = vmul.f32 1.0, %v856
      %v858 = vmul.f32 %v540, %v795
      %v859 = vmul.f32 %v543, %v797
      %v860 = vmul.f32 %v548, %v799
      %v861 = vmul.f32 %v551, %v801
      %v862 = vmul.f32 %v556, %v803
      %v863 = vmul.f32 %v559, %v805
      %v864 = vmul.f32 %v564, %v807
      %v865 = vmul.f32 %v567, %v809
      %v866 = vmul.f32 %v572, %v811
      %v867 = vmul.f32 %v575, %v813
      %v868 = vmul.f32 %v580, %v815
      %v869 = vmul.f32 %v583, %v817
      %v870 = vmul.f32 %v588, %v819
      %v871 = vmul.f32 %v591, %v821
      %v872 = vmul.f32 %v596, %v823
      %v873 = vmul.f32 %v599, %v825
      %v874 = vmul.f32 %v604, %v827
      %v875 = vmul.f32 %v607, %v829
      %v876 = vmul.f32 %v612, %v831
      %v877 = vmul.f32 %v615, %v833
      %v878 = vmul.f32 %v620, %v835
      %v879 = vmul.f32 %v623, %v837
      %v880 = vmul.f32 %v628, %v839
      %v881 = vmul.f32 %v631, %v841
      %v882 = vmul.f32 %v636, %v843
      %v883 = vmul.f32 %v639, %v845
      %v884 = vmul.f32 %v644, %v847
      %v885 = vmul.f32 %v647, %v849
      %v886 = vmul.f32 %v652, %v851
      %v887 = vmul.f32 %v655, %v853
      %v888 = vmul.f32 %v660, %v855
      %v889 = vmul.f32 %v663, %v857
      %v890 = vpack.c.bf16 %v859, %v858
      %v891 = vpack.c.bf16 %v861, %v860
      %v892 = vpack.c.bf16 %v863, %v862
      %v893 = vpack.c.bf16 %v865, %v864
      %v894 = vpack.c.bf16 %v867, %v866
      %v895 = vpack.c.bf16 %v869, %v868
      %v896 = vpack.c.bf16 %v871, %v870
      %v897 = vpack.c.bf16 %v873, %v872
      %v898 = vpack.c.bf16 %v875, %v874
      %v899 = vpack.c.bf16 %v877, %v876
      %v900 = vpack.c.bf16 %v879, %v878
      %v901 = vpack.c.bf16 %v881, %v880
      %v902 = vpack.c.bf16 %v883, %v882
      %v903 = vpack.c.bf16 %v885, %v884
      %v904 = vpack.c.bf16 %v887, %v886
      %v905 = vpack.c.bf16 %v889, %v888
      %v922 = vunpack.c.l.b16 %v890
      %v923 = vunpack.c.h.b16 %v890
      %v924 = vunpack.c.l.b16 %v891
      %v925 = vunpack.c.h.b16 %v891
      %v926 = vunpack.c.l.b16 %v892
      %v927 = vunpack.c.h.b16 %v892
      %v928 = vunpack.c.l.b16 %v893
      %v929 = vunpack.c.h.b16 %v893
      %v930 = vunpack.c.l.b16 %v894
      %v931 = vunpack.c.h.b16 %v894
      %v932 = vunpack.c.l.b16 %v895
      %v933 = vunpack.c.h.b16 %v895
      %v934 = vunpack.c.l.b16 %v896
      %v935 = vunpack.c.h.b16 %v896
      %v936 = vunpack.c.l.b16 %v897
      %v937 = vunpack.c.h.b16 %v897
      %v938 = vunpack.c.l.b16 %v898
      %v939 = vunpack.c.h.b16 %v898
      %v940 = vunpack.c.l.b16 %v899
      %v941 = vunpack.c.h.b16 %v899
      %v942 = vunpack.c.l.b16 %v900
      %v943 = vunpack.c.h.b16 %v900
      %v944 = vunpack.c.l.b16 %v901
      %v945 = vunpack.c.h.b16 %v901
      %v946 = vunpack.c.l.b16 %v902
      %v947 = vunpack.c.h.b16 %v902
      %v948 = vunpack.c.l.b16 %v903
      %v949 = vunpack.c.h.b16 %v903
      %v950 = vunpack.c.l.b16 %v904
      %v951 = vunpack.c.h.b16 %v904
      %v952 = vunpack.c.l.b16 %v905
      %v953 = vunpack.c.h.b16 %v905
      %v954 = vpack.c.b16 %v922, %v922
      %v955 = vpack.c.b16 %v923, %v923
      %v956 = vpack.c.b16 %v924, %v924
      %v957 = vpack.c.b16 %v925, %v925
      %v958 = vpack.c.b16 %v926, %v926
      %v959 = vpack.c.b16 %v927, %v927
      %v960 = vpack.c.b16 %v928, %v928
      %v961 = vpack.c.b16 %v929, %v929
      %v962 = vpack.c.b16 %v930, %v930
      %v963 = vpack.c.b16 %v931, %v931
      %v964 = vpack.c.b16 %v932, %v932
      %v965 = vpack.c.b16 %v933, %v933
      %v966 = vpack.c.b16 %v934, %v934
      %v967 = vpack.c.b16 %v935, %v935
      %v968 = vpack.c.b16 %v936, %v936
      %v969 = vpack.c.b16 %v937, %v937
      %v970 = vpack.c.b16 %v938, %v938
      %v971 = vpack.c.b16 %v939, %v939
      %v972 = vpack.c.b16 %v940, %v940
      %v973 = vpack.c.b16 %v941, %v941
      %v974 = vpack.c.b16 %v942, %v942
      %v975 = vpack.c.b16 %v943, %v943
      %v976 = vpack.c.b16 %v944, %v944
      %v977 = vpack.c.b16 %v945, %v945
      %v978 = vpack.c.b16 %v946, %v946
      %v979 = vpack.c.b16 %v947, %v947
      %v980 = vpack.c.b16 %v948, %v948
      %v981 = vpack.c.b16 %v949, %v949
      %v982 = vpack.c.b16 %v950, %v950
      %v983 = vpack.c.b16 %v951, %v951
      %v984 = vpack.c.b16 %v952, %v952
      %v985 = vpack.c.b16 %v953, %v953
      %1018 = vst [vmem:[%s175] sm:$0xf] %v954
      %1019 = vst [vmem:[%s175 + $0x4] sm:$0xf] %v955
      %1020 = vst [vmem:[%s175 + $0x8] sm:$0xf] %v956
      %1021 = vst [vmem:[%s175 + $0xc] sm:$0xf] %v957
      %1022 = vst [vmem:[%s175 + $0x10] sm:$0xf] %v958
      %1023 = vst [vmem:[%s175 + $0x14] sm:$0xf] %v959
      %1024 = vst [vmem:[%s175 + $0x18] sm:$0xf] %v960
      %1025 = vst [vmem:[%s175 + $0x1c] sm:$0xf] %v961
      %1026 = vst [vmem:[%s175 + $0x20] sm:$0xf] %v962
      %1027 = vst [vmem:[%s175 + $0x24] sm:$0xf] %v963
      %1028 = vst [vmem:[%s175 + $0x28] sm:$0xf] %v964
      %1029 = vst [vmem:[%s175 + $0x2c] sm:$0xf] %v965
      %1030 = vst [vmem:[%s175 + $0x30] sm:$0xf] %v966
      %1031 = vst [vmem:[%s175 + $0x34] sm:$0xf] %v967
      %1032 = vst [vmem:[%s175 + $0x38] sm:$0xf] %v968
      %1033 = vst [vmem:[%s175 + $0x3c] sm:$0xf] %v969
      %1034 = vst [vmem:[%s175 + $0x40] sm:$0xf] %v970
      %1035 = vst [vmem:[%s175 + $0x44] sm:$0xf] %v971
      %1036 = vst [vmem:[%s175 + $0x48] sm:$0xf] %v972
      %1037 = vst [vmem:[%s175 + $0x4c] sm:$0xf] %v973
      %1038 = vst [vmem:[%s175 + $0x50] sm:$0xf] %v974
      %1039 = vst [vmem:[%s175 + $0x54] sm:$0xf] %v975
      %1040 = vst [vmem:[%s175 + $0x58] sm:$0xf] %v976
      %1041 = vst [vmem:[%s175 + $0x5c] sm:$0xf] %v977
      %1042 = vst [vmem:[%s175 + $0x60] sm:$0xf] %v978
      %1043 = vst [vmem:[%s175 + $0x64] sm:$0xf] %v979
      %1044 = vst [vmem:[%s175 + $0x68] sm:$0xf] %v980
      %1045 = vst [vmem:[%s175 + $0x6c] sm:$0xf] %v981
      %1046 = vst [vmem:[%s175 + $0x70] sm:$0xf] %v982
      %1047 = vst [vmem:[%s175 + $0x74] sm:$0xf] %v983
      %1048 = vst [vmem:[%s175 + $0x78] sm:$0xf] %v984
      %1049 = vst [vmem:[%s175 + $0x7c] sm:$0xf] %v985
      %s1050 = smul.u32 32, %s14
      %p1051 = scmp.lt.s32.totalorder %s1050, 63
      %s1052 = scalar_select %p1051, %s1050, 63
      %s1053 = smul.addr %s1052, 4
      %s1054 = scalar_lea.vmem %s3, %s1053
      // Predicated region
      $region33: #{_lambda_.4} parent=31 // pred_check
        %p1055 = pneg %p100
      $region34: #{_lambda_.4} parent=31 // pred_check_branch
        %1057 = sbr.rel (%p1055) target = $region36
      $region35: #{_lambda_.4} parent=31 // pred_region
        %s1058 = smul.u32 32, %s14
      $region36: #{_lambda_.4} parent=31 // pred_fallthru
        _
    $region32: #{_lambda_.4} parent=5 // pred_fallthru
      _
    %p1059 = scmp.le.s32.totalorder 2, %s9
    // Predicated region
    $region37: #{_lambda_.4} parent=5 // pred_check
      %p1060 = pneg %p1059
    $region38: #{_lambda_.4} parent=5 // pred_check_branch
      %1062 = sbr.rel (%p1060) target = $region40
    $region39: #{_lambda_.4} parent=5 // pred_region
      %s1063 = ssub.s32 %s9, 2
      // Predicated region
      $region41: #{_lambda_.4} parent=39 // pred_check
        %p1064 = pneg %p106
      $region42: #{_lambda_.4} parent=39 // pred_check_branch
        %1066 = sbr.rel (%p1064) target = $region44
      $region43: #{_lambda_.4} parent=39 // pred_region
        %s1067 = smul.u32 32, %s15
        %p1068 = scmp.lt.s32.totalorder %s1067, 63
        %s1069 = scalar_select %p1068, %s1067, 63
        %s1070 = smul.addr %s1069, 4
        %s1071 = scalar_lea.vmem %s3, %s1070
      $region44: #{_lambda_.4} parent=39 // pred_fallthru
        _
    $region40: #{_lambda_.4} parent=5 // pred_fallthru
      _
  $region6: #{_lambda_.4} parent=0 // loop_footer
    %s13 = sadd.s32 1, %s9
  $region7: #{_lambda_.4} parent=0 // loop_footer_branch
    %8 = sbr.rel target = $region3
  $region8: #{_lambda_.4} parent=0 // loop_exit
    _

// kernel: _lambda_.5
$region0: #{_lambda_.5}
  #allocation0 [shape = 'u32[]', space=smem, size = 0x4, offset = 0x4, fixed_abs, tag = 'smem constant byte address 0x4 - core index']
  #allocation1 [shape = 'u32[144,128]{1,0:T(1,128)}', space=vmem, size = 0x12000, scoped, tag = 'internal scratch']
  %s0 = inlined_call_operand.vmem [shape: bf16[128,1152], index: 0, kind: input, shape index: {}]
  %s1 = inlined_call_operand.vmem [shape: bf16[1152,128], index: 1, kind: input, shape index: {}]
  %s2 = inlined_call_operand.vmem [shape: f32[1,128], index: 2, kind: input, shape index: {}]
  %s3 = inlined_call_operand.vmem [shape: bf16[128,128], index: 3, kind: output, shape index: {}]
  %s4 = sld [smem:[#allocation0]]
  $region22: #{_lambda_.5} parent=0
    _
  %s6 = ssub.s32 1, %s4
  %s7 = scalar_select 0, %s6, %s4
  // Predicated region
  $region2: #{_lambda_.5} parent=0 // pred_check
    _
  $region3: #{_lambda_.5} parent=0 // pred_check_branch
    %9 = sbr.rel (0) target = $region5
  $region4: #{_lambda_.5} parent=0 // pred_region
    _
  $region5: #{_lambda_.5} parent=0 // pred_fallthru
    _
  // Predicated region
  $region6: #{_lambda_.5} parent=0 // pred_check
    _
  $region7: #{_lambda_.5} parent=0 // pred_check_branch
    %11 = sbr.rel (0) target = $region9
  $region8: #{_lambda_.5} parent=0 // pred_region
    _
  $region9: #{_lambda_.5} parent=0 // pred_fallthru
    _
  // Predicated region
  $region10: #{_lambda_.5} parent=0 // pred_check
    _
  $region11: #{_lambda_.5} parent=0 // pred_check_branch
    %13 = sbr.rel (0) target = $region13
  $region12: #{_lambda_.5} parent=0 // pred_region
    _
  $region13: #{_lambda_.5} parent=0 // pred_fallthru
    _
  %v15 = vld [vmem:[%s0] sm:$0xff]
  %v16 = vld [vmem:[%s0 + $0x8] sm:$0xff]
  %v17 = vld [vmem:[%s0 + $0x10] sm:$0xff]
  %v18 = vld [vmem:[%s0 + $0x18] sm:$0xff]
  %v19 = vld [vmem:[%s0 + $0x20] sm:$0xf]
  %v20 = vld [vmem:[%s0 + $0x24] sm:$0xff]
  %v21 = vld [vmem:[%s0 + $0x2c] sm:$0xff]
  %v22 = vld [vmem:[%s0 + $0x34] sm:$0xff]
  %v23 = vld [vmem:[%s0 + $0x3c] sm:$0xff]
  %v24 = vld [vmem:[%s0 + $0x44] sm:$0xf]
  %v25 = vld [vmem:[%s0 + $0x48] sm:$0xff]
  %v26 = vld [vmem:[%s0 + $0x50] sm:$0xff]
  %v27 = vld [vmem:[%s0 + $0x58] sm:$0xff]
  %v28 = vld [vmem:[%s0 + $0x60] sm:$0xff]
  %v29 = vld [vmem:[%s0 + $0x68] sm:$0xf]
  %v30 = vld [vmem:[%s0 + $0x6c] sm:$0xff]
  %v31 = vld [vmem:[%s0 + $0x74] sm:$0xff]
  %v32 = vld [vmem:[%s0 + $0x7c] sm:$0xff]
  %v33 = vld [vmem:[%s0 + $0x84] sm:$0xff]
  %v34 = vld [vmem:[%s0 + $0x8c] sm:$0xf]
  %v35 = vld [vmem:[%s0 + $0x90] sm:$0xff]
  %v36 = vld [vmem:[%s0 + $0x98] sm:$0xff]
  %v37 = vld [vmem:[%s0 + $0xa0] sm:$0xff]
  %v38 = vld [vmem:[%s0 + $0xa8] sm:$0xff]
  %v39 = vld [vmem:[%s0 + $0xb0] sm:$0xf]
  %v40 = vld [vmem:[%s0 + $0xb4] sm:$0xff]
  %v41 = vld [vmem:[%s0 + $0xbc] sm:$0xff]
  %v42 = vld [vmem:[%s0 + $0xc4] sm:$0xff]
  %v43 = vld [vmem:[%s0 + $0xcc] sm:$0xff]
  %v44 = vld [vmem:[%s0 + $0xd4] sm:$0xf]
  %v45 = vld [vmem:[%s0 + $0xd8] sm:$0xff]
  %v46 = vld [vmem:[%s0 + $0xe0] sm:$0xff]
  %v47 = vld [vmem:[%s0 + $0xe8] sm:$0xff]
  %v48 = vld [vmem:[%s0 + $0xf0] sm:$0xff]
  %v49 = vld [vmem:[%s0 + $0xf8] sm:$0xf]
  %v50 = vld [vmem:[%s0 + $0xfc] sm:$0xff]
  %v51 = vld [vmem:[%s0 + $0x104] sm:$0xff]
  %v52 = vld [vmem:[%s0 + $0x10c] sm:$0xff]
  %v53 = vld [vmem:[%s0 + $0x114] sm:$0xff]
  %v54 = vld [vmem:[%s0 + $0x11c] sm:$0xf]
  %v55 = vld [vmem:[%s0 + $0x120] sm:$0xff]
  %v56 = vld [vmem:[%s0 + $0x128] sm:$0xff]
  %v57 = vld [vmem:[%s0 + $0x130] sm:$0xff]
  %v58 = vld [vmem:[%s0 + $0x138] sm:$0xff]
  %v59 = vld [vmem:[%s0 + $0x140] sm:$0xf]
  %v60 = vld [vmem:[%s0 + $0x144] sm:$0xff]
  %v61 = vld [vmem:[%s0 + $0x14c] sm:$0xff]
  %v62 = vld [vmem:[%s0 + $0x154] sm:$0xff]
  %v63 = vld [vmem:[%s0 + $0x15c] sm:$0xff]
  %v64 = vld [vmem:[%s0 + $0x164] sm:$0xf]
  %v65 = vld [vmem:[%s0 + $0x168] sm:$0xff]
  %v66 = vld [vmem:[%s0 + $0x170] sm:$0xff]
  %v67 = vld [vmem:[%s0 + $0x178] sm:$0xff]
  %v68 = vld [vmem:[%s0 + $0x180] sm:$0xff]
  %v69 = vld [vmem:[%s0 + $0x188] sm:$0xf]
  %v70 = vld [vmem:[%s0 + $0x18c] sm:$0xff]
  %v71 = vld [vmem:[%s0 + $0x194] sm:$0xff]
  %v72 = vld [vmem:[%s0 + $0x19c] sm:$0xff]
  %v73 = vld [vmem:[%s0 + $0x1a4] sm:$0xff]
  %v74 = vld [vmem:[%s0 + $0x1ac] sm:$0xf]
  %v75 = vld [vmem:[%s0 + $0x1b0] sm:$0xff]
  %v76 = vld [vmem:[%s0 + $0x1b8] sm:$0xff]
  %v77 = vld [vmem:[%s0 + $0x1c0] sm:$0xff]
  %v78 = vld [vmem:[%s0 + $0x1c8] sm:$0xff]
  %v79 = vld [vmem:[%s0 + $0x1d0] sm:$0xf]
  %v80 = vld [vmem:[%s0 + $0x1d4] sm:$0xff]
  %v81 = vld [vmem:[%s0 + $0x1dc] sm:$0xff]
  %v82 = vld [vmem:[%s0 + $0x1e4] sm:$0xff]
  %v83 = vld [vmem:[%s0 + $0x1ec] sm:$0xff]
  %v84 = vld [vmem:[%s0 + $0x1f4] sm:$0xf]
  %v85 = vld [vmem:[%s0 + $0x1f8] sm:$0xff]
  %v86 = vld [vmem:[%s0 + $0x200] sm:$0xff]
  %v87 = vld [vmem:[%s0 + $0x208] sm:$0xff]
  %v88 = vld [vmem:[%s0 + $0x210] sm:$0xff]
  %v89 = vld [vmem:[%s0 + $0x218] sm:$0xf]
  %v90 = vld [vmem:[%s0 + $0x21c] sm:$0xff]
  %v91 = vld [vmem:[%s0 + $0x224] sm:$0xff]
  %v92 = vld [vmem:[%s0 + $0x22c] sm:$0xff]
  %v93 = vld [vmem:[%s0 + $0x234] sm:$0xff]
  %v94 = vld [vmem:[%s0 + $0x23c] sm:$0xf]
  %v95 = vld [vmem:[%s1] sm:$0xf]
  %v96 = vld [vmem:[%s1 + $0x4] sm:$0xf]
  %v97 = vld [vmem:[%s1 + $0x8] sm:$0xf]
  %v98 = vld [vmem:[%s1 + $0xc] sm:$0xf]
  %v99 = vld [vmem:[%s1 + $0x10] sm:$0xf]
  %v100 = vld [vmem:[%s1 + $0x14] sm:$0xf]
  %v101 = vld [vmem:[%s1 + $0x18] sm:$0xf]
  %v102 = vld [vmem:[%s1 + $0x1c] sm:$0xf]
  %v103 = vld [vmem:[%s1 + $0x20] sm:$0xf]
  %v104 = vld [vmem:[%s1 + $0x24] sm:$0xf]
  %v105 = vld [vmem:[%s1 + $0x28] sm:$0xf]
  %v106 = vld [vmem:[%s1 + $0x2c] sm:$0xf]
  %v107 = vld [vmem:[%s1 + $0x30] sm:$0xf]
  %v108 = vld [vmem:[%s1 + $0x34] sm:$0xf]
  %v109 = vld [vmem:[%s1 + $0x38] sm:$0xf]
  %v110 = vld [vmem:[%s1 + $0x3c] sm:$0xf]
  %v111 = vld [vmem:[%s1 + $0x40] sm:$0xf]
  %v112 = vld [vmem:[%s1 + $0x44] sm:$0xf]
  %v113 = vld [vmem:[%s1 + $0x48] sm:$0xf]
  %v114 = vld [vmem:[%s1 + $0x4c] sm:$0xf]
  %v115 = vld [vmem:[%s1 + $0x50] sm:$0xf]
  %v116 = vld [vmem:[%s1 + $0x54] sm:$0xf]
  %v117 = vld [vmem:[%s1 + $0x58] sm:$0xf]
  %v118 = vld [vmem:[%s1 + $0x5c] sm:$0xf]
  %v119 = vld [vmem:[%s1 + $0x60] sm:$0xf]
  %v120 = vld [vmem:[%s1 + $0x64] sm:$0xf]
  %v121 = vld [vmem:[%s1 + $0x68] sm:$0xf]
  %v122 = vld [vmem:[%s1 + $0x6c] sm:$0xf]
  %v123 = vld [vmem:[%s1 + $0x70] sm:$0xf]
  %v124 = vld [vmem:[%s1 + $0x74] sm:$0xf]
  %v125 = vld [vmem:[%s1 + $0x78] sm:$0xf]
  %v126 = vld [vmem:[%s1 + $0x7c] sm:$0xf]
  %v127 = vld [vmem:[%s1 + $0x80] sm:$0xf]
  %v128 = vld [vmem:[%s1 + $0x84] sm:$0xf]
  %v129 = vld [vmem:[%s1 + $0x88] sm:$0xf]
  %v130 = vld [vmem:[%s1 + $0x8c] sm:$0xf]
  %v131 = vld [vmem:[%s1 + $0x90] sm:$0xf]
  %v132 = vld [vmem:[%s1 + $0x94] sm:$0xf]
  %v133 = vld [vmem:[%s1 + $0x98] sm:$0xf]
  %v134 = vld [vmem:[%s1 + $0x9c] sm:$0xf]
  %v135 = vld [vmem:[%s1 + $0xa0] sm:$0xf]
  %v136 = vld [vmem:[%s1 + $0xa4] sm:$0xf]
  %v137 = vld [vmem:[%s1 + $0xa8] sm:$0xf]
  %v138 = vld [vmem:[%s1 + $0xac] sm:$0xf]
  %v139 = vld [vmem:[%s1 + $0xb0] sm:$0xf]
  %v140 = vld [vmem:[%s1 + $0xb4] sm:$0xf]
  %v141 = vld [vmem:[%s1 + $0xb8] sm:$0xf]
  %v142 = vld [vmem:[%s1 + $0xbc] sm:$0xf]
  %v143 = vld [vmem:[%s1 + $0xc0] sm:$0xf]
  %v144 = vld [vmem:[%s1 + $0xc4] sm:$0xf]
  %v145 = vld [vmem:[%s1 + $0xc8] sm:$0xf]
  %v146 = vld [vmem:[%s1 + $0xcc] sm:$0xf]
  %v147 = vld [vmem:[%s1 + $0xd0] sm:$0xf]
  %v148 = vld [vmem:[%s1 + $0xd4] sm:$0xf]
  %v149 = vld [vmem:[%s1 + $0xd8] sm:$0xf]
  %v150 = vld [vmem:[%s1 + $0xdc] sm:$0xf]
  %v151 = vld [vmem:[%s1 + $0xe0] sm:$0xf]
  %v152 = vld [vmem:[%s1 + $0xe4] sm:$0xf]
  %v153 = vld [vmem:[%s1 + $0xe8] sm:$0xf]
  %v154 = vld [vmem:[%s1 + $0xec] sm:$0xf]
  %v155 = vld [vmem:[%s1 + $0xf0] sm:$0xf]
  %v156 = vld [vmem:[%s1 + $0xf4] sm:$0xf]
  %v157 = vld [vmem:[%s1 + $0xf8] sm:$0xf]
  %v158 = vld [vmem:[%s1 + $0xfc] sm:$0xf]
  %v159 = vld [vmem:[%s1 + $0x100] sm:$0xf]
  %v160 = vld [vmem:[%s1 + $0x104] sm:$0xf]
  %v161 = vld [vmem:[%s1 + $0x108] sm:$0xf]
  %v162 = vld [vmem:[%s1 + $0x10c] sm:$0xf]
  %v163 = vld [vmem:[%s1 + $0x110] sm:$0xf]
  %v164 = vld [vmem:[%s1 + $0x114] sm:$0xf]
  %v165 = vld [vmem:[%s1 + $0x118] sm:$0xf]
  %v166 = vld [vmem:[%s1 + $0x11c] sm:$0xf]
  %v167 = vld [vmem:[%s1 + $0x120] sm:$0xf]
  %v168 = vld [vmem:[%s1 + $0x124] sm:$0xf]
  %v169 = vld [vmem:[%s1 + $0x128] sm:$0xf]
  %v170 = vld [vmem:[%s1 + $0x12c] sm:$0xf]
  %v171 = vld [vmem:[%s1 + $0x130] sm:$0xf]
  %v172 = vld [vmem:[%s1 + $0x134] sm:$0xf]
  %v173 = vld [vmem:[%s1 + $0x138] sm:$0xf]
  %v174 = vld [vmem:[%s1 + $0x13c] sm:$0xf]
  %v175 = vld [vmem:[%s1 + $0x140] sm:$0xf]
  %v176 = vld [vmem:[%s1 + $0x144] sm:$0xf]
  %v177 = vld [vmem:[%s1 + $0x148] sm:$0xf]
  %v178 = vld [vmem:[%s1 + $0x14c] sm:$0xf]
  %v179 = vld [vmem:[%s1 + $0x150] sm:$0xf]
  %v180 = vld [vmem:[%s1 + $0x154] sm:$0xf]
  %v181 = vld [vmem:[%s1 + $0x158] sm:$0xf]
  %v182 = vld [vmem:[%s1 + $0x15c] sm:$0xf]
  %v183 = vld [vmem:[%s1 + $0x160] sm:$0xf]
  %v184 = vld [vmem:[%s1 + $0x164] sm:$0xf]
  %v185 = vld [vmem:[%s1 + $0x168] sm:$0xf]
  %v186 = vld [vmem:[%s1 + $0x16c] sm:$0xf]
  %v187 = vld [vmem:[%s1 + $0x170] sm:$0xf]
  %v188 = vld [vmem:[%s1 + $0x174] sm:$0xf]
  %v189 = vld [vmem:[%s1 + $0x178] sm:$0xf]
  %v190 = vld [vmem:[%s1 + $0x17c] sm:$0xf]
  %v191 = vld [vmem:[%s1 + $0x180] sm:$0xf]
  %v192 = vld [vmem:[%s1 + $0x184] sm:$0xf]
  %v193 = vld [vmem:[%s1 + $0x188] sm:$0xf]
  %v194 = vld [vmem:[%s1 + $0x18c] sm:$0xf]
  %v195 = vld [vmem:[%s1 + $0x190] sm:$0xf]
  %v196 = vld [vmem:[%s1 + $0x194] sm:$0xf]
  %v197 = vld [vmem:[%s1 + $0x198] sm:$0xf]
  %v198 = vld [vmem:[%s1 + $0x19c] sm:$0xf]
  %v199 = vld [vmem:[%s1 + $0x1a0] sm:$0xf]
  %v200 = vld [vmem:[%s1 + $0x1a4] sm:$0xf]
  %v201 = vld [vmem:[%s1 + $0x1a8] sm:$0xf]
  %v202 = vld [vmem:[%s1 + $0x1ac] sm:$0xf]
  %v203 = vld [vmem:[%s1 + $0x1b0] sm:$0xf]
  %v204 = vld [vmem:[%s1 + $0x1b4] sm:$0xf]
  %v205 = vld [vmem:[%s1 + $0x1b8] sm:$0xf]
  %v206 = vld [vmem:[%s1 + $0x1bc] sm:$0xf]
  %v207 = vld [vmem:[%s1 + $0x1c0] sm:$0xf]
  %v208 = vld [vmem:[%s1 + $0x1c4] sm:$0xf]
  %v209 = vld [vmem:[%s1 + $0x1c8] sm:$0xf]
  %v210 = vld [vmem:[%s1 + $0x1cc] sm:$0xf]
  %v211 = vld [vmem:[%s1 + $0x1d0] sm:$0xf]
  %v212 = vld [vmem:[%s1 + $0x1d4] sm:$0xf]
  %v213 = vld [vmem:[%s1 + $0x1d8] sm:$0xf]
  %v214 = vld [vmem:[%s1 + $0x1dc] sm:$0xf]
  %v215 = vld [vmem:[%s1 + $0x1e0] sm:$0xf]
  %v216 = vld [vmem:[%s1 + $0x1e4] sm:$0xf]
  %v217 = vld [vmem:[%s1 + $0x1e8] sm:$0xf]
  %v218 = vld [vmem:[%s1 + $0x1ec] sm:$0xf]
  %v219 = vld [vmem:[%s1 + $0x1f0] sm:$0xf]
  %v220 = vld [vmem:[%s1 + $0x1f4] sm:$0xf]
  %v221 = vld [vmem:[%s1 + $0x1f8] sm:$0xf]
  %v222 = vld [vmem:[%s1 + $0x1fc] sm:$0xf]
  %v223 = vld [vmem:[%s1 + $0x200] sm:$0xf]
  %v224 = vld [vmem:[%s1 + $0x204] sm:$0xf]
  %v225 = vld [vmem:[%s1 + $0x208] sm:$0xf]
  %v226 = vld [vmem:[%s1 + $0x20c] sm:$0xf]
  %v227 = vld [vmem:[%s1 + $0x210] sm:$0xf]
  %v228 = vld [vmem:[%s1 + $0x214] sm:$0xf]
  %v229 = vld [vmem:[%s1 + $0x218] sm:$0xf]
  %v230 = vld [vmem:[%s1 + $0x21c] sm:$0xf]
  %v231 = vld [vmem:[%s1 + $0x220] sm:$0xf]
  %v232 = vld [vmem:[%s1 + $0x224] sm:$0xf]
  %v233 = vld [vmem:[%s1 + $0x228] sm:$0xf]
  %v234 = vld [vmem:[%s1 + $0x22c] sm:$0xf]
  %v235 = vld [vmem:[%s1 + $0x230] sm:$0xf]
  %v236 = vld [vmem:[%s1 + $0x234] sm:$0xf]
  %v237 = vld [vmem:[%s1 + $0x238] sm:$0xf]
  %v238 = vld [vmem:[%s1 + $0x23c] sm:$0xf]
  %v239 = vld [vmem:[%s2] sm:$0x1]
  %v241 = vlaneseq
  %v242 = vshrl.u32 %v241, 7
  %v243 = vsub.s32 0, %v242
  %v244 = vrot.slane %v239, %v243
  %v326 = vunpack.c.l.b16 %v15
  %v327 = vunpack.c.h.b16 %v15
  %v328 = vunpack.c.l.b16 %v16
  %v329 = vunpack.c.h.b16 %v16
  %v330 = vunpack.c.l.b16 %v17
  %v331 = vunpack.c.h.b16 %v17
  %v332 = vunpack.c.l.b16 %v18
  %v333 = vunpack.c.h.b16 %v18
  %v334 = vunpack.c.l.b16 %v19
  %v335 = vunpack.c.l.b16 %v20
  %v336 = vunpack.c.h.b16 %v20
  %v337 = vunpack.c.l.b16 %v21
  %v338 = vunpack.c.h.b16 %v21
  %v339 = vunpack.c.l.b16 %v22
  %v340 = vunpack.c.h.b16 %v22
  %v341 = vunpack.c.l.b16 %v23
  %v342 = vunpack.c.h.b16 %v23
  %v343 = vunpack.c.l.b16 %v24
  %v344 = vunpack.c.l.b16 %v25
  %v345 = vunpack.c.h.b16 %v25
  %v346 = vunpack.c.l.b16 %v26
  %v347 = vunpack.c.h.b16 %v26
  %v348 = vunpack.c.l.b16 %v27
  %v349 = vunpack.c.h.b16 %v27
  %v350 = vunpack.c.l.b16 %v28
  %v351 = vunpack.c.h.b16 %v28
  %v352 = vunpack.c.l.b16 %v29
  %v353 = vunpack.c.l.b16 %v30
  %v354 = vunpack.c.h.b16 %v30
  %v355 = vunpack.c.l.b16 %v31
  %v356 = vunpack.c.h.b16 %v31
  %v357 = vunpack.c.l.b16 %v32
  %v358 = vunpack.c.h.b16 %v32
  %v359 = vunpack.c.l.b16 %v33
  %v360 = vunpack.c.h.b16 %v33
  %v361 = vunpack.c.l.b16 %v34
  %v362 = vunpack.c.l.b16 %v35
  %v363 = vunpack.c.h.b16 %v35
  %v364 = vunpack.c.l.b16 %v36
  %v365 = vunpack.c.h.b16 %v36
  %v366 = vunpack.c.l.b16 %v37
  %v367 = vunpack.c.h.b16 %v37
  %v368 = vunpack.c.l.b16 %v38
  %v369 = vunpack.c.h.b16 %v38
  %v370 = vunpack.c.l.b16 %v39
  %v371 = vunpack.c.l.b16 %v40
  %v372 = vunpack.c.h.b16 %v40
  %v373 = vunpack.c.l.b16 %v41
  %v374 = vunpack.c.h.b16 %v41
  %v375 = vunpack.c.l.b16 %v42
  %v376 = vunpack.c.h.b16 %v42
  %v377 = vunpack.c.l.b16 %v43
  %v378 = vunpack.c.h.b16 %v43
  %v379 = vunpack.c.l.b16 %v44
  %v380 = vunpack.c.l.b16 %v45
  %v381 = vunpack.c.h.b16 %v45
  %v382 = vunpack.c.l.b16 %v46
  %v383 = vunpack.c.h.b16 %v46
  %v384 = vunpack.c.l.b16 %v47
  %v385 = vunpack.c.h.b16 %v47
  %v386 = vunpack.c.l.b16 %v48
  %v387 = vunpack.c.h.b16 %v48
  %v388 = vunpack.c.l.b16 %v49
  %v389 = vunpack.c.l.b16 %v50
  %v390 = vunpack.c.h.b16 %v50
  %v391 = vunpack.c.l.b16 %v51
  %v392 = vunpack.c.h.b16 %v51
  %v393 = vunpack.c.l.b16 %v52
  %v394 = vunpack.c.h.b16 %v52
  %v395 = vunpack.c.l.b16 %v53
  %v396 = vunpack.c.h.b16 %v53
  %v397 = vunpack.c.l.b16 %v54
  %v398 = vunpack.c.l.b16 %v55
  %v399 = vunpack.c.h.b16 %v55
  %v400 = vunpack.c.l.b16 %v56
  %v401 = vunpack.c.h.b16 %v56
  %v402 = vunpack.c.l.b16 %v57
  %v403 = vunpack.c.h.b16 %v57
  %v404 = vunpack.c.l.b16 %v58
  %v405 = vunpack.c.h.b16 %v58
  %v406 = vunpack.c.l.b16 %v59
  %v407 = vunpack.c.l.b16 %v60
  %v408 = vunpack.c.h.b16 %v60
  %v409 = vunpack.c.l.b16 %v61
  %v410 = vunpack.c.h.b16 %v61
  %v411 = vunpack.c.l.b16 %v62
  %v412 = vunpack.c.h.b16 %v62
  %v413 = vunpack.c.l.b16 %v63
  %v414 = vunpack.c.h.b16 %v63
  %v415 = vunpack.c.l.b16 %v64
  %v416 = vunpack.c.l.b16 %v65
  %v417 = vunpack.c.h.b16 %v65
  %v418 = vunpack.c.l.b16 %v66
  %v419 = vunpack.c.h.b16 %v66
  %v420 = vunpack.c.l.b16 %v67
  %v421 = vunpack.c.h.b16 %v67
  %v422 = vunpack.c.l.b16 %v68
  %v423 = vunpack.c.h.b16 %v68
  %v424 = vunpack.c.l.b16 %v69
  %v425 = vunpack.c.l.b16 %v70
  %v426 = vunpack.c.h.b16 %v70
  %v427 = vunpack.c.l.b16 %v71
  %v428 = vunpack.c.h.b16 %v71
  %v429 = vunpack.c.l.b16 %v72
  %v430 = vunpack.c.h.b16 %v72
  %v431 = vunpack.c.l.b16 %v73
  %v432 = vunpack.c.h.b16 %v73
  %v433 = vunpack.c.l.b16 %v74
  %v434 = vunpack.c.l.b16 %v75
  %v435 = vunpack.c.h.b16 %v75
  %v436 = vunpack.c.l.b16 %v76
  %v437 = vunpack.c.h.b16 %v76
  %v438 = vunpack.c.l.b16 %v77
  %v439 = vunpack.c.h.b16 %v77
  %v440 = vunpack.c.l.b16 %v78
  %v441 = vunpack.c.h.b16 %v78
  %v442 = vunpack.c.l.b16 %v79
  %v443 = vunpack.c.l.b16 %v80
  %v444 = vunpack.c.h.b16 %v80
  %v445 = vunpack.c.l.b16 %v81
  %v446 = vunpack.c.h.b16 %v81
  %v447 = vunpack.c.l.b16 %v82
  %v448 = vunpack.c.h.b16 %v82
  %v449 = vunpack.c.l.b16 %v83
  %v450 = vunpack.c.h.b16 %v83
  %v451 = vunpack.c.l.b16 %v84
  %v452 = vunpack.c.l.b16 %v85
  %v453 = vunpack.c.h.b16 %v85
  %v454 = vunpack.c.l.b16 %v86
  %v455 = vunpack.c.h.b16 %v86
  %v456 = vunpack.c.l.b16 %v87
  %v457 = vunpack.c.h.b16 %v87
  %v458 = vunpack.c.l.b16 %v88
  %v459 = vunpack.c.h.b16 %v88
  %v460 = vunpack.c.l.b16 %v89
  %v461 = vunpack.c.l.b16 %v90
  %v462 = vunpack.c.h.b16 %v90
  %v463 = vunpack.c.l.b16 %v91
  %v464 = vunpack.c.h.b16 %v91
  %v465 = vunpack.c.l.b16 %v92
  %v466 = vunpack.c.h.b16 %v92
  %v467 = vunpack.c.l.b16 %v93
  %v468 = vunpack.c.h.b16 %v93
  %v469 = vunpack.c.l.b16 %v94
  %v470 = vpack.c.b16 %v335, %v326
  %v471 = vpack.c.b16 %v336, %v327
  %v472 = vpack.c.b16 %v337, %v328
  %v473 = vpack.c.b16 %v338, %v329
  %v474 = vpack.c.b16 %v339, %v330
  %v475 = vpack.c.b16 %v340, %v331
  %v476 = vpack.c.b16 %v341, %v332
  %v477 = vpack.c.b16 %v342, %v333
  %v478 = vpack.c.b16 %v343, %v334
  %v479 = vpack.c.b16 %v353, %v344
  %v480 = vpack.c.b16 %v354, %v345
  %v481 = vpack.c.b16 %v355, %v346
  %v482 = vpack.c.b16 %v356, %v347
  %v483 = vpack.c.b16 %v357, %v348
  %v484 = vpack.c.b16 %v358, %v349
  %v485 = vpack.c.b16 %v359, %v350
  %v486 = vpack.c.b16 %v360, %v351
  %v487 = vpack.c.b16 %v361, %v352
  %v488 = vpack.c.b16 %v371, %v362
  %v489 = vpack.c.b16 %v372, %v363
  %v490 = vpack.c.b16 %v373, %v364
  %v491 = vpack.c.b16 %v374, %v365
  %v492 = vpack.c.b16 %v375, %v366
  %v493 = vpack.c.b16 %v376, %v367
  %v494 = vpack.c.b16 %v377, %v368
  %v495 = vpack.c.b16 %v378, %v369
  %v496 = vpack.c.b16 %v379, %v370
  %v497 = vpack.c.b16 %v389, %v380
  %v498 = vpack.c.b16 %v390, %v381
  %v499 = vpack.c.b16 %v391, %v382
  %v500 = vpack.c.b16 %v392, %v383
  %v501 = vpack.c.b16 %v393, %v384
  %v502 = vpack.c.b16 %v394, %v385
  %v503 = vpack.c.b16 %v395, %v386
  %v504 = vpack.c.b16 %v396, %v387
  %v505 = vpack.c.b16 %v397, %v388
  %v506 = vpack.c.b16 %v407, %v398
  %v507 = vpack.c.b16 %v408, %v399
  %v508 = vpack.c.b16 %v409, %v400
  %v509 = vpack.c.b16 %v410, %v401
  %v510 = vpack.c.b16 %v411, %v402
  %v511 = vpack.c.b16 %v412, %v403
  %v512 = vpack.c.b16 %v413, %v404
  %v513 = vpack.c.b16 %v414, %v405
  %v514 = vpack.c.b16 %v415, %v406
  %v515 = vpack.c.b16 %v425, %v416
  %v516 = vpack.c.b16 %v426, %v417
  %v517 = vpack.c.b16 %v427, %v418
  %v518 = vpack.c.b16 %v428, %v419
  %v519 = vpack.c.b16 %v429, %v420
  %v520 = vpack.c.b16 %v430, %v421
  %v521 = vpack.c.b16 %v431, %v422
  %v522 = vpack.c.b16 %v432, %v423
  %v523 = vpack.c.b16 %v433, %v424
  %v524 = vpack.c.b16 %v443, %v434
  %v525 = vpack.c.b16 %v444, %v435
  %v526 = vpack.c.b16 %v445, %v436
  %v527 = vpack.c.b16 %v446, %v437
  %v528 = vpack.c.b16 %v447, %v438
  %v529 = vpack.c.b16 %v448, %v439
  %v530 = vpack.c.b16 %v449, %v440
  %v531 = vpack.c.b16 %v450, %v441
  %v532 = vpack.c.b16 %v451, %v442
  %v533 = vpack.c.b16 %v461, %v452
  %v534 = vpack.c.b16 %v462, %v453
  %v535 = vpack.c.b16 %v463, %v454
  %v536 = vpack.c.b16 %v464, %v455
  %v537 = vpack.c.b16 %v465, %v456
  %v538 = vpack.c.b16 %v466, %v457
  %v539 = vpack.c.b16 %v467, %v458
  %v540 = vpack.c.b16 %v468, %v459
  %v541 = vpack.c.b16 %v469, %v460
  %v758 = vunpack.c.l.b16 %v95
  %v759 = vunpack.c.l.b16 %v96
  %v760 = vunpack.c.l.b16 %v97
  %v761 = vunpack.c.l.b16 %v98
  %v762 = vunpack.c.l.b16 %v99
  %v763 = vunpack.c.l.b16 %v100
  %v764 = vunpack.c.l.b16 %v101
  %v765 = vunpack.c.l.b16 %v102
  %v766 = vunpack.c.l.b16 %v103
  %v767 = vunpack.c.l.b16 %v104
  %v768 = vunpack.c.l.b16 %v105
  %v769 = vunpack.c.l.b16 %v106
  %v770 = vunpack.c.l.b16 %v107
  %v771 = vunpack.c.l.b16 %v108
  %v772 = vunpack.c.l.b16 %v109
  %v773 = vunpack.c.l.b16 %v110
  %v774 = vunpack.c.l.b16 %v111
  %v775 = vunpack.c.l.b16 %v112
  %v776 = vunpack.c.l.b16 %v113
  %v777 = vunpack.c.l.b16 %v114
  %v778 = vunpack.c.l.b16 %v115
  %v779 = vunpack.c.l.b16 %v116
  %v780 = vunpack.c.l.b16 %v117
  %v781 = vunpack.c.l.b16 %v118
  %v782 = vunpack.c.l.b16 %v119
  %v783 = vunpack.c.l.b16 %v120
  %v784 = vunpack.c.l.b16 %v121
  %v785 = vunpack.c.l.b16 %v122
  %v786 = vunpack.c.l.b16 %v123
  %v787 = vunpack.c.l.b16 %v124
  %v788 = vunpack.c.l.b16 %v125
  %v789 = vunpack.c.l.b16 %v126
  %v790 = vunpack.c.l.b16 %v127
  %v791 = vunpack.c.l.b16 %v128
  %v792 = vunpack.c.l.b16 %v129
  %v793 = vunpack.c.l.b16 %v130
  %v794 = vunpack.c.l.b16 %v131
  %v795 = vunpack.c.l.b16 %v132
  %v796 = vunpack.c.l.b16 %v133
  %v797 = vunpack.c.l.b16 %v134
  %v798 = vunpack.c.l.b16 %v135
  %v799 = vunpack.c.l.b16 %v136
  %v800 = vunpack.c.l.b16 %v137
  %v801 = vunpack.c.l.b16 %v138
  %v802 = vunpack.c.l.b16 %v139
  %v803 = vunpack.c.l.b16 %v140
  %v804 = vunpack.c.l.b16 %v141
  %v805 = vunpack.c.l.b16 %v142
  %v806 = vunpack.c.l.b16 %v143
  %v807 = vunpack.c.l.b16 %v144
  %v808 = vunpack.c.l.b16 %v145
  %v809 = vunpack.c.l.b16 %v146
  %v810 = vunpack.c.l.b16 %v147
  %v811 = vunpack.c.l.b16 %v148
  %v812 = vunpack.c.l.b16 %v149
  %v813 = vunpack.c.l.b16 %v150
  %v814 = vunpack.c.l.b16 %v151
  %v815 = vunpack.c.l.b16 %v152
  %v816 = vunpack.c.l.b16 %v153
  %v817 = vunpack.c.l.b16 %v154
  %v818 = vunpack.c.l.b16 %v155
  %v819 = vunpack.c.l.b16 %v156
  %v820 = vunpack.c.l.b16 %v157
  %v821 = vunpack.c.l.b16 %v158
  %v822 = vunpack.c.l.b16 %v159
  %v823 = vunpack.c.l.b16 %v160
  %v824 = vunpack.c.l.b16 %v161
  %v825 = vunpack.c.l.b16 %v162
  %v826 = vunpack.c.l.b16 %v163
  %v827 = vunpack.c.l.b16 %v164
  %v828 = vunpack.c.l.b16 %v165
  %v829 = vunpack.c.l.b16 %v166
  %v830 = vunpack.c.l.b16 %v167
  %v831 = vunpack.c.l.b16 %v168
  %v832 = vunpack.c.l.b16 %v169
  %v833 = vunpack.c.l.b16 %v170
  %v834 = vunpack.c.l.b16 %v171
  %v835 = vunpack.c.l.b16 %v172
  %v836 = vunpack.c.l.b16 %v173
  %v837 = vunpack.c.l.b16 %v174
  %v838 = vunpack.c.l.b16 %v175
  %v839 = vunpack.c.l.b16 %v176
  %v840 = vunpack.c.l.b16 %v177
  %v841 = vunpack.c.l.b16 %v178
  %v842 = vunpack.c.l.b16 %v179
  %v843 = vunpack.c.l.b16 %v180
  %v844 = vunpack.c.l.b16 %v181
  %v845 = vunpack.c.l.b16 %v182
  %v846 = vunpack.c.l.b16 %v183
  %v847 = vunpack.c.l.b16 %v184
  %v848 = vunpack.c.l.b16 %v185
  %v849 = vunpack.c.l.b16 %v186
  %v850 = vunpack.c.l.b16 %v187
  %v851 = vunpack.c.l.b16 %v188
  %v852 = vunpack.c.l.b16 %v189
  %v853 = vunpack.c.l.b16 %v190
  %v854 = vunpack.c.l.b16 %v191
  %v855 = vunpack.c.l.b16 %v192
  %v856 = vunpack.c.l.b16 %v193
  %v857 = vunpack.c.l.b16 %v194
  %v858 = vunpack.c.l.b16 %v195
  %v859 = vunpack.c.l.b16 %v196
  %v860 = vunpack.c.l.b16 %v197
  %v861 = vunpack.c.l.b16 %v198
  %v862 = vunpack.c.l.b16 %v199
  %v863 = vunpack.c.l.b16 %v200
  %v864 = vunpack.c.l.b16 %v201
  %v865 = vunpack.c.l.b16 %v202
  %v866 = vunpack.c.l.b16 %v203
  %v867 = vunpack.c.l.b16 %v204
  %v868 = vunpack.c.l.b16 %v205
  %v869 = vunpack.c.l.b16 %v206
  %v870 = vunpack.c.l.b16 %v207
  %v871 = vunpack.c.l.b16 %v208
  %v872 = vunpack.c.l.b16 %v209
  %v873 = vunpack.c.l.b16 %v210
  %v874 = vunpack.c.l.b16 %v211
  %v875 = vunpack.c.l.b16 %v212
  %v876 = vunpack.c.l.b16 %v213
  %v877 = vunpack.c.l.b16 %v214
  %v878 = vunpack.c.l.b16 %v215
  %v879 = vunpack.c.l.b16 %v216
  %v880 = vunpack.c.l.b16 %v217
  %v881 = vunpack.c.l.b16 %v218
  %v882 = vunpack.c.l.b16 %v219
  %v883 = vunpack.c.l.b16 %v220
  %v884 = vunpack.c.l.b16 %v221
  %v885 = vunpack.c.l.b16 %v222
  %v886 = vunpack.c.l.b16 %v223
  %v887 = vunpack.c.l.b16 %v224
  %v888 = vunpack.c.l.b16 %v225
  %v889 = vunpack.c.l.b16 %v226
  %v890 = vunpack.c.l.b16 %v227
  %v891 = vunpack.c.l.b16 %v228
  %v892 = vunpack.c.l.b16 %v229
  %v893 = vunpack.c.l.b16 %v230
  %v894 = vunpack.c.l.b16 %v231
  %v895 = vunpack.c.l.b16 %v232
  %v896 = vunpack.c.l.b16 %v233
  %v897 = vunpack.c.l.b16 %v234
  %v898 = vunpack.c.l.b16 %v235
  %v899 = vunpack.c.l.b16 %v236
  %v900 = vunpack.c.l.b16 %v237
  %v901 = vunpack.c.l.b16 %v238
  %v902 = vpack.c.b16 %v759, %v758
  %v903 = vpack.c.b16 %v761, %v760
  %v904 = vpack.c.b16 %v763, %v762
  %v905 = vpack.c.b16 %v765, %v764
  %v906 = vpack.c.b16 %v767, %v766
  %v907 = vpack.c.b16 %v769, %v768
  %v908 = vpack.c.b16 %v771, %v770
  %v909 = vpack.c.b16 %v773, %v772
  %v910 = vpack.c.b16 %v775, %v774
  %v911 = vpack.c.b16 %v777, %v776
  %v912 = vpack.c.b16 %v779, %v778
  %v913 = vpack.c.b16 %v781, %v780
  %v914 = vpack.c.b16 %v783, %v782
  %v915 = vpack.c.b16 %v785, %v784
  %v916 = vpack.c.b16 %v787, %v786
  %v917 = vpack.c.b16 %v789, %v788
  %v918 = vpack.c.b16 %v791, %v790
  %v919 = vpack.c.b16 %v793, %v792
  %v920 = vpack.c.b16 %v795, %v794
  %v921 = vpack.c.b16 %v797, %v796
  %v922 = vpack.c.b16 %v799, %v798
  %v923 = vpack.c.b16 %v801, %v800
  %v924 = vpack.c.b16 %v803, %v802
  %v925 = vpack.c.b16 %v805, %v804
  %v926 = vpack.c.b16 %v807, %v806
  %v927 = vpack.c.b16 %v809, %v808
  %v928 = vpack.c.b16 %v811, %v810
  %v929 = vpack.c.b16 %v813, %v812
  %v930 = vpack.c.b16 %v815, %v814
  %v931 = vpack.c.b16 %v817, %v816
  %v932 = vpack.c.b16 %v819, %v818
  %v933 = vpack.c.b16 %v821, %v820
  %v934 = vpack.c.b16 %v823, %v822
  %v935 = vpack.c.b16 %v825, %v824
  %v936 = vpack.c.b16 %v827, %v826
  %v937 = vpack.c.b16 %v829, %v828
  %v938 = vpack.c.b16 %v831, %v830
  %v939 = vpack.c.b16 %v833, %v832
  %v940 = vpack.c.b16 %v835, %v834
  %v941 = vpack.c.b16 %v837, %v836
  %v942 = vpack.c.b16 %v839, %v838
  %v943 = vpack.c.b16 %v841, %v840
  %v944 = vpack.c.b16 %v843, %v842
  %v945 = vpack.c.b16 %v845, %v844
  %v946 = vpack.c.b16 %v847, %v846
  %v947 = vpack.c.b16 %v849, %v848
  %v948 = vpack.c.b16 %v851, %v850
  %v949 = vpack.c.b16 %v853, %v852
  %v950 = vpack.c.b16 %v855, %v854
  %v951 = vpack.c.b16 %v857, %v856
  %v952 = vpack.c.b16 %v859, %v858
  %v953 = vpack.c.b16 %v861, %v860
  %v954 = vpack.c.b16 %v863, %v862
  %v955 = vpack.c.b16 %v865, %v864
  %v956 = vpack.c.b16 %v867, %v866
  %v957 = vpack.c.b16 %v869, %v868
  %v958 = vpack.c.b16 %v871, %v870
  %v959 = vpack.c.b16 %v873, %v872
  %v960 = vpack.c.b16 %v875, %v874
  %v961 = vpack.c.b16 %v877, %v876
  %v962 = vpack.c.b16 %v879, %v878
  %v963 = vpack.c.b16 %v881, %v880
  %v964 = vpack.c.b16 %v883, %v882
  %v965 = vpack.c.b16 %v885, %v884
  %v966 = vpack.c.b16 %v887, %v886
  %v967 = vpack.c.b16 %v889, %v888
  %v968 = vpack.c.b16 %v891, %v890
  %v969 = vpack.c.b16 %v893, %v892
  %v970 = vpack.c.b16 %v895, %v894
  %v971 = vpack.c.b16 %v897, %v896
  %v972 = vpack.c.b16 %v899, %v898
  %v973 = vpack.c.b16 %v901, %v900
  %1046 = vmatprep.subr.bf16.mxu0 0
  %1047 = vmatpush1.bf16.msra.mxu0 %v909
  %1048 = vmatprep.subr.bf16.mxu0 0
  %1049 = vmatpush1.bf16.msra.mxu0 %v908
  %1050 = vmatprep.subr.bf16.mxu0 0
  %1051 = vmatpush1.bf16.msra.mxu0 %v907
  %1052 = vmatprep.subr.bf16.mxu0 0
  %1053 = vmatpush1.bf16.msra.mxu0 %v906
  %1054 = vmatprep.subr.bf16.mxu0 0
  %1055 = vmatpush1.bf16.msra.mxu0 %v905
  %1056 = vmatprep.subr.bf16.mxu0 0
  %1057 = vmatpush1.bf16.msra.mxu0 %v904
  %1058 = vmatprep.subr.bf16.mxu0 0
  %1059 = vmatpush1.bf16.msra.mxu0 %v903
  %1060 = vmatprep.subr.bf16.mxu0 0
  %1061 = vmatpush1.bf16.msra.mxu0 %v902
  %1062 = vmatprep.subr.bf16.mxu0 0
  %1063 = vmatpush2.bf16.msra.mxu0 %v917
  %1064 = vmatprep.subr.bf16.mxu0 0
  %1065 = vmatpush2.bf16.msra.mxu0 %v916
  %1066 = vmatprep.subr.bf16.mxu0 0
  %1067 = vmatpush2.bf16.msra.mxu0 %v915
  %1068 = vmatprep.subr.bf16.mxu0 0
  %1069 = vmatpush2.bf16.msra.mxu0 %v914
  %1070 = vmatprep.subr.bf16.mxu0 0
  %1071 = vmatpush2.bf16.msra.mxu0 %v913
  %1072 = vmatprep.subr.bf16.mxu0 0
  %1073 = vmatpush2.bf16.msra.mxu0 %v912
  %1074 = vmatprep.subr.bf16.mxu0 0
  %1075 = vmatpush2.bf16.msra.mxu0 %v911
  %1076 = vmatprep.subr.bf16.mxu0 0
  %1077 = vmatpush2.bf16.msra.mxu0 %v910
  %1078 = vmatprep.mubr.bf16.mxu0 %v471
  %1079 = vmatmul.mubr.bf16.gmra.mxu0 %v470
  %v1080 = vpop.f32.mrf.mxu0
  %v1081 = vadd.f32 %v244, %v1080
  %v1082 = vpop.f32.mrf.mxu0
  %v1083 = vpop.f32.mrf.mxu0
  %v1084 = vadd.f32 %v244, %v1083
  %v1085 = vpop.f32.mrf.mxu0
  %1086 = vmatprep.mubr.bf16.mxu0 %v480
  %1087 = vmatmul.mubr.bf16.gmra.mxu0 %v479
  %v1088 = vpop.f32.mrf.mxu0
  %v1089 = vadd.f32 %v244, %v1088
  %v1090 = vpop.f32.mrf.mxu0
  %v1091 = vpop.f32.mrf.mxu0
  %v1092 = vadd.f32 %v244, %v1091
  %v1093 = vpop.f32.mrf.mxu0
  %1094 = vmatprep.mubr.bf16.mxu0 %v489
  %1095 = vmatmul.mubr.bf16.gmra.mxu0 %v488
  %v1096 = vpop.f32.mrf.mxu0
  %v1097 = vadd.f32 %v244, %v1096
  %v1098 = vpop.f32.mrf.mxu0
  %v1099 = vpop.f32.mrf.mxu0
  %v1100 = vadd.f32 %v244, %v1099
  %v1101 = vpop.f32.mrf.mxu0
  %1102 = vmatprep.mubr.bf16.mxu0 %v498
  %1103 = vmatmul.mubr.bf16.gmra.mxu0 %v497
  %v1104 = vpop.f32.mrf.mxu0
  %v1105 = vadd.f32 %v244, %v1104
  %v1106 = vpop.f32.mrf.mxu0
  %v1107 = vpop.f32.mrf.mxu0
  %v1108 = vadd.f32 %v244, %v1107
  %v1109 = vpop.f32.mrf.mxu0
  %1110 = vmatprep.mubr.bf16.mxu0 %v507
  %1111 = vmatmul.mubr.bf16.gmra.mxu0 %v506
  %v1112 = vpop.f32.mrf.mxu0
  %v1113 = vadd.f32 %v244, %v1112
  %v1114 = vpop.f32.mrf.mxu0
  %v1115 = vpop.f32.mrf.mxu0
  %v1116 = vadd.f32 %v244, %v1115
  %v1117 = vpop.f32.mrf.mxu0
  %1118 = vmatprep.mubr.bf16.mxu0 %v516
  %1119 = vmatmul.mubr.bf16.gmra.mxu0 %v515
  %v1120 = vpop.f32.mrf.mxu0
  %v1121 = vadd.f32 %v244, %v1120
  %v1122 = vpop.f32.mrf.mxu0
  %v1123 = vpop.f32.mrf.mxu0
  %v1124 = vadd.f32 %v244, %v1123
  %v1125 = vpop.f32.mrf.mxu0
  %1126 = vmatprep.mubr.bf16.mxu0 %v525
  %1127 = vmatmul.mubr.bf16.gmra.mxu0 %v524
  %v1128 = vpop.f32.mrf.mxu0
  %v1129 = vadd.f32 %v244, %v1128
  %v1130 = vpop.f32.mrf.mxu0
  %v1131 = vpop.f32.mrf.mxu0
  %v1132 = vadd.f32 %v244, %v1131
  %v1133 = vpop.f32.mrf.mxu0
  %1134 = vmatprep.mubr.bf16.mxu0 %v534
  %1135 = vmatmul.mubr.bf16.gmra.mxu0 %v533
  %v1136 = vpop.f32.mrf.mxu0
  %v1137 = vadd.f32 %v244, %v1136
  %v1138 = vpop.f32.mrf.mxu0
  %v1139 = vpop.f32.mrf.mxu0
  %v1140 = vadd.f32 %v244, %v1139
  %v1141 = vpop.f32.mrf.mxu0
  %1142 = vdwg.mxu0
  %1143 = vmatprep.subr.bf16.mxu0 0
  %1144 = vmatpush1.bf16.msra.mxu0 %v925
  %1145 = vmatprep.subr.bf16.mxu0 0
  %1146 = vmatpush1.bf16.msra.mxu0 %v924
  %1147 = vmatprep.subr.bf16.mxu0 0
  %1148 = vmatpush1.bf16.msra.mxu0 %v923
  %1149 = vmatprep.subr.bf16.mxu0 0
  %1150 = vmatpush1.bf16.msra.mxu0 %v922
  %1151 = vmatprep.subr.bf16.mxu0 0
  %1152 = vmatpush1.bf16.msra.mxu0 %v921
  %1153 = vmatprep.subr.bf16.mxu0 0
  %1154 = vmatpush1.bf16.msra.mxu0 %v920
  %1155 = vmatprep.subr.bf16.mxu0 0
  %1156 = vmatpush1.bf16.msra.mxu0 %v919
  %1157 = vmatprep.subr.bf16.mxu0 0
  %1158 = vmatpush1.bf16.msra.mxu0 %v918
  %1159 = vmatprep.subr.bf16.mxu0 0
  %1160 = vmatpush2.bf16.msra.mxu0 %v933
  %1161 = vmatprep.subr.bf16.mxu0 0
  %1162 = vmatpush2.bf16.msra.mxu0 %v932
  %1163 = vmatprep.subr.bf16.mxu0 0
  %1164 = vmatpush2.bf16.msra.mxu0 %v931
  %1165 = vmatprep.subr.bf16.mxu0 0
  %1166 = vmatpush2.bf16.msra.mxu0 %v930
  %1167 = vmatprep.subr.bf16.mxu0 0
  %1168 = vmatpush2.bf16.msra.mxu0 %v929
  %1169 = vmatprep.subr.bf16.mxu0 0
  %1170 = vmatpush2.bf16.msra.mxu0 %v928
  %1171 = vmatprep.subr.bf16.mxu0 0
  %1172 = vmatpush2.bf16.msra.mxu0 %v927
  %1173 = vmatprep.subr.bf16.mxu0 0
  %1174 = vmatpush2.bf16.msra.mxu0 %v926
  %1175 = vmatprep.mubr.bf16.mxu0 %v473
  %1176 = vmatmul.mubr.bf16.gmra.mxu0 %v472
  %v1177 = vpop.f32.mrf.mxu0
  %v1178 = vadd.f32 %v1081, %v1177
  %v1179 = vpop.f32.mrf.mxu0
  %v1180 = vpop.f32.mrf.mxu0
  %v1181 = vadd.f32 %v1084, %v1180
  %v1182 = vpop.f32.mrf.mxu0
  %1183 = vmatprep.mubr.bf16.mxu0 %v482
  %1184 = vmatmul.mubr.bf16.gmra.mxu0 %v481
  %v1185 = vpop.f32.mrf.mxu0
  %v1186 = vadd.f32 %v1089, %v1185
  %v1187 = vpop.f32.mrf.mxu0
  %v1188 = vpop.f32.mrf.mxu0
  %v1189 = vadd.f32 %v1092, %v1188
  %v1190 = vpop.f32.mrf.mxu0
  %1191 = vmatprep.mubr.bf16.mxu0 %v491
  %1192 = vmatmul.mubr.bf16.gmra.mxu0 %v490
  %v1193 = vpop.f32.mrf.mxu0
  %v1194 = vadd.f32 %v1097, %v1193
  %v1195 = vpop.f32.mrf.mxu0
  %v1196 = vpop.f32.mrf.mxu0
  %v1197 = vadd.f32 %v1100, %v1196
  %v1198 = vpop.f32.mrf.mxu0
  %1199 = vmatprep.mubr.bf16.mxu0 %v500
  %1200 = vmatmul.mubr.bf16.gmra.mxu0 %v499
  %v1201 = vpop.f32.mrf.mxu0
  %v1202 = vadd.f32 %v1105, %v1201
  %v1203 = vpop.f32.mrf.mxu0
  %v1204 = vpop.f32.mrf.mxu0
  %v1205 = vadd.f32 %v1108, %v1204
  %v1206 = vpop.f32.mrf.mxu0
  %1207 = vmatprep.mubr.bf16.mxu0 %v509
  %1208 = vmatmul.mubr.bf16.gmra.mxu0 %v508
  %v1209 = vpop.f32.mrf.mxu0
  %v1210 = vadd.f32 %v1113, %v1209
  %v1211 = vpop.f32.mrf.mxu0
  %v1212 = vpop.f32.mrf.mxu0
  %v1213 = vadd.f32 %v1116, %v1212
  %v1214 = vpop.f32.mrf.mxu0
  %1215 = vmatprep.mubr.bf16.mxu0 %v518
  %1216 = vmatmul.mubr.bf16.gmra.mxu0 %v517
  %v1217 = vpop.f32.mrf.mxu0
  %v1218 = vadd.f32 %v1121, %v1217
  %v1219 = vpop.f32.mrf.mxu0
  %v1220 = vpop.f32.mrf.mxu0
  %v1221 = vadd.f32 %v1124, %v1220
  %v1222 = vpop.f32.mrf.mxu0
  %1223 = vmatprep.mubr.bf16.mxu0 %v527
  %1224 = vmatmul.mubr.bf16.gmra.mxu0 %v526
  %v1225 = vpop.f32.mrf.mxu0
  %v1226 = vadd.f32 %v1129, %v1225
  %v1227 = vpop.f32.mrf.mxu0
  %v1228 = vpop.f32.mrf.mxu0
  %v1229 = vadd.f32 %v1132, %v1228
  %v1230 = vpop.f32.mrf.mxu0
  %1231 = vmatprep.mubr.bf16.mxu0 %v536
  %1232 = vmatmul.mubr.bf16.gmra.mxu0 %v535
  %v1233 = vpop.f32.mrf.mxu0
  %v1234 = vadd.f32 %v1137, %v1233
  %v1235 = vpop.f32.mrf.mxu0
  %v1236 = vpop.f32.mrf.mxu0
  %v1237 = vadd.f32 %v1140, %v1236
  %v1238 = vpop.f32.mrf.mxu0
  %1239 = vdwg.mxu0
  %1240 = vmatprep.subr.bf16.mxu0 0
  %1241 = vmatpush1.bf16.msra.mxu0 %v941
  %1242 = vmatprep.subr.bf16.mxu0 0
  %1243 = vmatpush1.bf16.msra.mxu0 %v940
  %1244 = vmatprep.subr.bf16.mxu0 0
  %1245 = vmatpush1.bf16.msra.mxu0 %v939
  %1246 = vmatprep.subr.bf16.mxu0 0
  %1247 = vmatpush1.bf16.msra.mxu0 %v938
  %1248 = vmatprep.subr.bf16.mxu0 0
  %1249 = vmatpush1.bf16.msra.mxu0 %v937
  %1250 = vmatprep.subr.bf16.mxu0 0
  %1251 = vmatpush1.bf16.msra.mxu0 %v936
  %1252 = vmatprep.subr.bf16.mxu0 0
  %1253 = vmatpush1.bf16.msra.mxu0 %v935
  %1254 = vmatprep.subr.bf16.mxu0 0
  %1255 = vmatpush1.bf16.msra.mxu0 %v934
  %1256 = vmatprep.subr.bf16.mxu0 0
  %1257 = vmatpush2.bf16.msra.mxu0 %v949
  %1258 = vmatprep.subr.bf16.mxu0 0
  %1259 = vmatpush2.bf16.msra.mxu0 %v948
  %1260 = vmatprep.subr.bf16.mxu0 0
  %1261 = vmatpush2.bf16.msra.mxu0 %v947
  %1262 = vmatprep.subr.bf16.mxu0 0
  %1263 = vmatpush2.bf16.msra.mxu0 %v946
  %1264 = vmatprep.subr.bf16.mxu0 0
  %1265 = vmatpush2.bf16.msra.mxu0 %v945
  %1266 = vmatprep.subr.bf16.mxu0 0
  %1267 = vmatpush2.bf16.msra.mxu0 %v944
  %1268 = vmatprep.subr.bf16.mxu0 0
  %1269 = vmatpush2.bf16.msra.mxu0 %v943
  %1270 = vmatprep.subr.bf16.mxu0 0
  %1271 = vmatpush2.bf16.msra.mxu0 %v942
  %1272 = vmatprep.mubr.bf16.mxu0 %v475
  %1273 = vmatmul.mubr.bf16.gmra.mxu0 %v474
  %v1274 = vpop.f32.mrf.mxu0
  %v1275 = vadd.f32 %v1178, %v1274
  %v1276 = vpop.f32.mrf.mxu0
  %v1277 = vpop.f32.mrf.mxu0
  %v1278 = vadd.f32 %v1181, %v1277
  %v1279 = vpop.f32.mrf.mxu0
  %1280 = vmatprep.mubr.bf16.mxu0 %v484
  %1281 = vmatmul.mubr.bf16.gmra.mxu0 %v483
  %v1282 = vpop.f32.mrf.mxu0
  %v1283 = vadd.f32 %v1186, %v1282
  %v1284 = vpop.f32.mrf.mxu0
  %v1285 = vpop.f32.mrf.mxu0
  %v1286 = vadd.f32 %v1189, %v1285
  %v1287 = vpop.f32.mrf.mxu0
  %1288 = vmatprep.mubr.bf16.mxu0 %v493
  %1289 = vmatmul.mubr.bf16.gmra.mxu0 %v492
  %v1290 = vpop.f32.mrf.mxu0
  %v1291 = vadd.f32 %v1194, %v1290
  %v1292 = vpop.f32.mrf.mxu0
  %v1293 = vpop.f32.mrf.mxu0
  %v1294 = vadd.f32 %v1197, %v1293
  %v1295 = vpop.f32.mrf.mxu0
  %1296 = vmatprep.mubr.bf16.mxu0 %v502
  %1297 = vmatmul.mubr.bf16.gmra.mxu0 %v501
  %v1298 = vpop.f32.mrf.mxu0
  %v1299 = vadd.f32 %v1202, %v1298
  %v1300 = vpop.f32.mrf.mxu0
  %v1301 = vpop.f32.mrf.mxu0
  %v1302 = vadd.f32 %v1205, %v1301
  %v1303 = vpop.f32.mrf.mxu0
  %1304 = vmatprep.mubr.bf16.mxu0 %v511
  %1305 = vmatmul.mubr.bf16.gmra.mxu0 %v510
  %v1306 = vpop.f32.mrf.mxu0
  %v1307 = vadd.f32 %v1210, %v1306
  %v1308 = vpop.f32.mrf.mxu0
  %v1309 = vpop.f32.mrf.mxu0
  %v1310 = vadd.f32 %v1213, %v1309
  %v1311 = vpop.f32.mrf.mxu0
  %1312 = vmatprep.mubr.bf16.mxu0 %v520
  %1313 = vmatmul.mubr.bf16.gmra.mxu0 %v519
  %v1314 = vpop.f32.mrf.mxu0
  %v1315 = vadd.f32 %v1218, %v1314
  %v1316 = vpop.f32.mrf.mxu0
  %v1317 = vpop.f32.mrf.mxu0
  %v1318 = vadd.f32 %v1221, %v1317
  %v1319 = vpop.f32.mrf.mxu0
  %1320 = vmatprep.mubr.bf16.mxu0 %v529
  %1321 = vmatmul.mubr.bf16.gmra.mxu0 %v528
  %v1322 = vpop.f32.mrf.mxu0
  %v1323 = vadd.f32 %v1226, %v1322
  %v1324 = vpop.f32.mrf.mxu0
  %v1325 = vpop.f32.mrf.mxu0
  %v1326 = vadd.f32 %v1229, %v1325
  %v1327 = vpop.f32.mrf.mxu0
  %1328 = vmatprep.mubr.bf16.mxu0 %v538
  %1329 = vmatmul.mubr.bf16.gmra.mxu0 %v537
  %v1330 = vpop.f32.mrf.mxu0
  %v1331 = vadd.f32 %v1234, %v1330
  %v1332 = vpop.f32.mrf.mxu0
  %v1333 = vpop.f32.mrf.mxu0
  %v1334 = vadd.f32 %v1237, %v1333
  %v1335 = vpop.f32.mrf.mxu0
  %1336 = vdwg.mxu0
  %1337 = vmatprep.subr.bf16.mxu0 0
  %1338 = vmatpush1.bf16.msra.mxu0 %v957
  %1339 = vmatprep.subr.bf16.mxu0 0
  %1340 = vmatpush1.bf16.msra.mxu0 %v956
  %1341 = vmatprep.subr.bf16.mxu0 0
  %1342 = vmatpush1.bf16.msra.mxu0 %v955
  %1343 = vmatprep.subr.bf16.mxu0 0
  %1344 = vmatpush1.bf16.msra.mxu0 %v954
  %1345 = vmatprep.subr.bf16.mxu0 0
  %1346 = vmatpush1.bf16.msra.mxu0 %v953
  %1347 = vmatprep.subr.bf16.mxu0 0
  %1348 = vmatpush1.bf16.msra.mxu0 %v952
  %1349 = vmatprep.subr.bf16.mxu0 0
  %1350 = vmatpush1.bf16.msra.mxu0 %v951
  %1351 = vmatprep.subr.bf16.mxu0 0
  %1352 = vmatpush1.bf16.msra.mxu0 %v950
  %1353 = vmatprep.subr.bf16.mxu0 0
  %1354 = vmatpush2.bf16.msra.mxu0 %v965
  %1355 = vmatprep.subr.bf16.mxu0 0
  %1356 = vmatpush2.bf16.msra.mxu0 %v964
  %1357 = vmatprep.subr.bf16.mxu0 0
  %1358 = vmatpush2.bf16.msra.mxu0 %v963
  %1359 = vmatprep.subr.bf16.mxu0 0
  %1360 = vmatpush2.bf16.msra.mxu0 %v962
  %1361 = vmatprep.subr.bf16.mxu0 0
  %1362 = vmatpush2.bf16.msra.mxu0 %v961
  %1363 = vmatprep.subr.bf16.mxu0 0
  %1364 = vmatpush2.bf16.msra.mxu0 %v960
  %1365 = vmatprep.subr.bf16.mxu0 0
  %1366 = vmatpush2.bf16.msra.mxu0 %v959
  %1367 = vmatprep.subr.bf16.mxu0 0
  %1368 = vmatpush2.bf16.msra.mxu0 %v958
  %1369 = vmatprep.mubr.bf16.mxu0 %v477
  %1370 = vmatmul.mubr.bf16.gmra.mxu0 %v476
  %v1371 = vpop.f32.mrf.mxu0
  %v1372 = vadd.f32 %v1275, %v1371
  %v1373 = vpop.f32.mrf.mxu0
  %v1374 = vpop.f32.mrf.mxu0
  %v1375 = vadd.f32 %v1278, %v1374
  %v1376 = vpop.f32.mrf.mxu0
  %1377 = vmatprep.mubr.bf16.mxu0 %v486
  %1378 = vmatmul.mubr.bf16.gmra.mxu0 %v485
  %v1379 = vpop.f32.mrf.mxu0
  %v1380 = vadd.f32 %v1283, %v1379
  %v1381 = vpop.f32.mrf.mxu0
  %v1382 = vpop.f32.mrf.mxu0
  %v1383 = vadd.f32 %v1286, %v1382
  %v1384 = vpop.f32.mrf.mxu0
  %1385 = vmatprep.mubr.bf16.mxu0 %v495
  %1386 = vmatmul.mubr.bf16.gmra.mxu0 %v494
  %v1387 = vpop.f32.mrf.mxu0
  %v1388 = vadd.f32 %v1291, %v1387
  %v1389 = vpop.f32.mrf.mxu0
  %v1390 = vpop.f32.mrf.mxu0
  %v1391 = vadd.f32 %v1294, %v1390
  %v1392 = vpop.f32.mrf.mxu0
  %1393 = vmatprep.mubr.bf16.mxu0 %v504
  %1394 = vmatmul.mubr.bf16.gmra.mxu0 %v503
  %v1395 = vpop.f32.mrf.mxu0
  %v1396 = vadd.f32 %v1299, %v1395
  %v1397 = vpop.f32.mrf.mxu0
  %v1398 = vpop.f32.mrf.mxu0
  %v1399 = vadd.f32 %v1302, %v1398
  %v1400 = vpop.f32.mrf.mxu0
  %1401 = vmatprep.mubr.bf16.mxu0 %v513
  %1402 = vmatmul.mubr.bf16.gmra.mxu0 %v512
  %v1403 = vpop.f32.mrf.mxu0
  %v1404 = vadd.f32 %v1307, %v1403
  %v1405 = vpop.f32.mrf.mxu0
  %v1406 = vpop.f32.mrf.mxu0
  %v1407 = vadd.f32 %v1310, %v1406
  %v1408 = vpop.f32.mrf.mxu0
  %1409 = vmatprep.mubr.bf16.mxu0 %v522
  %1410 = vmatmul.mubr.bf16.gmra.mxu0 %v521
  %v1411 = vpop.f32.mrf.mxu0
  %v1412 = vadd.f32 %v1315, %v1411
  %v1413 = vpop.f32.mrf.mxu0
  %v1414 = vpop.f32.mrf.mxu0
  %v1415 = vadd.f32 %v1318, %v1414
  %v1416 = vpop.f32.mrf.mxu0
  %1417 = vmatprep.mubr.bf16.mxu0 %v531
  %1418 = vmatmul.mubr.bf16.gmra.mxu0 %v530
  %v1419 = vpop.f32.mrf.mxu0
  %v1420 = vadd.f32 %v1323, %v1419
  %v1421 = vpop.f32.mrf.mxu0
  %v1422 = vpop.f32.mrf.mxu0
  %v1423 = vadd.f32 %v1326, %v1422
  %v1424 = vpop.f32.mrf.mxu0
  %1425 = vmatprep.mubr.bf16.mxu0 %v540
  %1426 = vmatmul.mubr.bf16.gmra.mxu0 %v539
  %v1427 = vpop.f32.mrf.mxu0
  %v1428 = vadd.f32 %v1331, %v1427
  %v1429 = vpop.f32.mrf.mxu0
  %v1430 = vpop.f32.mrf.mxu0
  %v1431 = vadd.f32 %v1334, %v1430
  %v1432 = vpop.f32.mrf.mxu0
  %1433 = vdwg.mxu0
  %1434 = vmatprep.subr.bf16.mxu0 0
  %1435 = vmatpush1.bf16.msra.mxu0 %v973
  %1436 = vmatprep.subr.bf16.mxu0 0
  %1437 = vmatpush1.bf16.msra.mxu0 %v972
  %1438 = vmatprep.subr.bf16.mxu0 0
  %1439 = vmatpush1.bf16.msra.mxu0 %v971
  %1440 = vmatprep.subr.bf16.mxu0 0
  %1441 = vmatpush1.bf16.msra.mxu0 %v970
  %1442 = vmatprep.subr.bf16.mxu0 0
  %1443 = vmatpush1.bf16.msra.mxu0 %v969
  %1444 = vmatprep.subr.bf16.mxu0 0
  %1445 = vmatpush1.bf16.msra.mxu0 %v968
  %1446 = vmatprep.subr.bf16.mxu0 0
  %1447 = vmatpush1.bf16.msra.mxu0 %v967
  %1448 = vmatprep.subr.bf16.mxu0 0
  %1449 = vmatpush1.bf16.msra.mxu0 %v966
  %1450 = vmatprep.subr.bf16.mxu0 0
  %1451 = vmatpush2.bf16.msra.mxu0 0
  %1452 = vmatprep.subr.bf16.mxu0 0
  %1453 = vmatpush2.bf16.msra.mxu0 0
  %1454 = vmatprep.subr.bf16.mxu0 0
  %1455 = vmatpush2.bf16.msra.mxu0 0
  %1456 = vmatprep.subr.bf16.mxu0 0
  %1457 = vmatpush2.bf16.msra.mxu0 0
  %1458 = vmatprep.subr.bf16.mxu0 0
  %1459 = vmatpush2.bf16.msra.mxu0 0
  %1460 = vmatprep.subr.bf16.mxu0 0
  %1461 = vmatpush2.bf16.msra.mxu0 0
  %1462 = vmatprep.subr.bf16.mxu0 0
  %1463 = vmatpush2.bf16.msra.mxu0 0
  %1464 = vmatprep.subr.bf16.mxu0 0
  %1465 = vmatpush2.bf16.msra.mxu0 0
  %1466 = vmatprep.mubr.bf16.mxu0 0
  %1467 = vmatmul.mubr.bf16.gmra.mxu0 %v478
  %v1468 = vpop.f32.mrf.mxu0
  %v1469 = vadd.f32 %v1372, %v1468
  %v1470 = vpop.f32.mrf.mxu0
  %v1471 = vpop.f32.mrf.mxu0
  %v1472 = vadd.f32 %v1375, %v1471
  %v1473 = vpop.f32.mrf.mxu0
  %1474 = vmatprep.mubr.bf16.mxu0 0
  %1475 = vmatmul.mubr.bf16.gmra.mxu0 %v487
  %v1476 = vpop.f32.mrf.mxu0
  %v1477 = vadd.f32 %v1380, %v1476
  %v1478 = vpop.f32.mrf.mxu0
  %v1479 = vpop.f32.mrf.mxu0
  %v1480 = vadd.f32 %v1383, %v1479
  %v1481 = vpop.f32.mrf.mxu0
  %1482 = vmatprep.mubr.bf16.mxu0 0
  %1483 = vmatmul.mubr.bf16.gmra.mxu0 %v496
  %v1484 = vpop.f32.mrf.mxu0
  %v1485 = vadd.f32 %v1388, %v1484
  %v1486 = vpop.f32.mrf.mxu0
  %v1487 = vpop.f32.mrf.mxu0
  %v1488 = vadd.f32 %v1391, %v1487
  %v1489 = vpop.f32.mrf.mxu0
  %1490 = vmatprep.mubr.bf16.mxu0 0
  %1491 = vmatmul.mubr.bf16.gmra.mxu0 %v505
  %v1492 = vpop.f32.mrf.mxu0
  %v1493 = vadd.f32 %v1396, %v1492
  %v1494 = vpop.f32.mrf.mxu0
  %v1495 = vpop.f32.mrf.mxu0
  %v1496 = vadd.f32 %v1399, %v1495
  %v1497 = vpop.f32.mrf.mxu0
  %1498 = vmatprep.mubr.bf16.mxu0 0
  %1499 = vmatmul.mubr.bf16.gmra.mxu0 %v514
  %v1500 = vpop.f32.mrf.mxu0
  %v1501 = vadd.f32 %v1404, %v1500
  %v1502 = vpop.f32.mrf.mxu0
  %v1503 = vpop.f32.mrf.mxu0
  %v1504 = vadd.f32 %v1407, %v1503
  %v1505 = vpop.f32.mrf.mxu0
  %1506 = vmatprep.mubr.bf16.mxu0 0
  %1507 = vmatmul.mubr.bf16.gmra.mxu0 %v523
  %v1508 = vpop.f32.mrf.mxu0
  %v1509 = vadd.f32 %v1412, %v1508
  %v1510 = vpop.f32.mrf.mxu0
  %v1511 = vpop.f32.mrf.mxu0
  %v1512 = vadd.f32 %v1415, %v1511
  %v1513 = vpop.f32.mrf.mxu0
  %1514 = vmatprep.mubr.bf16.mxu0 0
  %1515 = vmatmul.mubr.bf16.gmra.mxu0 %v532
  %v1516 = vpop.f32.mrf.mxu0
  %v1517 = vadd.f32 %v1420, %v1516
  %v1518 = vpop.f32.mrf.mxu0
  %v1519 = vpop.f32.mrf.mxu0
  %v1520 = vadd.f32 %v1423, %v1519
  %v1521 = vpop.f32.mrf.mxu0
  %1522 = vmatprep.mubr.bf16.mxu0 0
  %1523 = vmatmul.mubr.bf16.gmra.mxu0 %v541
  %v1524 = vpop.f32.mrf.mxu0
  %v1525 = vadd.f32 %v1428, %v1524
  %v1526 = vpop.f32.mrf.mxu0
  %v1527 = vpop.f32.mrf.mxu0
  %v1528 = vadd.f32 %v1431, %v1527
  %v1529 = vpop.f32.mrf.mxu0
  %1530 = vdwg.mxu0
  %v1531 = vxor.u32 %v1469, 2147483648
  %v1532 = vxor.u32 %v1472, 2147483648
  %v1533 = vxor.u32 %v1477, 2147483648
  %v1534 = vxor.u32 %v1480, 2147483648
  %v1535 = vxor.u32 %v1485, 2147483648
  %v1536 = vxor.u32 %v1488, 2147483648
  %v1537 = vxor.u32 %v1493, 2147483648
  %v1538 = vxor.u32 %v1496, 2147483648
  %v1539 = vxor.u32 %v1501, 2147483648
  %v1540 = vxor.u32 %v1504, 2147483648
  %v1541 = vxor.u32 %v1509, 2147483648
  %v1542 = vxor.u32 %v1512, 2147483648
  %v1543 = vxor.u32 %v1517, 2147483648
  %v1544 = vxor.u32 %v1520, 2147483648
  %v1545 = vxor.u32 %v1525, 2147483648
  %v1546 = vxor.u32 %v1528, 2147483648
  %v1547 = vmul.f32 %v1531, 1.442695
  %v1548 = vpow.pop %v1547
  %v1549 = vmul.f32 %v1532, 1.442695
  %v1550 = vpow.pop %v1549
  %v1551 = vmul.f32 %v1533, 1.442695
  %v1552 = vpow.pop %v1551
  %v1553 = vmul.f32 %v1534, 1.442695
  %v1554 = vpow.pop %v1553
  %v1555 = vmul.f32 %v1535, 1.442695
  %v1556 = vpow.pop %v1555
  %v1557 = vmul.f32 %v1536, 1.442695
  %v1558 = vpow.pop %v1557
  %v1559 = vmul.f32 %v1537, 1.442695
  %v1560 = vpow.pop %v1559
  %v1561 = vmul.f32 %v1538, 1.442695
  %v1562 = vpow.pop %v1561
  %v1563 = vmul.f32 %v1539, 1.442695
  %v1564 = vpow.pop %v1563
  %v1565 = vmul.f32 %v1540, 1.442695
  %v1566 = vpow.pop %v1565
  %v1567 = vmul.f32 %v1541, 1.442695
  %v1568 = vpow.pop %v1567
  %v1569 = vmul.f32 %v1542, 1.442695
  %v1570 = vpow.pop %v1569
  %v1571 = vmul.f32 %v1543, 1.442695
  %v1572 = vpow.pop %v1571
  %v1573 = vmul.f32 %v1544, 1.442695
  %v1574 = vpow.pop %v1573
  %v1575 = vmul.f32 %v1545, 1.442695
  %v1576 = vpow.pop %v1575
  %v1577 = vmul.f32 %v1546, 1.442695
  %v1578 = vpow.pop %v1577
  %v1579 = vadd.f32 %v1548, 1.0
  %v1580 = vadd.f32 %v1550, 1.0
  %v1581 = vadd.f32 %v1552, 1.0
  %v1582 = vadd.f32 %v1554, 1.0
  %v1583 = vadd.f32 %v1556, 1.0
  %v1584 = vadd.f32 %v1558, 1.0
  %v1585 = vadd.f32 %v1560, 1.0
  %v1586 = vadd.f32 %v1562, 1.0
  %v1587 = vadd.f32 %v1564, 1.0
  %v1588 = vadd.f32 %v1566, 1.0
  %v1589 = vadd.f32 %v1568, 1.0
  %v1590 = vadd.f32 %v1570, 1.0
  %v1591 = vadd.f32 %v1572, 1.0
  %v1592 = vadd.f32 %v1574, 1.0
  %v1593 = vadd.f32 %v1576, 1.0
  %v1594 = vadd.f32 %v1578, 1.0
  %v1595 = vrcp.pop %v1579
  %v1596 = vmul.f32 1.0, %v1595
  %v1597 = vrcp.pop %v1580
  %v1598 = vmul.f32 1.0, %v1597
  %v1599 = vrcp.pop %v1581
  %v1600 = vmul.f32 1.0, %v1599
  %v1601 = vrcp.pop %v1582
  %v1602 = vmul.f32 1.0, %v1601
  %v1603 = vrcp.pop %v1583
  %v1604 = vmul.f32 1.0, %v1603
  %v1605 = vrcp.pop %v1584
  %v1606 = vmul.f32 1.0, %v1605
  %v1607 = vrcp.pop %v1585
  %v1608 = vmul.f32 1.0, %v1607
  %v1609 = vrcp.pop %v1586
  %v1610 = vmul.f32 1.0, %v1609
  %v1611 = vrcp.pop %v1587
  %v1612 = vmul.f32 1.0, %v1611
  %v1613 = vrcp.pop %v1588
  %v1614 = vmul.f32 1.0, %v1613
  %v1615 = vrcp.pop %v1589
  %v1616 = vmul.f32 1.0, %v1615
  %v1617 = vrcp.pop %v1590
  %v1618 = vmul.f32 1.0, %v1617
  %v1619 = vrcp.pop %v1591
  %v1620 = vmul.f32 1.0, %v1619
  %v1621 = vrcp.pop %v1592
  %v1622 = vmul.f32 1.0, %v1621
  %v1623 = vrcp.pop %v1593
  %v1624 = vmul.f32 1.0, %v1623
  %v1625 = vrcp.pop %v1594
  %v1626 = vmul.f32 1.0, %v1625
  %v1627 = vmul.f32 %v1469, %v1596
  %v1628 = vmul.f32 %v1472, %v1598
  %v1629 = vmul.f32 %v1477, %v1600
  %v1630 = vmul.f32 %v1480, %v1602
  %v1631 = vmul.f32 %v1485, %v1604
  %v1632 = vmul.f32 %v1488, %v1606
  %v1633 = vmul.f32 %v1493, %v1608
  %v1634 = vmul.f32 %v1496, %v1610
  %v1635 = vmul.f32 %v1501, %v1612
  %v1636 = vmul.f32 %v1504, %v1614
  %v1637 = vmul.f32 %v1509, %v1616
  %v1638 = vmul.f32 %v1512, %v1618
  %v1639 = vmul.f32 %v1517, %v1620
  %v1640 = vmul.f32 %v1520, %v1622
  %v1641 = vmul.f32 %v1525, %v1624
  %v1642 = vmul.f32 %v1528, %v1626
  %v1643 = vpack.c.bf16 %v1628, %v1627
  %v1644 = vpack.c.bf16 %v1630, %v1629
  %v1645 = vpack.c.bf16 %v1632, %v1631
  %v1646 = vpack.c.bf16 %v1634, %v1633
  %v1647 = vpack.c.bf16 %v1636, %v1635
  %v1648 = vpack.c.bf16 %v1638, %v1637
  %v1649 = vpack.c.bf16 %v1640, %v1639
  %v1650 = vpack.c.bf16 %v1642, %v1641
  %v1659 = vunpack.c.l.b16 %v1643
  %v1660 = vunpack.c.h.b16 %v1643
  %v1661 = vunpack.c.l.b16 %v1644
  %v1662 = vunpack.c.h.b16 %v1644
  %v1663 = vunpack.c.l.b16 %v1645
  %v1664 = vunpack.c.h.b16 %v1645
  %v1665 = vunpack.c.l.b16 %v1646
  %v1666 = vunpack.c.h.b16 %v1646
  %v1667 = vunpack.c.l.b16 %v1647
  %v1668 = vunpack.c.h.b16 %v1647
  %v1669 = vunpack.c.l.b16 %v1648
  %v1670 = vunpack.c.h.b16 %v1648
  %v1671 = vunpack.c.l.b16 %v1649
  %v1672 = vunpack.c.h.b16 %v1649
  %v1673 = vunpack.c.l.b16 %v1650
  %v1674 = vunpack.c.h.b16 %v1650
  %v1675 = vpack.c.b16 %v1659, %v1659
  %v1676 = vpack.c.b16 %v1660, %v1660
  %v1677 = vpack.c.b16 %v1661, %v1661
  %v1678 = vpack.c.b16 %v1662, %v1662
  %v1679 = vpack.c.b16 %v1663, %v1663
  %v1680 = vpack.c.b16 %v1664, %v1664
  %v1681 = vpack.c.b16 %v1665, %v1665
  %v1682 = vpack.c.b16 %v1666, %v1666
  %v1683 = vpack.c.b16 %v1667, %v1667
  %v1684 = vpack.c.b16 %v1668, %v1668
  %v1685 = vpack.c.b16 %v1669, %v1669
  %v1686 = vpack.c.b16 %v1670, %v1670
  %v1687 = vpack.c.b16 %v1671, %v1671
  %v1688 = vpack.c.b16 %v1672, %v1672
  %v1689 = vpack.c.b16 %v1673, %v1673
  %v1690 = vpack.c.b16 %v1674, %v1674
  %1707 = vst [vmem:[%s3] sm:$0xf] %v1675
  %1708 = vst [vmem:[%s3 + $0x4] sm:$0xf] %v1676
  %1709 = vst [vmem:[%s3 + $0x8] sm:$0xf] %v1677
  %1710 = vst [vmem:[%s3 + $0xc] sm:$0xf] %v1678
  %1711 = vst [vmem:[%s3 + $0x10] sm:$0xf] %v1679
  %1712 = vst [vmem:[%s3 + $0x14] sm:$0xf] %v1680
  %1713 = vst [vmem:[%s3 + $0x18] sm:$0xf] %v1681
  %1714 = vst [vmem:[%s3 + $0x1c] sm:$0xf] %v1682
  %1715 = vst [vmem:[%s3 + $0x20] sm:$0xf] %v1683
  %1716 = vst [vmem:[%s3 + $0x24] sm:$0xf] %v1684
  %1717 = vst [vmem:[%s3 + $0x28] sm:$0xf] %v1685
  %1718 = vst [vmem:[%s3 + $0x2c] sm:$0xf] %v1686
  %1719 = vst [vmem:[%s3 + $0x30] sm:$0xf] %v1687
  %1720 = vst [vmem:[%s3 + $0x34] sm:$0xf] %v1688
  %1721 = vst [vmem:[%s3 + $0x38] sm:$0xf] %v1689
  %1722 = vst [vmem:[%s3 + $0x3c] sm:$0xf] %v1690
  // Predicated region
  $region14: #{_lambda_.5} parent=0 // pred_check
    _
  $region15: #{_lambda_.5} parent=0 // pred_check_branch
    %1724 = sbr.rel (0) target = $region17
  $region16: #{_lambda_.5} parent=0 // pred_region
    _
  $region17: #{_lambda_.5} parent=0 // pred_fallthru
    _
  // Predicated region
  $region18: #{_lambda_.5} parent=0 // pred_check
    _
  $region19: #{_lambda_.5} parent=0 // pred_check_branch
    %1726 = sbr.rel (0) target = $region21
  $region20: #{_lambda_.5} parent=0 // pred_region
    _
  $region21: #{_lambda_.5} parent=0 // pred_fallthru
    _

// kernel: _lambda_.6
$region0: #{_lambda_.6}
  #allocation0 [shape = 'u32[]', space=smem, size = 0x4, offset = 0x4, fixed_abs, tag = 'smem constant byte address 0x4 - core index']
  #allocation1 [shape = 'u32[144,128]{1,0:T(1,128)}', space=vmem, size = 0x12000, scoped, tag = 'internal scratch']
  %s0 = inlined_call_operand.vmem [shape: bf16[32,1152], index: 0, kind: input, shape index: {}]
  %s1 = inlined_call_operand.vmem [shape: bf16[1152,256], index: 1, kind: input, shape index: {}]
  %s2 = inlined_call_operand.vmem [shape: f32[1,256], index: 2, kind: input, shape index: {}]
  %s3 = inlined_call_operand.vmem [shape: bf16[32,256], index: 3, kind: output, shape index: {}]
  %s4 = sld [smem:[#allocation0]]
  $region22: #{_lambda_.6} parent=0
    _
  %s6 = ssub.s32 1, %s4
  %s7 = scalar_select 0, %s6, %s4
  // Predicated region
  $region2: #{_lambda_.6} parent=0 // pred_check
    _
  $region3: #{_lambda_.6} parent=0 // pred_check_branch
    %9 = sbr.rel (0) target = $region5
  $region4: #{_lambda_.6} parent=0 // pred_region
    _
  $region5: #{_lambda_.6} parent=0 // pred_fallthru
    _
  // Predicated region
  $region6: #{_lambda_.6} parent=0 // pred_check
    _
  $region7: #{_lambda_.6} parent=0 // pred_check_branch
    %11 = sbr.rel (0) target = $region9
  $region8: #{_lambda_.6} parent=0 // pred_region
    _
  $region9: #{_lambda_.6} parent=0 // pred_fallthru
    _
  // Predicated region
  $region10: #{_lambda_.6} parent=0 // pred_check
    _
  $region11: #{_lambda_.6} parent=0 // pred_check_branch
    %13 = sbr.rel (0) target = $region13
  $region12: #{_lambda_.6} parent=0 // pred_region
    _
  $region13: #{_lambda_.6} parent=0 // pred_fallthru
    _
  %v15 = vld [vmem:[%s0] sm:$0xff]
  %v16 = vld [vmem:[%s0 + $0x8] sm:$0xff]
  %v17 = vld [vmem:[%s0 + $0x10] sm:$0xff]
  %v18 = vld [vmem:[%s0 + $0x18] sm:$0xff]
  %v19 = vld [vmem:[%s0 + $0x20] sm:$0xf]
  %v20 = vld [vmem:[%s0 + $0x24] sm:$0xff]
  %v21 = vld [vmem:[%s0 + $0x2c] sm:$0xff]
  %v22 = vld [vmem:[%s0 + $0x34] sm:$0xff]
  %v23 = vld [vmem:[%s0 + $0x3c] sm:$0xff]
  %v24 = vld [vmem:[%s0 + $0x44] sm:$0xf]
  %v25 = vld [vmem:[%s0 + $0x48] sm:$0xff]
  %v26 = vld [vmem:[%s0 + $0x50] sm:$0xff]
  %v27 = vld [vmem:[%s0 + $0x58] sm:$0xff]
  %v28 = vld [vmem:[%s0 + $0x60] sm:$0xff]
  %v29 = vld [vmem:[%s0 + $0x68] sm:$0xf]
  %v30 = vld [vmem:[%s0 + $0x6c] sm:$0xff]
  %v31 = vld [vmem:[%s0 + $0x74] sm:$0xff]
  %v32 = vld [vmem:[%s0 + $0x7c] sm:$0xff]
  %v33 = vld [vmem:[%s0 + $0x84] sm:$0xff]
  %v34 = vld [vmem:[%s0 + $0x8c] sm:$0xf]
  %v35 = vld [vmem:[%s1] sm:$0xff]
  %v36 = vld [vmem:[%s1 + $0x8] sm:$0xff]
  %v37 = vld [vmem:[%s1 + $0x10] sm:$0xff]
  %v38 = vld [vmem:[%s1 + $0x18] sm:$0xff]
  %v39 = vld [vmem:[%s1 + $0x20] sm:$0xff]
  %v40 = vld [vmem:[%s1 + $0x28] sm:$0xff]
  %v41 = vld [vmem:[%s1 + $0x30] sm:$0xff]
  %v42 = vld [vmem:[%s1 + $0x38] sm:$0xff]
  %v43 = vld [vmem:[%s1 + $0x40] sm:$0xff]
  %v44 = vld [vmem:[%s1 + $0x48] sm:$0xff]
  %v45 = vld [vmem:[%s1 + $0x50] sm:$0xff]
  %v46 = vld [vmem:[%s1 + $0x58] sm:$0xff]
  %v47 = vld [vmem:[%s1 + $0x60] sm:$0xff]
  %v48 = vld [vmem:[%s1 + $0x68] sm:$0xff]
  %v49 = vld [vmem:[%s1 + $0x70] sm:$0xff]
  %v50 = vld [vmem:[%s1 + $0x78] sm:$0xff]
  %v51 = vld [vmem:[%s1 + $0x80] sm:$0xff]
  %v52 = vld [vmem:[%s1 + $0x88] sm:$0xff]
  %v53 = vld [vmem:[%s1 + $0x90] sm:$0xff]
  %v54 = vld [vmem:[%s1 + $0x98] sm:$0xff]
  %v55 = vld [vmem:[%s1 + $0xa0] sm:$0xff]
  %v56 = vld [vmem:[%s1 + $0xa8] sm:$0xff]
  %v57 = vld [vmem:[%s1 + $0xb0] sm:$0xff]
  %v58 = vld [vmem:[%s1 + $0xb8] sm:$0xff]
  %v59 = vld [vmem:[%s1 + $0xc0] sm:$0xff]
  %v60 = vld [vmem:[%s1 + $0xc8] sm:$0xff]
  %v61 = vld [vmem:[%s1 + $0xd0] sm:$0xff]
  %v62 = vld [vmem:[%s1 + $0xd8] sm:$0xff]
  %v63 = vld [vmem:[%s1 + $0xe0] sm:$0xff]
  %v64 = vld [vmem:[%s1 + $0xe8] sm:$0xff]
  %v65 = vld [vmem:[%s1 + $0xf0] sm:$0xff]
  %v66 = vld [vmem:[%s1 + $0xf8] sm:$0xff]
  %v67 = vld [vmem:[%s1 + $0x100] sm:$0xff]
  %v68 = vld [vmem:[%s1 + $0x108] sm:$0xff]
  %v69 = vld [vmem:[%s1 + $0x110] sm:$0xff]
  %v70 = vld [vmem:[%s1 + $0x118] sm:$0xff]
  %v71 = vld [vmem:[%s1 + $0x120] sm:$0xff]
  %v72 = vld [vmem:[%s1 + $0x128] sm:$0xff]
  %v73 = vld [vmem:[%s1 + $0x130] sm:$0xff]
  %v74 = vld [vmem:[%s1 + $0x138] sm:$0xff]
  %v75 = vld [vmem:[%s1 + $0x140] sm:$0xff]
  %v76 = vld [vmem:[%s1 + $0x148] sm:$0xff]
  %v77 = vld [vmem:[%s1 + $0x150] sm:$0xff]
  %v78 = vld [vmem:[%s1 + $0x158] sm:$0xff]
  %v79 = vld [vmem:[%s1 + $0x160] sm:$0xff]
  %v80 = vld [vmem:[%s1 + $0x168] sm:$0xff]
  %v81 = vld [vmem:[%s1 + $0x170] sm:$0xff]
  %v82 = vld [vmem:[%s1 + $0x178] sm:$0xff]
  %v83 = vld [vmem:[%s1 + $0x180] sm:$0xff]
  %v84 = vld [vmem:[%s1 + $0x188] sm:$0xff]
  %v85 = vld [vmem:[%s1 + $0x190] sm:$0xff]
  %v86 = vld [vmem:[%s1 + $0x198] sm:$0xff]
  %v87 = vld [vmem:[%s1 + $0x1a0] sm:$0xff]
  %v88 = vld [vmem:[%s1 + $0x1a8] sm:$0xff]
  %v89 = vld [vmem:[%s1 + $0x1b0] sm:$0xff]
  %v90 = vld [vmem:[%s1 + $0x1b8] sm:$0xff]
  %v91 = vld [vmem:[%s1 + $0x1c0] sm:$0xff]
  %v92 = vld [vmem:[%s1 + $0x1c8] sm:$0xff]
  %v93 = vld [vmem:[%s1 + $0x1d0] sm:$0xff]
  %v94 = vld [vmem:[%s1 + $0x1d8] sm:$0xff]
  %v95 = vld [vmem:[%s1 + $0x1e0] sm:$0xff]
  %v96 = vld [vmem:[%s1 + $0x1e8] sm:$0xff]
  %v97 = vld [vmem:[%s1 + $0x1f0] sm:$0xff]
  %v98 = vld [vmem:[%s1 + $0x1f8] sm:$0xff]
  %v99 = vld [vmem:[%s1 + $0x200] sm:$0xff]
  %v100 = vld [vmem:[%s1 + $0x208] sm:$0xff]
  %v101 = vld [vmem:[%s1 + $0x210] sm:$0xff]
  %v102 = vld [vmem:[%s1 + $0x218] sm:$0xff]
  %v103 = vld [vmem:[%s1 + $0x220] sm:$0xff]
  %v104 = vld [vmem:[%s1 + $0x228] sm:$0xff]
  %v105 = vld [vmem:[%s1 + $0x230] sm:$0xff]
  %v106 = vld [vmem:[%s1 + $0x238] sm:$0xff]
  %v107 = vld [vmem:[%s1 + $0x240] sm:$0xff]
  %v108 = vld [vmem:[%s1 + $0x248] sm:$0xff]
  %v109 = vld [vmem:[%s1 + $0x250] sm:$0xff]
  %v110 = vld [vmem:[%s1 + $0x258] sm:$0xff]
  %v111 = vld [vmem:[%s1 + $0x260] sm:$0xff]
  %v112 = vld [vmem:[%s1 + $0x268] sm:$0xff]
  %v113 = vld [vmem:[%s1 + $0x270] sm:$0xff]
  %v114 = vld [vmem:[%s1 + $0x278] sm:$0xff]
  %v115 = vld [vmem:[%s1 + $0x280] sm:$0xff]
  %v116 = vld [vmem:[%s1 + $0x288] sm:$0xff]
  %v117 = vld [vmem:[%s1 + $0x290] sm:$0xff]
  %v118 = vld [vmem:[%s1 + $0x298] sm:$0xff]
  %v119 = vld [vmem:[%s1 + $0x2a0] sm:$0xff]
  %v120 = vld [vmem:[%s1 + $0x2a8] sm:$0xff]
  %v121 = vld [vmem:[%s1 + $0x2b0] sm:$0xff]
  %v122 = vld [vmem:[%s1 + $0x2b8] sm:$0xff]
  %v123 = vld [vmem:[%s1 + $0x2c0] sm:$0xff]
  %v124 = vld [vmem:[%s1 + $0x2c8] sm:$0xff]
  %v125 = vld [vmem:[%s1 + $0x2d0] sm:$0xff]
  %v126 = vld [vmem:[%s1 + $0x2d8] sm:$0xff]
  %v127 = vld [vmem:[%s1 + $0x2e0] sm:$0xff]
  %v128 = vld [vmem:[%s1 + $0x2e8] sm:$0xff]
  %v129 = vld [vmem:[%s1 + $0x2f0] sm:$0xff]
  %v130 = vld [vmem:[%s1 + $0x2f8] sm:$0xff]
  %v131 = vld [vmem:[%s1 + $0x300] sm:$0xff]
  %v132 = vld [vmem:[%s1 + $0x308] sm:$0xff]
  %v133 = vld [vmem:[%s1 + $0x310] sm:$0xff]
  %v134 = vld [vmem:[%s1 + $0x318] sm:$0xff]
  %v135 = vld [vmem:[%s1 + $0x320] sm:$0xff]
  %v136 = vld [vmem:[%s1 + $0x328] sm:$0xff]
  %v137 = vld [vmem:[%s1 + $0x330] sm:$0xff]
  %v138 = vld [vmem:[%s1 + $0x338] sm:$0xff]
  %v139 = vld [vmem:[%s1 + $0x340] sm:$0xff]
  %v140 = vld [vmem:[%s1 + $0x348] sm:$0xff]
  %v141 = vld [vmem:[%s1 + $0x350] sm:$0xff]
  %v142 = vld [vmem:[%s1 + $0x358] sm:$0xff]
  %v143 = vld [vmem:[%s1 + $0x360] sm:$0xff]
  %v144 = vld [vmem:[%s1 + $0x368] sm:$0xff]
  %v145 = vld [vmem:[%s1 + $0x370] sm:$0xff]
  %v146 = vld [vmem:[%s1 + $0x378] sm:$0xff]
  %v147 = vld [vmem:[%s1 + $0x380] sm:$0xff]
  %v148 = vld [vmem:[%s1 + $0x388] sm:$0xff]
  %v149 = vld [vmem:[%s1 + $0x390] sm:$0xff]
  %v150 = vld [vmem:[%s1 + $0x398] sm:$0xff]
  %v151 = vld [vmem:[%s1 + $0x3a0] sm:$0xff]
  %v152 = vld [vmem:[%s1 + $0x3a8] sm:$0xff]
  %v153 = vld [vmem:[%s1 + $0x3b0] sm:$0xff]
  %v154 = vld [vmem:[%s1 + $0x3b8] sm:$0xff]
  %v155 = vld [vmem:[%s1 + $0x3c0] sm:$0xff]
  %v156 = vld [vmem:[%s1 + $0x3c8] sm:$0xff]
  %v157 = vld [vmem:[%s1 + $0x3d0] sm:$0xff]
  %v158 = vld [vmem:[%s1 + $0x3d8] sm:$0xff]
  %v159 = vld [vmem:[%s1 + $0x3e0] sm:$0xff]
  %v160 = vld [vmem:[%s1 + $0x3e8] sm:$0xff]
  %v161 = vld [vmem:[%s1 + $0x3f0] sm:$0xff]
  %v162 = vld [vmem:[%s1 + $0x3f8] sm:$0xff]
  %v163 = vld [vmem:[%s1 + $0x400] sm:$0xff]
  %v164 = vld [vmem:[%s1 + $0x408] sm:$0xff]
  %v165 = vld [vmem:[%s1 + $0x410] sm:$0xff]
  %v166 = vld [vmem:[%s1 + $0x418] sm:$0xff]
  %v167 = vld [vmem:[%s1 + $0x420] sm:$0xff]
  %v168 = vld [vmem:[%s1 + $0x428] sm:$0xff]
  %v169 = vld [vmem:[%s1 + $0x430] sm:$0xff]
  %v170 = vld [vmem:[%s1 + $0x438] sm:$0xff]
  %v171 = vld [vmem:[%s1 + $0x440] sm:$0xff]
  %v172 = vld [vmem:[%s1 + $0x448] sm:$0xff]
  %v173 = vld [vmem:[%s1 + $0x450] sm:$0xff]
  %v174 = vld [vmem:[%s1 + $0x458] sm:$0xff]
  %v175 = vld [vmem:[%s1 + $0x460] sm:$0xff]
  %v176 = vld [vmem:[%s1 + $0x468] sm:$0xff]
  %v177 = vld [vmem:[%s1 + $0x470] sm:$0xff]
  %v178 = vld [vmem:[%s1 + $0x478] sm:$0xff]
  %v179 = vld [vmem:[%s2] sm:$0x3]
  %v181 = vlaneseq
  %v182 = vshrl.u32 %v181, 7
  %v183 = vsub.s32 0, %v182
  %v184 = vrot.slane %v179, %v183
  %v185 = vlaneseq
  %v186 = vshrl.u32 %v185, 7
  %v187 = vsub.s32 1, %v186
  %v188 = vrot.slane %v179, %v187
  %v211 = vunpack.c.l.b16 %v15
  %v212 = vunpack.c.h.b16 %v15
  %v213 = vunpack.c.l.b16 %v16
  %v214 = vunpack.c.h.b16 %v16
  %v215 = vunpack.c.l.b16 %v17
  %v216 = vunpack.c.h.b16 %v17
  %v217 = vunpack.c.l.b16 %v18
  %v218 = vunpack.c.h.b16 %v18
  %v219 = vunpack.c.l.b16 %v19
  %v220 = vunpack.c.l.b16 %v20
  %v221 = vunpack.c.h.b16 %v20
  %v222 = vunpack.c.l.b16 %v21
  %v223 = vunpack.c.h.b16 %v21
  %v224 = vunpack.c.l.b16 %v22
  %v225 = vunpack.c.h.b16 %v22
  %v226 = vunpack.c.l.b16 %v23
  %v227 = vunpack.c.h.b16 %v23
  %v228 = vunpack.c.l.b16 %v24
  %v229 = vunpack.c.l.b16 %v25
  %v230 = vunpack.c.h.b16 %v25
  %v231 = vunpack.c.l.b16 %v26
  %v232 = vunpack.c.h.b16 %v26
  %v233 = vunpack.c.l.b16 %v27
  %v234 = vunpack.c.h.b16 %v27
  %v235 = vunpack.c.l.b16 %v28
  %v236 = vunpack.c.h.b16 %v28
  %v237 = vunpack.c.l.b16 %v29
  %v238 = vunpack.c.l.b16 %v30
  %v239 = vunpack.c.h.b16 %v30
  %v240 = vunpack.c.l.b16 %v31
  %v241 = vunpack.c.h.b16 %v31
  %v242 = vunpack.c.l.b16 %v32
  %v243 = vunpack.c.h.b16 %v32
  %v244 = vunpack.c.l.b16 %v33
  %v245 = vunpack.c.h.b16 %v33
  %v246 = vunpack.c.l.b16 %v34
  %v247 = vpack.c.b16 %v220, %v211
  %v248 = vpack.c.b16 %v221, %v212
  %v249 = vpack.c.b16 %v222, %v213
  %v250 = vpack.c.b16 %v223, %v214
  %v251 = vpack.c.b16 %v224, %v215
  %v252 = vpack.c.b16 %v225, %v216
  %v253 = vpack.c.b16 %v226, %v217
  %v254 = vpack.c.b16 %v227, %v218
  %v255 = vpack.c.b16 %v228, %v219
  %v256 = vpack.c.b16 %v238, %v229
  %v257 = vpack.c.b16 %v239, %v230
  %v258 = vpack.c.b16 %v240, %v231
  %v259 = vpack.c.b16 %v241, %v232
  %v260 = vpack.c.b16 %v242, %v233
  %v261 = vpack.c.b16 %v243, %v234
  %v262 = vpack.c.b16 %v244, %v235
  %v263 = vpack.c.b16 %v245, %v236
  %v264 = vpack.c.b16 %v246, %v237
  %v427 = vunpack.c.l.b16 %v35
  %v428 = vunpack.c.h.b16 %v35
  %v429 = vunpack.c.l.b16 %v36
  %v430 = vunpack.c.h.b16 %v36
  %v431 = vunpack.c.l.b16 %v37
  %v432 = vunpack.c.h.b16 %v37
  %v433 = vunpack.c.l.b16 %v38
  %v434 = vunpack.c.h.b16 %v38
  %v435 = vunpack.c.l.b16 %v39
  %v436 = vunpack.c.h.b16 %v39
  %v437 = vunpack.c.l.b16 %v40
  %v438 = vunpack.c.h.b16 %v40
  %v439 = vunpack.c.l.b16 %v41
  %v440 = vunpack.c.h.b16 %v41
  %v441 = vunpack.c.l.b16 %v42
  %v442 = vunpack.c.h.b16 %v42
  %v443 = vunpack.c.l.b16 %v43
  %v444 = vunpack.c.h.b16 %v43
  %v445 = vunpack.c.l.b16 %v44
  %v446 = vunpack.c.h.b16 %v44
  %v447 = vunpack.c.l.b16 %v45
  %v448 = vunpack.c.h.b16 %v45
  %v449 = vunpack.c.l.b16 %v46
  %v450 = vunpack.c.h.b16 %v46
  %v451 = vunpack.c.l.b16 %v47
  %v452 = vunpack.c.h.b16 %v47
  %v453 = vunpack.c.l.b16 %v48
  %v454 = vunpack.c.h.b16 %v48
  %v455 = vunpack.c.l.b16 %v49
  %v456 = vunpack.c.h.b16 %v49
  %v457 = vunpack.c.l.b16 %v50
  %v458 = vunpack.c.h.b16 %v50
  %v459 = vunpack.c.l.b16 %v51
  %v460 = vunpack.c.h.b16 %v51
  %v461 = vunpack.c.l.b16 %v52
  %v462 = vunpack.c.h.b16 %v52
  %v463 = vunpack.c.l.b16 %v53
  %v464 = vunpack.c.h.b16 %v53
  %v465 = vunpack.c.l.b16 %v54
  %v466 = vunpack.c.h.b16 %v54
  %v467 = vunpack.c.l.b16 %v55
  %v468 = vunpack.c.h.b16 %v55
  %v469 = vunpack.c.l.b16 %v56
  %v470 = vunpack.c.h.b16 %v56
  %v471 = vunpack.c.l.b16 %v57
  %v472 = vunpack.c.h.b16 %v57
  %v473 = vunpack.c.l.b16 %v58
  %v474 = vunpack.c.h.b16 %v58
  %v475 = vunpack.c.l.b16 %v59
  %v476 = vunpack.c.h.b16 %v59
  %v477 = vunpack.c.l.b16 %v60
  %v478 = vunpack.c.h.b16 %v60
  %v479 = vunpack.c.l.b16 %v61
  %v480 = vunpack.c.h.b16 %v61
  %v481 = vunpack.c.l.b16 %v62
  %v482 = vunpack.c.h.b16 %v62
  %v483 = vunpack.c.l.b16 %v63
  %v484 = vunpack.c.h.b16 %v63
  %v485 = vunpack.c.l.b16 %v64
  %v486 = vunpack.c.h.b16 %v64
  %v487 = vunpack.c.l.b16 %v65
  %v488 = vunpack.c.h.b16 %v65
  %v489 = vunpack.c.l.b16 %v66
  %v490 = vunpack.c.h.b16 %v66
  %v491 = vunpack.c.l.b16 %v67
  %v492 = vunpack.c.h.b16 %v67
  %v493 = vunpack.c.l.b16 %v68
  %v494 = vunpack.c.h.b16 %v68
  %v495 = vunpack.c.l.b16 %v69
  %v496 = vunpack.c.h.b16 %v69
  %v497 = vunpack.c.l.b16 %v70
  %v498 = vunpack.c.h.b16 %v70
  %v499 = vunpack.c.l.b16 %v71
  %v500 = vunpack.c.h.b16 %v71
  %v501 = vunpack.c.l.b16 %v72
  %v502 = vunpack.c.h.b16 %v72
  %v503 = vunpack.c.l.b16 %v73
  %v504 = vunpack.c.h.b16 %v73
  %v505 = vunpack.c.l.b16 %v74
  %v506 = vunpack.c.h.b16 %v74
  %v507 = vunpack.c.l.b16 %v75
  %v508 = vunpack.c.h.b16 %v75
  %v509 = vunpack.c.l.b16 %v76
  %v510 = vunpack.c.h.b16 %v76
  %v511 = vunpack.c.l.b16 %v77
  %v512 = vunpack.c.h.b16 %v77
  %v513 = vunpack.c.l.b16 %v78
  %v514 = vunpack.c.h.b16 %v78
  %v515 = vunpack.c.l.b16 %v79
  %v516 = vunpack.c.h.b16 %v79
  %v517 = vunpack.c.l.b16 %v80
  %v518 = vunpack.c.h.b16 %v80
  %v519 = vunpack.c.l.b16 %v81
  %v520 = vunpack.c.h.b16 %v81
  %v521 = vunpack.c.l.b16 %v82
  %v522 = vunpack.c.h.b16 %v82
  %v523 = vunpack.c.l.b16 %v83
  %v524 = vunpack.c.h.b16 %v83
  %v525 = vunpack.c.l.b16 %v84
  %v526 = vunpack.c.h.b16 %v84
  %v527 = vunpack.c.l.b16 %v85
  %v528 = vunpack.c.h.b16 %v85
  %v529 = vunpack.c.l.b16 %v86
  %v530 = vunpack.c.h.b16 %v86
  %v531 = vunpack.c.l.b16 %v87
  %v532 = vunpack.c.h.b16 %v87
  %v533 = vunpack.c.l.b16 %v88
  %v534 = vunpack.c.h.b16 %v88
  %v535 = vunpack.c.l.b16 %v89
  %v536 = vunpack.c.h.b16 %v89
  %v537 = vunpack.c.l.b16 %v90
  %v538 = vunpack.c.h.b16 %v90
  %v539 = vunpack.c.l.b16 %v91
  %v540 = vunpack.c.h.b16 %v91
  %v541 = vunpack.c.l.b16 %v92
  %v542 = vunpack.c.h.b16 %v92
  %v543 = vunpack.c.l.b16 %v93
  %v544 = vunpack.c.h.b16 %v93
  %v545 = vunpack.c.l.b16 %v94
  %v546 = vunpack.c.h.b16 %v94
  %v547 = vunpack.c.l.b16 %v95
  %v548 = vunpack.c.h.b16 %v95
  %v549 = vunpack.c.l.b16 %v96
  %v550 = vunpack.c.h.b16 %v96
  %v551 = vunpack.c.l.b16 %v97
  %v552 = vunpack.c.h.b16 %v97
  %v553 = vunpack.c.l.b16 %v98
  %v554 = vunpack.c.h.b16 %v98
  %v555 = vunpack.c.l.b16 %v99
  %v556 = vunpack.c.h.b16 %v99
  %v557 = vunpack.c.l.b16 %v100
  %v558 = vunpack.c.h.b16 %v100
  %v559 = vunpack.c.l.b16 %v101
  %v560 = vunpack.c.h.b16 %v101
  %v561 = vunpack.c.l.b16 %v102
  %v562 = vunpack.c.h.b16 %v102
  %v563 = vunpack.c.l.b16 %v103
  %v564 = vunpack.c.h.b16 %v103
  %v565 = vunpack.c.l.b16 %v104
  %v566 = vunpack.c.h.b16 %v104
  %v567 = vunpack.c.l.b16 %v105
  %v568 = vunpack.c.h.b16 %v105
  %v569 = vunpack.c.l.b16 %v106
  %v570 = vunpack.c.h.b16 %v106
  %v571 = vunpack.c.l.b16 %v107
  %v572 = vunpack.c.h.b16 %v107
  %v573 = vunpack.c.l.b16 %v108
  %v574 = vunpack.c.h.b16 %v108
  %v575 = vunpack.c.l.b16 %v109
  %v576 = vunpack.c.h.b16 %v109
  %v577 = vunpack.c.l.b16 %v110
  %v578 = vunpack.c.h.b16 %v110
  %v579 = vunpack.c.l.b16 %v111
  %v580 = vunpack.c.h.b16 %v111
  %v581 = vunpack.c.l.b16 %v112
  %v582 = vunpack.c.h.b16 %v112
  %v583 = vunpack.c.l.b16 %v113
  %v584 = vunpack.c.h.b16 %v113
  %v585 = vunpack.c.l.b16 %v114
  %v586 = vunpack.c.h.b16 %v114
  %v587 = vunpack.c.l.b16 %v115
  %v588 = vunpack.c.h.b16 %v115
  %v589 = vunpack.c.l.b16 %v116
  %v590 = vunpack.c.h.b16 %v116
  %v591 = vunpack.c.l.b16 %v117
  %v592 = vunpack.c.h.b16 %v117
  %v593 = vunpack.c.l.b16 %v118
  %v594 = vunpack.c.h.b16 %v118
  %v595 = vunpack.c.l.b16 %v119
  %v596 = vunpack.c.h.b16 %v119
  %v597 = vunpack.c.l.b16 %v120
  %v598 = vunpack.c.h.b16 %v120
  %v599 = vunpack.c.l.b16 %v121
  %v600 = vunpack.c.h.b16 %v121
  %v601 = vunpack.c.l.b16 %v122
  %v602 = vunpack.c.h.b16 %v122
  %v603 = vunpack.c.l.b16 %v123
  %v604 = vunpack.c.h.b16 %v123
  %v605 = vunpack.c.l.b16 %v124
  %v606 = vunpack.c.h.b16 %v124
  %v607 = vunpack.c.l.b16 %v125
  %v608 = vunpack.c.h.b16 %v125
  %v609 = vunpack.c.l.b16 %v126
  %v610 = vunpack.c.h.b16 %v126
  %v611 = vunpack.c.l.b16 %v127
  %v612 = vunpack.c.h.b16 %v127
  %v613 = vunpack.c.l.b16 %v128
  %v614 = vunpack.c.h.b16 %v128
  %v615 = vunpack.c.l.b16 %v129
  %v616 = vunpack.c.h.b16 %v129
  %v617 = vunpack.c.l.b16 %v130
  %v618 = vunpack.c.h.b16 %v130
  %v619 = vunpack.c.l.b16 %v131
  %v620 = vunpack.c.h.b16 %v131
  %v621 = vunpack.c.l.b16 %v132
  %v622 = vunpack.c.h.b16 %v132
  %v623 = vunpack.c.l.b16 %v133
  %v624 = vunpack.c.h.b16 %v133
  %v625 = vunpack.c.l.b16 %v134
  %v626 = vunpack.c.h.b16 %v134
  %v627 = vunpack.c.l.b16 %v135
  %v628 = vunpack.c.h.b16 %v135
  %v629 = vunpack.c.l.b16 %v136
  %v630 = vunpack.c.h.b16 %v136
  %v631 = vunpack.c.l.b16 %v137
  %v632 = vunpack.c.h.b16 %v137
  %v633 = vunpack.c.l.b16 %v138
  %v634 = vunpack.c.h.b16 %v138
  %v635 = vunpack.c.l.b16 %v139
  %v636 = vunpack.c.h.b16 %v139
  %v637 = vunpack.c.l.b16 %v140
  %v638 = vunpack.c.h.b16 %v140
  %v639 = vunpack.c.l.b16 %v141
  %v640 = vunpack.c.h.b16 %v141
  %v641 = vunpack.c.l.b16 %v142
  %v642 = vunpack.c.h.b16 %v142
  %v643 = vunpack.c.l.b16 %v143
  %v644 = vunpack.c.h.b16 %v143
  %v645 = vunpack.c.l.b16 %v144
  %v646 = vunpack.c.h.b16 %v144
  %v647 = vunpack.c.l.b16 %v145
  %v648 = vunpack.c.h.b16 %v145
  %v649 = vunpack.c.l.b16 %v146
  %v650 = vunpack.c.h.b16 %v146
  %v651 = vunpack.c.l.b16 %v147
  %v652 = vunpack.c.h.b16 %v147
  %v653 = vunpack.c.l.b16 %v148
  %v654 = vunpack.c.h.b16 %v148
  %v655 = vunpack.c.l.b16 %v149
  %v656 = vunpack.c.h.b16 %v149
  %v657 = vunpack.c.l.b16 %v150
  %v658 = vunpack.c.h.b16 %v150
  %v659 = vunpack.c.l.b16 %v151
  %v660 = vunpack.c.h.b16 %v151
  %v661 = vunpack.c.l.b16 %v152
  %v662 = vunpack.c.h.b16 %v152
  %v663 = vunpack.c.l.b16 %v153
  %v664 = vunpack.c.h.b16 %v153
  %v665 = vunpack.c.l.b16 %v154
  %v666 = vunpack.c.h.b16 %v154
  %v667 = vunpack.c.l.b16 %v155
  %v668 = vunpack.c.h.b16 %v155
  %v669 = vunpack.c.l.b16 %v156
  %v670 = vunpack.c.h.b16 %v156
  %v671 = vunpack.c.l.b16 %v157
  %v672 = vunpack.c.h.b16 %v157
  %v673 = vunpack.c.l.b16 %v158
  %v674 = vunpack.c.h.b16 %v158
  %v675 = vunpack.c.l.b16 %v159
  %v676 = vunpack.c.h.b16 %v159
  %v677 = vunpack.c.l.b16 %v160
  %v678 = vunpack.c.h.b16 %v160
  %v679 = vunpack.c.l.b16 %v161
  %v680 = vunpack.c.h.b16 %v161
  %v681 = vunpack.c.l.b16 %v162
  %v682 = vunpack.c.h.b16 %v162
  %v683 = vunpack.c.l.b16 %v163
  %v684 = vunpack.c.h.b16 %v163
  %v685 = vunpack.c.l.b16 %v164
  %v686 = vunpack.c.h.b16 %v164
  %v687 = vunpack.c.l.b16 %v165
  %v688 = vunpack.c.h.b16 %v165
  %v689 = vunpack.c.l.b16 %v166
  %v690 = vunpack.c.h.b16 %v166
  %v691 = vunpack.c.l.b16 %v167
  %v692 = vunpack.c.h.b16 %v167
  %v693 = vunpack.c.l.b16 %v168
  %v694 = vunpack.c.h.b16 %v168
  %v695 = vunpack.c.l.b16 %v169
  %v696 = vunpack.c.h.b16 %v169
  %v697 = vunpack.c.l.b16 %v170
  %v698 = vunpack.c.h.b16 %v170
  %v699 = vunpack.c.l.b16 %v171
  %v700 = vunpack.c.h.b16 %v171
  %v701 = vunpack.c.l.b16 %v172
  %v702 = vunpack.c.h.b16 %v172
  %v703 = vunpack.c.l.b16 %v173
  %v704 = vunpack.c.h.b16 %v173
  %v705 = vunpack.c.l.b16 %v174
  %v706 = vunpack.c.h.b16 %v174
  %v707 = vunpack.c.l.b16 %v175
  %v708 = vunpack.c.h.b16 %v175
  %v709 = vunpack.c.l.b16 %v176
  %v710 = vunpack.c.h.b16 %v176
  %v711 = vunpack.c.l.b16 %v177
  %v712 = vunpack.c.h.b16 %v177
  %v713 = vunpack.c.l.b16 %v178
  %v714 = vunpack.c.h.b16 %v178
  %v715 = vpack.c.b16 %v429, %v427
  %v716 = vpack.c.b16 %v430, %v428
  %v717 = vpack.c.b16 %v433, %v431
  %v718 = vpack.c.b16 %v434, %v432
  %v719 = vpack.c.b16 %v437, %v435
  %v720 = vpack.c.b16 %v438, %v436
  %v721 = vpack.c.b16 %v441, %v439
  %v722 = vpack.c.b16 %v442, %v440
  %v723 = vpack.c.b16 %v445, %v443
  %v724 = vpack.c.b16 %v446, %v444
  %v725 = vpack.c.b16 %v449, %v447
  %v726 = vpack.c.b16 %v450, %v448
  %v727 = vpack.c.b16 %v453, %v451
  %v728 = vpack.c.b16 %v454, %v452
  %v729 = vpack.c.b16 %v457, %v455
  %v730 = vpack.c.b16 %v458, %v456
  %v731 = vpack.c.b16 %v461, %v459
  %v732 = vpack.c.b16 %v462, %v460
  %v733 = vpack.c.b16 %v465, %v463
  %v734 = vpack.c.b16 %v466, %v464
  %v735 = vpack.c.b16 %v469, %v467
  %v736 = vpack.c.b16 %v470, %v468
  %v737 = vpack.c.b16 %v473, %v471
  %v738 = vpack.c.b16 %v474, %v472
  %v739 = vpack.c.b16 %v477, %v475
  %v740 = vpack.c.b16 %v478, %v476
  %v741 = vpack.c.b16 %v481, %v479
  %v742 = vpack.c.b16 %v482, %v480
  %v743 = vpack.c.b16 %v485, %v483
  %v744 = vpack.c.b16 %v486, %v484
  %v745 = vpack.c.b16 %v489, %v487
  %v746 = vpack.c.b16 %v490, %v488
  %v747 = vpack.c.b16 %v493, %v491
  %v748 = vpack.c.b16 %v494, %v492
  %v749 = vpack.c.b16 %v497, %v495
  %v750 = vpack.c.b16 %v498, %v496
  %v751 = vpack.c.b16 %v501, %v499
  %v752 = vpack.c.b16 %v502, %v500
  %v753 = vpack.c.b16 %v505, %v503
  %v754 = vpack.c.b16 %v506, %v504
  %v755 = vpack.c.b16 %v509, %v507
  %v756 = vpack.c.b16 %v510, %v508
  %v757 = vpack.c.b16 %v513, %v511
  %v758 = vpack.c.b16 %v514, %v512
  %v759 = vpack.c.b16 %v517, %v515
  %v760 = vpack.c.b16 %v518, %v516
  %v761 = vpack.c.b16 %v521, %v519
  %v762 = vpack.c.b16 %v522, %v520
  %v763 = vpack.c.b16 %v525, %v523
  %v764 = vpack.c.b16 %v526, %v524
  %v765 = vpack.c.b16 %v529, %v527
  %v766 = vpack.c.b16 %v530, %v528
  %v767 = vpack.c.b16 %v533, %v531
  %v768 = vpack.c.b16 %v534, %v532
  %v769 = vpack.c.b16 %v537, %v535
  %v770 = vpack.c.b16 %v538, %v536
  %v771 = vpack.c.b16 %v541, %v539
  %v772 = vpack.c.b16 %v542, %v540
  %v773 = vpack.c.b16 %v545, %v543
  %v774 = vpack.c.b16 %v546, %v544
  %v775 = vpack.c.b16 %v549, %v547
  %v776 = vpack.c.b16 %v550, %v548
  %v777 = vpack.c.b16 %v553, %v551
  %v778 = vpack.c.b16 %v554, %v552
  %v779 = vpack.c.b16 %v557, %v555
  %v780 = vpack.c.b16 %v558, %v556
  %v781 = vpack.c.b16 %v561, %v559
  %v782 = vpack.c.b16 %v562, %v560
  %v783 = vpack.c.b16 %v565, %v563
  %v784 = vpack.c.b16 %v566, %v564
  %v785 = vpack.c.b16 %v569, %v567
  %v786 = vpack.c.b16 %v570, %v568
  %v787 = vpack.c.b16 %v573, %v571
  %v788 = vpack.c.b16 %v574, %v572
  %v789 = vpack.c.b16 %v577, %v575
  %v790 = vpack.c.b16 %v578, %v576
  %v791 = vpack.c.b16 %v581, %v579
  %v792 = vpack.c.b16 %v582, %v580
  %v793 = vpack.c.b16 %v585, %v583
  %v794 = vpack.c.b16 %v586, %v584
  %v795 = vpack.c.b16 %v589, %v587
  %v796 = vpack.c.b16 %v590, %v588
  %v797 = vpack.c.b16 %v593, %v591
  %v798 = vpack.c.b16 %v594, %v592
  %v799 = vpack.c.b16 %v597, %v595
  %v800 = vpack.c.b16 %v598, %v596
  %v801 = vpack.c.b16 %v601, %v599
  %v802 = vpack.c.b16 %v602, %v600
  %v803 = vpack.c.b16 %v605, %v603
  %v804 = vpack.c.b16 %v606, %v604
  %v805 = vpack.c.b16 %v609, %v607
  %v806 = vpack.c.b16 %v610, %v608
  %v807 = vpack.c.b16 %v613, %v611
  %v808 = vpack.c.b16 %v614, %v612
  %v809 = vpack.c.b16 %v617, %v615
  %v810 = vpack.c.b16 %v618, %v616
  %v811 = vpack.c.b16 %v621, %v619
  %v812 = vpack.c.b16 %v622, %v620
  %v813 = vpack.c.b16 %v625, %v623
  %v814 = vpack.c.b16 %v626, %v624
  %v815 = vpack.c.b16 %v629, %v627
  %v816 = vpack.c.b16 %v630, %v628
  %v817 = vpack.c.b16 %v633, %v631
  %v818 = vpack.c.b16 %v634, %v632
  %v819 = vpack.c.b16 %v637, %v635
  %v820 = vpack.c.b16 %v638, %v636
  %v821 = vpack.c.b16 %v641, %v639
  %v822 = vpack.c.b16 %v642, %v640
  %v823 = vpack.c.b16 %v645, %v643
  %v824 = vpack.c.b16 %v646, %v644
  %v825 = vpack.c.b16 %v649, %v647
  %v826 = vpack.c.b16 %v650, %v648
  %v827 = vpack.c.b16 %v653, %v651
  %v828 = vpack.c.b16 %v654, %v652
  %v829 = vpack.c.b16 %v657, %v655
  %v830 = vpack.c.b16 %v658, %v656
  %v831 = vpack.c.b16 %v661, %v659
  %v832 = vpack.c.b16 %v662, %v660
  %v833 = vpack.c.b16 %v665, %v663
  %v834 = vpack.c.b16 %v666, %v664
  %v835 = vpack.c.b16 %v669, %v667
  %v836 = vpack.c.b16 %v670, %v668
  %v837 = vpack.c.b16 %v673, %v671
  %v838 = vpack.c.b16 %v674, %v672
  %v839 = vpack.c.b16 %v677, %v675
  %v840 = vpack.c.b16 %v678, %v676
  %v841 = vpack.c.b16 %v681, %v679
  %v842 = vpack.c.b16 %v682, %v680
  %v843 = vpack.c.b16 %v685, %v683
  %v844 = vpack.c.b16 %v686, %v684
  %v845 = vpack.c.b16 %v689, %v687
  %v846 = vpack.c.b16 %v690, %v688
  %v847 = vpack.c.b16 %v693, %v691
  %v848 = vpack.c.b16 %v694, %v692
  %v849 = vpack.c.b16 %v697, %v695
  %v850 = vpack.c.b16 %v698, %v696
  %v851 = vpack.c.b16 %v701, %v699
  %v852 = vpack.c.b16 %v702, %v700
  %v853 = vpack.c.b16 %v705, %v703
  %v854 = vpack.c.b16 %v706, %v704
  %v855 = vpack.c.b16 %v709, %v707
  %v856 = vpack.c.b16 %v710, %v708
  %v857 = vpack.c.b16 %v713, %v711
  %v858 = vpack.c.b16 %v714, %v712
  %1003 = vmatprep.subr.bf16.mxu0 %v730
  %1004 = vmatpush1.bf16.msra.mxu0 %v729
  %1005 = vmatprep.subr.bf16.mxu0 %v728
  %1006 = vmatpush1.bf16.msra.mxu0 %v727
  %1007 = vmatprep.subr.bf16.mxu0 %v726
  %1008 = vmatpush1.bf16.msra.mxu0 %v725
  %1009 = vmatprep.subr.bf16.mxu0 %v724
  %1010 = vmatpush1.bf16.msra.mxu0 %v723
  %1011 = vmatprep.subr.bf16.mxu0 %v722
  %1012 = vmatpush1.bf16.msra.mxu0 %v721
  %1013 = vmatprep.subr.bf16.mxu0 %v720
  %1014 = vmatpush1.bf16.msra.mxu0 %v719
  %1015 = vmatprep.subr.bf16.mxu0 %v718
  %1016 = vmatpush1.bf16.msra.mxu0 %v717
  %1017 = vmatprep.subr.bf16.mxu0 %v716
  %1018 = vmatpush1.bf16.msra.mxu0 %v715
  %1019 = vmatprep.subr.bf16.mxu0 %v746
  %1020 = vmatpush2.bf16.msra.mxu0 %v745
  %1021 = vmatprep.subr.bf16.mxu0 %v744
  %1022 = vmatpush2.bf16.msra.mxu0 %v743
  %1023 = vmatprep.subr.bf16.mxu0 %v742
  %1024 = vmatpush2.bf16.msra.mxu0 %v741
  %1025 = vmatprep.subr.bf16.mxu0 %v740
  %1026 = vmatpush2.bf16.msra.mxu0 %v739
  %1027 = vmatprep.subr.bf16.mxu0 %v738
  %1028 = vmatpush2.bf16.msra.mxu0 %v737
  %1029 = vmatprep.subr.bf16.mxu0 %v736
  %1030 = vmatpush2.bf16.msra.mxu0 %v735
  %1031 = vmatprep.subr.bf16.mxu0 %v734
  %1032 = vmatpush2.bf16.msra.mxu0 %v733
  %1033 = vmatprep.subr.bf16.mxu0 %v732
  %1034 = vmatpush2.bf16.msra.mxu0 %v731
  %1035 = vmatprep.mubr.bf16.mxu0 %v248
  %1036 = vmatmul.mubr.bf16.gmra.mxu0 %v247
  %v1037 = vpop.f32.mrf.mxu0
  %v1038 = vadd.f32 %v184, %v1037
  %v1039 = vpop.f32.mrf.mxu0
  %v1040 = vadd.f32 %v188, %v1039
  %v1041 = vpop.f32.mrf.mxu0
  %v1042 = vadd.f32 %v184, %v1041
  %v1043 = vpop.f32.mrf.mxu0
  %v1044 = vadd.f32 %v188, %v1043
  %1045 = vmatprep.mubr.bf16.mxu0 %v257
  %1046 = vmatmul.mubr.bf16.gmra.mxu0 %v256
  %v1047 = vpop.f32.mrf.mxu0
  %v1048 = vadd.f32 %v184, %v1047
  %v1049 = vpop.f32.mrf.mxu0
  %v1050 = vadd.f32 %v188, %v1049
  %v1051 = vpop.f32.mrf.mxu0
  %v1052 = vadd.f32 %v184, %v1051
  %v1053 = vpop.f32.mrf.mxu0
  %v1054 = vadd.f32 %v188, %v1053
  %1055 = vdwg.mxu0
  %1056 = vmatprep.subr.bf16.mxu0 %v762
  %1057 = vmatpush1.bf16.msra.mxu0 %v761
  %1058 = vmatprep.subr.bf16.mxu0 %v760
  %1059 = vmatpush1.bf16.msra.mxu0 %v759
  %1060 = vmatprep.subr.bf16.mxu0 %v758
  %1061 = vmatpush1.bf16.msra.mxu0 %v757
  %1062 = vmatprep.subr.bf16.mxu0 %v756
  %1063 = vmatpush1.bf16.msra.mxu0 %v755
  %1064 = vmatprep.subr.bf16.mxu0 %v754
  %1065 = vmatpush1.bf16.msra.mxu0 %v753
  %1066 = vmatprep.subr.bf16.mxu0 %v752
  %1067 = vmatpush1.bf16.msra.mxu0 %v751
  %1068 = vmatprep.subr.bf16.mxu0 %v750
  %1069 = vmatpush1.bf16.msra.mxu0 %v749
  %1070 = vmatprep.subr.bf16.mxu0 %v748
  %1071 = vmatpush1.bf16.msra.mxu0 %v747
  %1072 = vmatprep.subr.bf16.mxu0 %v778
  %1073 = vmatpush2.bf16.msra.mxu0 %v777
  %1074 = vmatprep.subr.bf16.mxu0 %v776
  %1075 = vmatpush2.bf16.msra.mxu0 %v775
  %1076 = vmatprep.subr.bf16.mxu0 %v774
  %1077 = vmatpush2.bf16.msra.mxu0 %v773
  %1078 = vmatprep.subr.bf16.mxu0 %v772
  %1079 = vmatpush2.bf16.msra.mxu0 %v771
  %1080 = vmatprep.subr.bf16.mxu0 %v770
  %1081 = vmatpush2.bf16.msra.mxu0 %v769
  %1082 = vmatprep.subr.bf16.mxu0 %v768
  %1083 = vmatpush2.bf16.msra.mxu0 %v767
  %1084 = vmatprep.subr.bf16.mxu0 %v766
  %1085 = vmatpush2.bf16.msra.mxu0 %v765
  %1086 = vmatprep.subr.bf16.mxu0 %v764
  %1087 = vmatpush2.bf16.msra.mxu0 %v763
  %1088 = vmatprep.mubr.bf16.mxu0 %v250
  %1089 = vmatmul.mubr.bf16.gmra.mxu0 %v249
  %v1090 = vpop.f32.mrf.mxu0
  %v1091 = vadd.f32 %v1038, %v1090
  %v1092 = vpop.f32.mrf.mxu0
  %v1093 = vadd.f32 %v1040, %v1092
  %v1094 = vpop.f32.mrf.mxu0
  %v1095 = vadd.f32 %v1042, %v1094
  %v1096 = vpop.f32.mrf.mxu0
  %v1097 = vadd.f32 %v1044, %v1096
  %1098 = vmatprep.mubr.bf16.mxu0 %v259
  %1099 = vmatmul.mubr.bf16.gmra.mxu0 %v258
  %v1100 = vpop.f32.mrf.mxu0
  %v1101 = vadd.f32 %v1048, %v1100
  %v1102 = vpop.f32.mrf.mxu0
  %v1103 = vadd.f32 %v1050, %v1102
  %v1104 = vpop.f32.mrf.mxu0
  %v1105 = vadd.f32 %v1052, %v1104
  %v1106 = vpop.f32.mrf.mxu0
  %v1107 = vadd.f32 %v1054, %v1106
  %1108 = vdwg.mxu0
  %1109 = vmatprep.subr.bf16.mxu0 %v794
  %1110 = vmatpush1.bf16.msra.mxu0 %v793
  %1111 = vmatprep.subr.bf16.mxu0 %v792
  %1112 = vmatpush1.bf16.msra.mxu0 %v791
  %1113 = vmatprep.subr.bf16.mxu0 %v790
  %1114 = vmatpush1.bf16.msra.mxu0 %v789
  %1115 = vmatprep.subr.bf16.mxu0 %v788
  %1116 = vmatpush1.bf16.msra.mxu0 %v787
  %1117 = vmatprep.subr.bf16.mxu0 %v786
  %1118 = vmatpush1.bf16.msra.mxu0 %v785
  %1119 = vmatprep.subr.bf16.mxu0 %v784
  %1120 = vmatpush1.bf16.msra.mxu0 %v783
  %1121 = vmatprep.subr.bf16.mxu0 %v782
  %1122 = vmatpush1.bf16.msra.mxu0 %v781
  %1123 = vmatprep.subr.bf16.mxu0 %v780
  %1124 = vmatpush1.bf16.msra.mxu0 %v779
  %1125 = vmatprep.subr.bf16.mxu0 %v810
  %1126 = vmatpush2.bf16.msra.mxu0 %v809
  %1127 = vmatprep.subr.bf16.mxu0 %v808
  %1128 = vmatpush2.bf16.msra.mxu0 %v807
  %1129 = vmatprep.subr.bf16.mxu0 %v806
  %1130 = vmatpush2.bf16.msra.mxu0 %v805
  %1131 = vmatprep.subr.bf16.mxu0 %v804
  %1132 = vmatpush2.bf16.msra.mxu0 %v803
  %1133 = vmatprep.subr.bf16.mxu0 %v802
  %1134 = vmatpush2.bf16.msra.mxu0 %v801
  %1135 = vmatprep.subr.bf16.mxu0 %v800
  %1136 = vmatpush2.bf16.msra.mxu0 %v799
  %1137 = vmatprep.subr.bf16.mxu0 %v798
  %1138 = vmatpush2.bf16.msra.mxu0 %v797
  %1139 = vmatprep.subr.bf16.mxu0 %v796
  %1140 = vmatpush2.bf16.msra.mxu0 %v795
  %1141 = vmatprep.mubr.bf16.mxu0 %v252
  %1142 = vmatmul.mubr.bf16.gmra.mxu0 %v251
  %v1143 = vpop.f32.mrf.mxu0
  %v1144 = vadd.f32 %v1091, %v1143
  %v1145 = vpop.f32.mrf.mxu0
  %v1146 = vadd.f32 %v1093, %v1145
  %v1147 = vpop.f32.mrf.mxu0
  %v1148 = vadd.f32 %v1095, %v1147
  %v1149 = vpop.f32.mrf.mxu0
  %v1150 = vadd.f32 %v1097, %v1149
  %1151 = vmatprep.mubr.bf16.mxu0 %v261
  %1152 = vmatmul.mubr.bf16.gmra.mxu0 %v260
  %v1153 = vpop.f32.mrf.mxu0
  %v1154 = vadd.f32 %v1101, %v1153
  %v1155 = vpop.f32.mrf.mxu0
  %v1156 = vadd.f32 %v1103, %v1155
  %v1157 = vpop.f32.mrf.mxu0
  %v1158 = vadd.f32 %v1105, %v1157
  %v1159 = vpop.f32.mrf.mxu0
  %v1160 = vadd.f32 %v1107, %v1159
  %1161 = vdwg.mxu0
  %1162 = vmatprep.subr.bf16.mxu0 %v826
  %1163 = vmatpush1.bf16.msra.mxu0 %v825
  %1164 = vmatprep.subr.bf16.mxu0 %v824
  %1165 = vmatpush1.bf16.msra.mxu0 %v823
  %1166 = vmatprep.subr.bf16.mxu0 %v822
  %1167 = vmatpush1.bf16.msra.mxu0 %v821
  %1168 = vmatprep.subr.bf16.mxu0 %v820
  %1169 = vmatpush1.bf16.msra.mxu0 %v819
  %1170 = vmatprep.subr.bf16.mxu0 %v818
  %1171 = vmatpush1.bf16.msra.mxu0 %v817
  %1172 = vmatprep.subr.bf16.mxu0 %v816
  %1173 = vmatpush1.bf16.msra.mxu0 %v815
  %1174 = vmatprep.subr.bf16.mxu0 %v814
  %1175 = vmatpush1.bf16.msra.mxu0 %v813
  %1176 = vmatprep.subr.bf16.mxu0 %v812
  %1177 = vmatpush1.bf16.msra.mxu0 %v811
  %1178 = vmatprep.subr.bf16.mxu0 %v842
  %1179 = vmatpush2.bf16.msra.mxu0 %v841
  %1180 = vmatprep.subr.bf16.mxu0 %v840
  %1181 = vmatpush2.bf16.msra.mxu0 %v839
  %1182 = vmatprep.subr.bf16.mxu0 %v838
  %1183 = vmatpush2.bf16.msra.mxu0 %v837
  %1184 = vmatprep.subr.bf16.mxu0 %v836
  %1185 = vmatpush2.bf16.msra.mxu0 %v835
  %1186 = vmatprep.subr.bf16.mxu0 %v834
  %1187 = vmatpush2.bf16.msra.mxu0 %v833
  %1188 = vmatprep.subr.bf16.mxu0 %v832
  %1189 = vmatpush2.bf16.msra.mxu0 %v831
  %1190 = vmatprep.subr.bf16.mxu0 %v830
  %1191 = vmatpush2.bf16.msra.mxu0 %v829
  %1192 = vmatprep.subr.bf16.mxu0 %v828
  %1193 = vmatpush2.bf16.msra.mxu0 %v827
  %1194 = vmatprep.mubr.bf16.mxu0 %v254
  %1195 = vmatmul.mubr.bf16.gmra.mxu0 %v253
  %v1196 = vpop.f32.mrf.mxu0
  %v1197 = vadd.f32 %v1144, %v1196
  %v1198 = vpop.f32.mrf.mxu0
  %v1199 = vadd.f32 %v1146, %v1198
  %v1200 = vpop.f32.mrf.mxu0
  %v1201 = vadd.f32 %v1148, %v1200
  %v1202 = vpop.f32.mrf.mxu0
  %v1203 = vadd.f32 %v1150, %v1202
  %1204 = vmatprep.mubr.bf16.mxu0 %v263
  %1205 = vmatmul.mubr.bf16.gmra.mxu0 %v262
  %v1206 = vpop.f32.mrf.mxu0
  %v1207 = vadd.f32 %v1154, %v1206
  %v1208 = vpop.f32.mrf.mxu0
  %v1209 = vadd.f32 %v1156, %v1208
  %v1210 = vpop.f32.mrf.mxu0
  %v1211 = vadd.f32 %v1158, %v1210
  %v1212 = vpop.f32.mrf.mxu0
  %v1213 = vadd.f32 %v1160, %v1212
  %1214 = vdwg.mxu0
  %1215 = vmatprep.subr.bf16.mxu0 %v858
  %1216 = vmatpush1.bf16.msra.mxu0 %v857
  %1217 = vmatprep.subr.bf16.mxu0 %v856
  %1218 = vmatpush1.bf16.msra.mxu0 %v855
  %1219 = vmatprep.subr.bf16.mxu0 %v854
  %1220 = vmatpush1.bf16.msra.mxu0 %v853
  %1221 = vmatprep.subr.bf16.mxu0 %v852
  %1222 = vmatpush1.bf16.msra.mxu0 %v851
  %1223 = vmatprep.subr.bf16.mxu0 %v850
  %1224 = vmatpush1.bf16.msra.mxu0 %v849
  %1225 = vmatprep.subr.bf16.mxu0 %v848
  %1226 = vmatpush1.bf16.msra.mxu0 %v847
  %1227 = vmatprep.subr.bf16.mxu0 %v846
  %1228 = vmatpush1.bf16.msra.mxu0 %v845
  %1229 = vmatprep.subr.bf16.mxu0 %v844
  %1230 = vmatpush1.bf16.msra.mxu0 %v843
  %1231 = vmatprep.subr.bf16.mxu0 0
  %1232 = vmatpush2.bf16.msra.mxu0 0
  %1233 = vmatprep.subr.bf16.mxu0 0
  %1234 = vmatpush2.bf16.msra.mxu0 0
  %1235 = vmatprep.subr.bf16.mxu0 0
  %1236 = vmatpush2.bf16.msra.mxu0 0
  %1237 = vmatprep.subr.bf16.mxu0 0
  %1238 = vmatpush2.bf16.msra.mxu0 0
  %1239 = vmatprep.subr.bf16.mxu0 0
  %1240 = vmatpush2.bf16.msra.mxu0 0
  %1241 = vmatprep.subr.bf16.mxu0 0
  %1242 = vmatpush2.bf16.msra.mxu0 0
  %1243 = vmatprep.subr.bf16.mxu0 0
  %1244 = vmatpush2.bf16.msra.mxu0 0
  %1245 = vmatprep.subr.bf16.mxu0 0
  %1246 = vmatpush2.bf16.msra.mxu0 0
  %1247 = vmatprep.mubr.bf16.mxu0 0
  %1248 = vmatmul.mubr.bf16.gmra.mxu0 %v255
  %v1249 = vpop.f32.mrf.mxu0
  %v1250 = vadd.f32 %v1197, %v1249
  %v1251 = vpop.f32.mrf.mxu0
  %v1252 = vadd.f32 %v1199, %v1251
  %v1253 = vpop.f32.mrf.mxu0
  %v1254 = vadd.f32 %v1201, %v1253
  %v1255 = vpop.f32.mrf.mxu0
  %v1256 = vadd.f32 %v1203, %v1255
  %1257 = vmatprep.mubr.bf16.mxu0 0
  %1258 = vmatmul.mubr.bf16.gmra.mxu0 %v264
  %v1259 = vpop.f32.mrf.mxu0
  %v1260 = vadd.f32 %v1207, %v1259
  %v1261 = vpop.f32.mrf.mxu0
  %v1262 = vadd.f32 %v1209, %v1261
  %v1263 = vpop.f32.mrf.mxu0
  %v1264 = vadd.f32 %v1211, %v1263
  %v1265 = vpop.f32.mrf.mxu0
  %v1266 = vadd.f32 %v1213, %v1265
  %1267 = vdwg.mxu0
  %v1268 = vxor.u32 %v1250, 2147483648
  %v1269 = vxor.u32 %v1252, 2147483648
  %v1270 = vxor.u32 %v1254, 2147483648
  %v1271 = vxor.u32 %v1256, 2147483648
  %v1272 = vxor.u32 %v1260, 2147483648
  %v1273 = vxor.u32 %v1262, 2147483648
  %v1274 = vxor.u32 %v1264, 2147483648
  %v1275 = vxor.u32 %v1266, 2147483648
  %v1276 = vmul.f32 %v1268, 1.442695
  %v1277 = vpow.pop %v1276
  %v1278 = vmul.f32 %v1269, 1.442695
  %v1279 = vpow.pop %v1278
  %v1280 = vmul.f32 %v1270, 1.442695
  %v1281 = vpow.pop %v1280
  %v1282 = vmul.f32 %v1271, 1.442695
  %v1283 = vpow.pop %v1282
  %v1284 = vmul.f32 %v1272, 1.442695
  %v1285 = vpow.pop %v1284
  %v1286 = vmul.f32 %v1273, 1.442695
  %v1287 = vpow.pop %v1286
  %v1288 = vmul.f32 %v1274, 1.442695
  %v1289 = vpow.pop %v1288
  %v1290 = vmul.f32 %v1275, 1.442695
  %v1291 = vpow.pop %v1290
  %v1292 = vadd.f32 %v1277, 1.0
  %v1293 = vadd.f32 %v1279, 1.0
  %v1294 = vadd.f32 %v1281, 1.0
  %v1295 = vadd.f32 %v1283, 1.0
  %v1296 = vadd.f32 %v1285, 1.0
  %v1297 = vadd.f32 %v1287, 1.0
  %v1298 = vadd.f32 %v1289, 1.0
  %v1299 = vadd.f32 %v1291, 1.0
  %v1300 = vrcp.pop %v1292
  %v1301 = vmul.f32 1.0, %v1300
  %v1302 = vrcp.pop %v1293
  %v1303 = vmul.f32 1.0, %v1302
  %v1304 = vrcp.pop %v1294
  %v1305 = vmul.f32 1.0, %v1304
  %v1306 = vrcp.pop %v1295
  %v1307 = vmul.f32 1.0, %v1306
  %v1308 = vrcp.pop %v1296
  %v1309 = vmul.f32 1.0, %v1308
  %v1310 = vrcp.pop %v1297
  %v1311 = vmul.f32 1.0, %v1310
  %v1312 = vrcp.pop %v1298
  %v1313 = vmul.f32 1.0, %v1312
  %v1314 = vrcp.pop %v1299
  %v1315 = vmul.f32 1.0, %v1314
  %v1316 = vmul.f32 %v1250, %v1301
  %v1317 = vmul.f32 %v1252, %v1303
  %v1318 = vmul.f32 %v1254, %v1305
  %v1319 = vmul.f32 %v1256, %v1307
  %v1320 = vmul.f32 %v1260, %v1309
  %v1321 = vmul.f32 %v1262, %v1311
  %v1322 = vmul.f32 %v1264, %v1313
  %v1323 = vmul.f32 %v1266, %v1315
  %v1324 = vpack.c.bf16 %v1318, %v1316
  %v1325 = vpack.c.bf16 %v1319, %v1317
  %v1326 = vpack.c.bf16 %v1322, %v1320
  %v1327 = vpack.c.bf16 %v1323, %v1321
  %v1332 = vunpack.c.l.b16 %v1324
  %v1333 = vunpack.c.l.b16 %v1325
  %v1334 = vunpack.c.h.b16 %v1324
  %v1335 = vunpack.c.h.b16 %v1325
  %v1336 = vunpack.c.l.b16 %v1326
  %v1337 = vunpack.c.l.b16 %v1327
  %v1338 = vunpack.c.h.b16 %v1326
  %v1339 = vunpack.c.h.b16 %v1327
  %v1340 = vpack.c.b16 %v1333, %v1332
  %v1341 = vpack.c.b16 %v1335, %v1334
  %v1342 = vpack.c.b16 %v1337, %v1336
  %v1343 = vpack.c.b16 %v1339, %v1338
  %1348 = vst [vmem:[%s3] sm:$0xff] %v1340
  %1349 = vst [vmem:[%s3 + $0x8] sm:$0xff] %v1341
  %1350 = vst [vmem:[%s3 + $0x10] sm:$0xff] %v1342
  %1351 = vst [vmem:[%s3 + $0x18] sm:$0xff] %v1343
  // Predicated region
  $region14: #{_lambda_.6} parent=0 // pred_check
    _
  $region15: #{_lambda_.6} parent=0 // pred_check_branch
    %1353 = sbr.rel (0) target = $region17
  $region16: #{_lambda_.6} parent=0 // pred_region
    _
  $region17: #{_lambda_.6} parent=0 // pred_fallthru
    _
  // Predicated region
  $region18: #{_lambda_.6} parent=0 // pred_check
    _
  $region19: #{_lambda_.6} parent=0 // pred_check_branch
    %1355 = sbr.rel (0) target = $region21
  $region20: #{_lambda_.6} parent=0 // pred_region
    _
  $region21: #{_lambda_.6} parent=0 // pred_fallthru
    _

// kernel: _lambda_.7
$region0: #{_lambda_.7}
  #allocation0 [shape = 'u32[]', space=smem, size = 0x4, offset = 0x4, fixed_abs, tag = 'smem constant byte address 0x4 - core index']
  #allocation1 [shape = 'u32[144,128]{1,0:T(1,128)}', space=vmem, size = 0x12000, scoped, tag = 'internal scratch']
  %s0 = inlined_call_operand.vmem [shape: bf16[2,8,2304], index: 0, kind: input, shape index: {}]
  %s1 = inlined_call_operand.vmem [shape: bf16[2304,128], index: 1, kind: input, shape index: {}]
  %s2 = inlined_call_operand.vmem [shape: f32[1,128], index: 2, kind: input, shape index: {}]
  %s3 = inlined_call_operand.hbm [shape: f32[2,1,128], index: 3, kind: output, shape index: {}]
  %s4 = sld [smem:[#allocation0]]
  $region45: #{_lambda_.7} parent=0
    _
  %s6 = ssub.s32 1, %s4
  %s7 = scalar_select 0, %s6, %s4
  $region1: #{_lambda_.7} parent=0
    #allocation2 [shape = 'u8[1024]{0}', space=vmem, size = 0x400, scoped, tag = 'output window, operand 0']
    #allocation3 [shape = 's32[2]{0}', space=sflag, size = 0x8, scoped, tag = 'scoped memory for _lambda_.7']
    %8 = vsyncpa [#allocation3], 0
    %s9 = scalar_lea.sflag [#allocation3], 1
    %10 = vsyncpa %s9, 0
    loop: start=0, step=1, limit=4
    $region2: #{_lambda_.7} parent=1 // loop_pre_header
      _
    $region3: #{_lambda_.7} parent=1 // loop_header
      %s12 = sphi 0, %s16
      %p13 = scmp.ge.s32.totalorder %s12, 4
      %s22 = sphi 0, %s24
      %s25 = sphi 0, %s22
      %s26 = sphi 0, %s25
      %s42 = sphi 0, %s26
      %s46 = sphi 0, %s46
      %s48 = sphi 0, %s46
      %s49 = sphi 0, %s48
      %s63 = sphi 0, %s49
      %s67 = sphi 0, %s67
      %s69 = sphi 0, %s67
      %s70 = sphi 0, %s69
      %s84 = sphi 0, %s70
      %s90 = sphi 0, %s92
      %s93 = sphi 0, %s90
      %s94 = sphi 0, %s93
      %s110 = sphi 0, %s94
    $region4: #{_lambda_.7} parent=1 // loop_header_branch
      %15 = sbr.rel (%p13) target = $region8
    $region5: #{_lambda_.7} parent=1 // loop_body
      %s17 = ssub.s32 %s12, 1
      %s18 = ssub.s32 %s12, 2
      %s19 = sadd.s32 %s12, 1
      %s20 = ssub.s32 %s12, %s19
      %p21 = scmp.eq.s32.totalorder %s20, 0
      %s23 = sadd.s32 %s22, 1
      %s24 = scalar_select %p21, %s22, %s23
      %p27 = pneg %p21
      %p28 = scmp.eq.s32.totalorder %s12, 1
      %p29 = por %p27, %p28
      %p30 = scmp.ne.s32.totalorder %s22, %s25
      %p31 = scmp.eq.s32.totalorder %s12, 0
      %p32 = por %p30, %p31
      %p33 = scmp.ne.s32.totalorder %s22, %s25
      %p34 = scmp.eq.s32.totalorder %s17, 1
      %p35 = por %p33, %p34
      %p36 = scmp.ne.s32.totalorder %s25, %s26
      %p37 = scmp.eq.s32.totalorder %s17, 0
      %p38 = por %p36, %p37
      %p39 = scmp.ne.s32.totalorder %s25, %s26
      %p40 = scmp.eq.s32.totalorder %s18, 1
      %p41 = por %p39, %p40
      %p43 = scmp.ne.s32.totalorder %s26, %s42
      %p44 = scmp.eq.s32.totalorder %s18, 0
      %p45 = por %p43, %p44
      %s47 = sadd.s32 %s46, 1
      %p50 = scmp.eq.s32.totalorder %s12, 1
      %p51 = scmp.ne.s32.totalorder %s46, %s48
      %p52 = scmp.eq.s32.totalorder %s12, 0
      %p53 = por %p51, %p52
      %p54 = scmp.ne.s32.totalorder %s46, %s48
      %p55 = scmp.eq.s32.totalorder %s17, 1
      %p56 = por %p54, %p55
      %p57 = scmp.ne.s32.totalorder %s48, %s49
      %p58 = scmp.eq.s32.totalorder %s17, 0
      %p59 = por %p57, %p58
      %p60 = scmp.ne.s32.totalorder %s48, %s49
      %p61 = scmp.eq.s32.totalorder %s18, 1
      %p62 = por %p60, %p61
      %p64 = scmp.ne.s32.totalorder %s49, %s63
      %p65 = scmp.eq.s32.totalorder %s18, 0
      %p66 = por %p64, %p65
      %s68 = sadd.s32 %s67, 1
      %p71 = scmp.eq.s32.totalorder %s12, 1
      %p72 = scmp.ne.s32.totalorder %s67, %s69
      %p73 = scmp.eq.s32.totalorder %s12, 0
      %p74 = por %p72, %p73
      %p75 = scmp.ne.s32.totalorder %s67, %s69
      %p76 = scmp.eq.s32.totalorder %s17, 1
      %p77 = por %p75, %p76
      %p78 = scmp.ne.s32.totalorder %s69, %s70
      %p79 = scmp.eq.s32.totalorder %s17, 0
      %p80 = por %p78, %p79
      %p81 = scmp.ne.s32.totalorder %s69, %s70
      %p82 = scmp.eq.s32.totalorder %s18, 1
      %p83 = por %p81, %p82
      %p85 = scmp.ne.s32.totalorder %s70, %s84
      %p86 = scmp.eq.s32.totalorder %s18, 0
      %p87 = por %p85, %p86
      %s88 = ssub.s32 %s12, %s19
      %p89 = scmp.eq.s32.totalorder %s88, 0
      %s91 = sadd.s32 %s90, 1
      %s92 = scalar_select %p89, %s90, %s91
      %p95 = pneg %p89
      %p96 = scmp.eq.s32.totalorder %s12, 1
      %p97 = por %p95, %p96
      %p98 = scmp.ne.s32.totalorder %s90, %s93
      %p99 = scmp.eq.s32.totalorder %s12, 0
      %p100 = por %p98, %p99
      %p101 = scmp.ne.s32.totalorder %s90, %s93
      %p102 = scmp.eq.s32.totalorder %s17, 1
      %p103 = por %p101, %p102
      %p104 = scmp.ne.s32.totalorder %s93, %s94
      %p105 = scmp.eq.s32.totalorder %s17, 0
      %p106 = por %p104, %p105
      %p107 = scmp.ne.s32.totalorder %s93, %s94
      %p108 = scmp.eq.s32.totalorder %s18, 1
      %p109 = por %p107, %p108
      %p111 = scmp.ne.s32.totalorder %s94, %s110
      %p112 = scmp.eq.s32.totalorder %s18, 0
      %p113 = por %p111, %p112
      %p114 = scmp.le.s32.totalorder 1, %s12
      %p115 = scmp.lt.s32.totalorder %s12, 3
      %p116 = pnand %p114, %p115
      %p117 = pneg %p116
      // Predicated region
      $region9: #{_lambda_.7} parent=5 // pred_check
        _
      $region10: #{_lambda_.7} parent=5 // pred_check_branch
        %119 = sbr.rel (%p116) target = $region12
      $region11: #{_lambda_.7} parent=5 // pred_region
        %s120 = ssub.s32 %s12, 1
        // Predicated region
        $region13: #{_lambda_.7} parent=11 // pred_check
          %p121 = pneg %p59
        $region14: #{_lambda_.7} parent=11 // pred_check_branch
          %123 = sbr.rel (%p121) target = $region16
        $region15: #{_lambda_.7} parent=11 // pred_region
          _
        $region16: #{_lambda_.7} parent=11 // pred_fallthru
          _
        // Predicated region
        $region17: #{_lambda_.7} parent=11 // pred_check
          %p124 = pneg %p80
        $region18: #{_lambda_.7} parent=11 // pred_check_branch
          %126 = sbr.rel (%p124) target = $region20
        $region19: #{_lambda_.7} parent=11 // pred_region
          _
        $region20: #{_lambda_.7} parent=11 // pred_fallthru
          _
      $region12: #{_lambda_.7} parent=5 // pred_fallthru
        _
      %p127 = scmp.lt.s32.totalorder %s12, 2
      // Predicated region
      $region21: #{_lambda_.7} parent=5 // pred_check
        %p128 = pneg %p127
      $region22: #{_lambda_.7} parent=5 // pred_check_branch
        %130 = sbr.rel (%p128) target = $region24
      $region23: #{_lambda_.7} parent=5 // pred_region
        // Predicated region
        $region25: #{_lambda_.7} parent=23 // pred_check
          %p131 = pneg %p32
        $region26: #{_lambda_.7} parent=23 // pred_check_branch
          %133 = sbr.rel (%p131) target = $region28
        $region27: #{_lambda_.7} parent=23 // pred_region
          %p134 = scmp.lt.s32.totalorder %s12, 1
          %s135 = scalar_select %p134, %s12, 1
          %s136 = smul.addr %s135, 18
          %s137 = smul.addr %s136, 4
          %s138 = scalar_lea.vmem %s0, %s137
        $region28: #{_lambda_.7} parent=23 // pred_fallthru
          _
      $region24: #{_lambda_.7} parent=5 // pred_fallthru
        _
      %p139 = scmp.le.s32.totalorder 1, %s12
      %p140 = scmp.lt.s32.totalorder %s12, 3
      %p141 = pnand %p139, %p140
      %p142 = pneg %p141
      // Predicated region
      $region29: #{_lambda_.7} parent=5 // pred_check
        _
      $region30: #{_lambda_.7} parent=5 // pred_check_branch
        %144 = sbr.rel (%p141) target = $region32
      $region31: #{_lambda_.7} parent=5 // pred_region
        %s145 = ssub.s32 %s12, 1
        %p146 = scmp.lt.s32.totalorder %s17, 1
        %s147 = scalar_select %p146, %s17, 1
        %s148 = smul.addr %s147, 18
        %s149 = smul.addr %s148, 4
        %s150 = scalar_lea.vmem %s0, %s149
        %p151 = pneg %p38
        %p152 = pneg %p35
        %p153 = pneg %p59
        %p154 = pneg %p56
        %p155 = pneg %p80
        %p156 = pneg %p77
        %p157 = pneg %p106
        %p158 = pneg %p103
        %s159 = sand.u32 %s93, 1
        %s160 = scalar_lea.sflag [#allocation3], %s159
        %s161 = sand.u32 %s93, 1
        %s162 = scalar_lea.vmem [#allocation2], %s161
        %p163 = scmp.lt.s32.totalorder %s17, 1
        %s164 = scalar_select %p163, %s17, 1
        %s165 = smul.addr %s164, 18
        %s166 = smul.addr %s165, 4
        %s167 = scalar_lea.vmem %s0, %s166
        %v169 = vld [vmem:[%s167] sm:$0xff]
        %v170 = vld [vmem:[%s167 + $0x8] sm:$0xff]
        %v171 = vld [vmem:[%s167 + $0x10] sm:$0xff]
        %v172 = vld [vmem:[%s167 + $0x18] sm:$0xff]
        %v173 = vld [vmem:[%s167 + $0x20] sm:$0xff]
        %v174 = vld [vmem:[%s167 + $0x28] sm:$0xff]
        %v175 = vld [vmem:[%s167 + $0x30] sm:$0xff]
        %v176 = vld [vmem:[%s167 + $0x38] sm:$0xff]
        %v177 = vld [vmem:[%s167 + $0x40] sm:$0xff]
        %v178 = vld [vmem:[%s1] sm:$0xf]
        %v179 = vld [vmem:[%s1 + $0x4] sm:$0xf]
        %v180 = vld [vmem:[%s1 + $0x8] sm:$0xf]
        %v181 = vld [vmem:[%s1 + $0xc] sm:$0xf]
        %v182 = vld [vmem:[%s1 + $0x10] sm:$0xf]
        %v183 = vld [vmem:[%s1 + $0x14] sm:$0xf]
        %v184 = vld [vmem:[%s1 + $0x18] sm:$0xf]
        %v185 = vld [vmem:[%s1 + $0x1c] sm:$0xf]
        %v186 = vld [vmem:[%s1 + $0x20] sm:$0xf]
        %v187 = vld [vmem:[%s1 + $0x24] sm:$0xf]
        %v188 = vld [vmem:[%s1 + $0x28] sm:$0xf]
        %v189 = vld [vmem:[%s1 + $0x2c] sm:$0xf]
        %v190 = vld [vmem:[%s1 + $0x30] sm:$0xf]
        %v191 = vld [vmem:[%s1 + $0x34] sm:$0xf]
        %v192 = vld [vmem:[%s1 + $0x38] sm:$0xf]
        %v193 = vld [vmem:[%s1 + $0x3c] sm:$0xf]
        %v194 = vld [vmem:[%s1 + $0x40] sm:$0xf]
        %v195 = vld [vmem:[%s1 + $0x44] sm:$0xf]
        %v196 = vld [vmem:[%s1 + $0x48] sm:$0xf]
        %v197 = vld [vmem:[%s1 + $0x4c] sm:$0xf]
        %v198 = vld [vmem:[%s1 + $0x50] sm:$0xf]
        %v199 = vld [vmem:[%s1 + $0x54] sm:$0xf]
        %v200 = vld [vmem:[%s1 + $0x58] sm:$0xf]
        %v201 = vld [vmem:[%s1 + $0x5c] sm:$0xf]
        %v202 = vld [vmem:[%s1 + $0x60] sm:$0xf]
        %v203 = vld [vmem:[%s1 + $0x64] sm:$0xf]
        %v204 = vld [vmem:[%s1 + $0x68] sm:$0xf]
        %v205 = vld [vmem:[%s1 + $0x6c] sm:$0xf]
        %v206 = vld [vmem:[%s1 + $0x70] sm:$0xf]
        %v207 = vld [vmem:[%s1 + $0x74] sm:$0xf]
        %v208 = vld [vmem:[%s1 + $0x78] sm:$0xf]
        %v209 = vld [vmem:[%s1 + $0x7c] sm:$0xf]
        %v210 = vld [vmem:[%s1 + $0x80] sm:$0xf]
        %v211 = vld [vmem:[%s1 + $0x84] sm:$0xf]
        %v212 = vld [vmem:[%s1 + $0x88] sm:$0xf]
        %v213 = vld [vmem:[%s1 + $0x8c] sm:$0xf]
        %v214 = vld [vmem:[%s1 + $0x90] sm:$0xf]
        %v215 = vld [vmem:[%s1 + $0x94] sm:$0xf]
        %v216 = vld [vmem:[%s1 + $0x98] sm:$0xf]
        %v217 = vld [vmem:[%s1 + $0x9c] sm:$0xf]
        %v218 = vld [vmem:[%s1 + $0xa0] sm:$0xf]
        %v219 = vld [vmem:[%s1 + $0xa4] sm:$0xf]
        %v220 = vld [vmem:[%s1 + $0xa8] sm:$0xf]
        %v221 = vld [vmem:[%s1 + $0xac] sm:$0xf]
        %v222 = vld [vmem:[%s1 + $0xb0] sm:$0xf]
        %v223 = vld [vmem:[%s1 + $0xb4] sm:$0xf]
        %v224 = vld [vmem:[%s1 + $0xb8] sm:$0xf]
        %v225 = vld [vmem:[%s1 + $0xbc] sm:$0xf]
        %v226 = vld [vmem:[%s1 + $0xc0] sm:$0xf]
        %v227 = vld [vmem:[%s1 + $0xc4] sm:$0xf]
        %v228 = vld [vmem:[%s1 + $0xc8] sm:$0xf]
        %v229 = vld [vmem:[%s1 + $0xcc] sm:$0xf]
        %v230 = vld [vmem:[%s1 + $0xd0] sm:$0xf]
        %v231 = vld [vmem:[%s1 + $0xd4] sm:$0xf]
        %v232 = vld [vmem:[%s1 + $0xd8] sm:$0xf]
        %v233 = vld [vmem:[%s1 + $0xdc] sm:$0xf]
        %v234 = vld [vmem:[%s1 + $0xe0] sm:$0xf]
        %v235 = vld [vmem:[%s1 + $0xe4] sm:$0xf]
        %v236 = vld [vmem:[%s1 + $0xe8] sm:$0xf]
        %v237 = vld [vmem:[%s1 + $0xec] sm:$0xf]
        %v238 = vld [vmem:[%s1 + $0xf0] sm:$0xf]
        %v239 = vld [vmem:[%s1 + $0xf4] sm:$0xf]
        %v240 = vld [vmem:[%s1 + $0xf8] sm:$0xf]
        %v241 = vld [vmem:[%s1 + $0xfc] sm:$0xf]
        %v242 = vld [vmem:[%s1 + $0x100] sm:$0xf]
        %v243 = vld [vmem:[%s1 + $0x104] sm:$0xf]
        %v244 = vld [vmem:[%s1 + $0x108] sm:$0xf]
        %v245 = vld [vmem:[%s1 + $0x10c] sm:$0xf]
        %v246 = vld [vmem:[%s1 + $0x110] sm:$0xf]
        %v247 = vld [vmem:[%s1 + $0x114] sm:$0xf]
        %v248 = vld [vmem:[%s1 + $0x118] sm:$0xf]
        %v249 = vld [vmem:[%s1 + $0x11c] sm:$0xf]
        %v250 = vld [vmem:[%s1 + $0x120] sm:$0xf]
        %v251 = vld [vmem:[%s1 + $0x124] sm:$0xf]
        %v252 = vld [vmem:[%s1 + $0x128] sm:$0xf]
        %v253 = vld [vmem:[%s1 + $0x12c] sm:$0xf]
        %v254 = vld [vmem:[%s1 + $0x130] sm:$0xf]
        %v255 = vld [vmem:[%s1 + $0x134] sm:$0xf]
        %v256 = vld [vmem:[%s1 + $0x138] sm:$0xf]
        %v257 = vld [vmem:[%s1 + $0x13c] sm:$0xf]
        %v258 = vld [vmem:[%s1 + $0x140] sm:$0xf]
        %v259 = vld [vmem:[%s1 + $0x144] sm:$0xf]
        %v260 = vld [vmem:[%s1 + $0x148] sm:$0xf]
        %v261 = vld [vmem:[%s1 + $0x14c] sm:$0xf]
        %v262 = vld [vmem:[%s1 + $0x150] sm:$0xf]
        %v263 = vld [vmem:[%s1 + $0x154] sm:$0xf]
        %v264 = vld [vmem:[%s1 + $0x158] sm:$0xf]
        %v265 = vld [vmem:[%s1 + $0x15c] sm:$0xf]
        %v266 = vld [vmem:[%s1 + $0x160] sm:$0xf]
        %v267 = vld [vmem:[%s1 + $0x164] sm:$0xf]
        %v268 = vld [vmem:[%s1 + $0x168] sm:$0xf]
        %v269 = vld [vmem:[%s1 + $0x16c] sm:$0xf]
        %v270 = vld [vmem:[%s1 + $0x170] sm:$0xf]
        %v271 = vld [vmem:[%s1 + $0x174] sm:$0xf]
        %v272 = vld [vmem:[%s1 + $0x178] sm:$0xf]
        %v273 = vld [vmem:[%s1 + $0x17c] sm:$0xf]
        %v274 = vld [vmem:[%s1 + $0x180] sm:$0xf]
        %v275 = vld [vmem:[%s1 + $0x184] sm:$0xf]
        %v276 = vld [vmem:[%s1 + $0x188] sm:$0xf]
        %v277 = vld [vmem:[%s1 + $0x18c] sm:$0xf]
        %v278 = vld [vmem:[%s1 + $0x190] sm:$0xf]
        %v279 = vld [vmem:[%s1 + $0x194] sm:$0xf]
        %v280 = vld [vmem:[%s1 + $0x198] sm:$0xf]
        %v281 = vld [vmem:[%s1 + $0x19c] sm:$0xf]
        %v282 = vld [vmem:[%s1 + $0x1a0] sm:$0xf]
        %v283 = vld [vmem:[%s1 + $0x1a4] sm:$0xf]
        %v284 = vld [vmem:[%s1 + $0x1a8] sm:$0xf]
        %v285 = vld [vmem:[%s1 + $0x1ac] sm:$0xf]
        %v286 = vld [vmem:[%s1 + $0x1b0] sm:$0xf]
        %v287 = vld [vmem:[%s1 + $0x1b4] sm:$0xf]
        %v288 = vld [vmem:[%s1 + $0x1b8] sm:$0xf]
        %v289 = vld [vmem:[%s1 + $0x1bc] sm:$0xf]
        %v290 = vld [vmem:[%s1 + $0x1c0] sm:$0xf]
        %v291 = vld [vmem:[%s1 + $0x1c4] sm:$0xf]
        %v292 = vld [vmem:[%s1 + $0x1c8] sm:$0xf]
        %v293 = vld [vmem:[%s1 + $0x1cc] sm:$0xf]
        %v294 = vld [vmem:[%s1 + $0x1d0] sm:$0xf]
        %v295 = vld [vmem:[%s1 + $0x1d4] sm:$0xf]
        %v296 = vld [vmem:[%s1 + $0x1d8] sm:$0xf]
        %v297 = vld [vmem:[%s1 + $0x1dc] sm:$0xf]
        %v298 = vld [vmem:[%s1 + $0x1e0] sm:$0xf]
        %v299 = vld [vmem:[%s1 + $0x1e4] sm:$0xf]
        %v300 = vld [vmem:[%s1 + $0x1e8] sm:$0xf]
        %v301 = vld [vmem:[%s1 + $0x1ec] sm:$0xf]
        %v302 = vld [vmem:[%s1 + $0x1f0] sm:$0xf]
        %v303 = vld [vmem:[%s1 + $0x1f4] sm:$0xf]
        %v304 = vld [vmem:[%s1 + $0x1f8] sm:$0xf]
        %v305 = vld [vmem:[%s1 + $0x1fc] sm:$0xf]
        %v306 = vld [vmem:[%s1 + $0x200] sm:$0xf]
        %v307 = vld [vmem:[%s1 + $0x204] sm:$0xf]
        %v308 = vld [vmem:[%s1 + $0x208] sm:$0xf]
        %v309 = vld [vmem:[%s1 + $0x20c] sm:$0xf]
        %v310 = vld [vmem:[%s1 + $0x210] sm:$0xf]
        %v311 = vld [vmem:[%s1 + $0x214] sm:$0xf]
        %v312 = vld [vmem:[%s1 + $0x218] sm:$0xf]
        %v313 = vld [vmem:[%s1 + $0x21c] sm:$0xf]
        %v314 = vld [vmem:[%s1 + $0x220] sm:$0xf]
        %v315 = vld [vmem:[%s1 + $0x224] sm:$0xf]
        %v316 = vld [vmem:[%s1 + $0x228] sm:$0xf]
        %v317 = vld [vmem:[%s1 + $0x22c] sm:$0xf]
        %v318 = vld [vmem:[%s1 + $0x230] sm:$0xf]
        %v319 = vld [vmem:[%s1 + $0x234] sm:$0xf]
        %v320 = vld [vmem:[%s1 + $0x238] sm:$0xf]
        %v321 = vld [vmem:[%s1 + $0x23c] sm:$0xf]
        %v322 = vld [vmem:[%s1 + $0x240] sm:$0xf]
        %v323 = vld [vmem:[%s1 + $0x244] sm:$0xf]
        %v324 = vld [vmem:[%s1 + $0x248] sm:$0xf]
        %v325 = vld [vmem:[%s1 + $0x24c] sm:$0xf]
        %v326 = vld [vmem:[%s1 + $0x250] sm:$0xf]
        %v327 = vld [vmem:[%s1 + $0x254] sm:$0xf]
        %v328 = vld [vmem:[%s1 + $0x258] sm:$0xf]
        %v329 = vld [vmem:[%s1 + $0x25c] sm:$0xf]
        %v330 = vld [vmem:[%s1 + $0x260] sm:$0xf]
        %v331 = vld [vmem:[%s1 + $0x264] sm:$0xf]
        %v332 = vld [vmem:[%s1 + $0x268] sm:$0xf]
        %v333 = vld [vmem:[%s1 + $0x26c] sm:$0xf]
        %v334 = vld [vmem:[%s1 + $0x270] sm:$0xf]
        %v335 = vld [vmem:[%s1 + $0x274] sm:$0xf]
        %v336 = vld [vmem:[%s1 + $0x278] sm:$0xf]
        %v337 = vld [vmem:[%s1 + $0x27c] sm:$0xf]
        %v338 = vld [vmem:[%s1 + $0x280] sm:$0xf]
        %v339 = vld [vmem:[%s1 + $0x284] sm:$0xf]
        %v340 = vld [vmem:[%s1 + $0x288] sm:$0xf]
        %v341 = vld [vmem:[%s1 + $0x28c] sm:$0xf]
        %v342 = vld [vmem:[%s1 + $0x290] sm:$0xf]
        %v343 = vld [vmem:[%s1 + $0x294] sm:$0xf]
        %v344 = vld [vmem:[%s1 + $0x298] sm:$0xf]
        %v345 = vld [vmem:[%s1 + $0x29c] sm:$0xf]
        %v346 = vld [vmem:[%s1 + $0x2a0] sm:$0xf]
        %v347 = vld [vmem:[%s1 + $0x2a4] sm:$0xf]
        %v348 = vld [vmem:[%s1 + $0x2a8] sm:$0xf]
        %v349 = vld [vmem:[%s1 + $0x2ac] sm:$0xf]
        %v350 = vld [vmem:[%s1 + $0x2b0] sm:$0xf]
        %v351 = vld [vmem:[%s1 + $0x2b4] sm:$0xf]
        %v352 = vld [vmem:[%s1 + $0x2b8] sm:$0xf]
        %v353 = vld [vmem:[%s1 + $0x2bc] sm:$0xf]
        %v354 = vld [vmem:[%s1 + $0x2c0] sm:$0xf]
        %v355 = vld [vmem:[%s1 + $0x2c4] sm:$0xf]
        %v356 = vld [vmem:[%s1 + $0x2c8] sm:$0xf]
        %v357 = vld [vmem:[%s1 + $0x2cc] sm:$0xf]
        %v358 = vld [vmem:[%s1 + $0x2d0] sm:$0xf]
        %v359 = vld [vmem:[%s1 + $0x2d4] sm:$0xf]
        %v360 = vld [vmem:[%s1 + $0x2d8] sm:$0xf]
        %v361 = vld [vmem:[%s1 + $0x2dc] sm:$0xf]
        %v362 = vld [vmem:[%s1 + $0x2e0] sm:$0xf]
        %v363 = vld [vmem:[%s1 + $0x2e4] sm:$0xf]
        %v364 = vld [vmem:[%s1 + $0x2e8] sm:$0xf]
        %v365 = vld [vmem:[%s1 + $0x2ec] sm:$0xf]
        %v366 = vld [vmem:[%s1 + $0x2f0] sm:$0xf]
        %v367 = vld [vmem:[%s1 + $0x2f4] sm:$0xf]
        %v368 = vld [vmem:[%s1 + $0x2f8] sm:$0xf]
        %v369 = vld [vmem:[%s1 + $0x2fc] sm:$0xf]
        %v370 = vld [vmem:[%s1 + $0x300] sm:$0xf]
        %v371 = vld [vmem:[%s1 + $0x304] sm:$0xf]
        %v372 = vld [vmem:[%s1 + $0x308] sm:$0xf]
        %v373 = vld [vmem:[%s1 + $0x30c] sm:$0xf]
        %v374 = vld [vmem:[%s1 + $0x310] sm:$0xf]
        %v375 = vld [vmem:[%s1 + $0x314] sm:$0xf]
        %v376 = vld [vmem:[%s1 + $0x318] sm:$0xf]
        %v377 = vld [vmem:[%s1 + $0x31c] sm:$0xf]
        %v378 = vld [vmem:[%s1 + $0x320] sm:$0xf]
        %v379 = vld [vmem:[%s1 + $0x324] sm:$0xf]
        %v380 = vld [vmem:[%s1 + $0x328] sm:$0xf]
        %v381 = vld [vmem:[%s1 + $0x32c] sm:$0xf]
        %v382 = vld [vmem:[%s1 + $0x330] sm:$0xf]
        %v383 = vld [vmem:[%s1 + $0x334] sm:$0xf]
        %v384 = vld [vmem:[%s1 + $0x338] sm:$0xf]
        %v385 = vld [vmem:[%s1 + $0x33c] sm:$0xf]
        %v386 = vld [vmem:[%s1 + $0x340] sm:$0xf]
        %v387 = vld [vmem:[%s1 + $0x344] sm:$0xf]
        %v388 = vld [vmem:[%s1 + $0x348] sm:$0xf]
        %v389 = vld [vmem:[%s1 + $0x34c] sm:$0xf]
        %v390 = vld [vmem:[%s1 + $0x350] sm:$0xf]
        %v391 = vld [vmem:[%s1 + $0x354] sm:$0xf]
        %v392 = vld [vmem:[%s1 + $0x358] sm:$0xf]
        %v393 = vld [vmem:[%s1 + $0x35c] sm:$0xf]
        %v394 = vld [vmem:[%s1 + $0x360] sm:$0xf]
        %v395 = vld [vmem:[%s1 + $0x364] sm:$0xf]
        %v396 = vld [vmem:[%s1 + $0x368] sm:$0xf]
        %v397 = vld [vmem:[%s1 + $0x36c] sm:$0xf]
        %v398 = vld [vmem:[%s1 + $0x370] sm:$0xf]
        %v399 = vld [vmem:[%s1 + $0x374] sm:$0xf]
        %v400 = vld [vmem:[%s1 + $0x378] sm:$0xf]
        %v401 = vld [vmem:[%s1 + $0x37c] sm:$0xf]
        %v402 = vld [vmem:[%s1 + $0x380] sm:$0xf]
        %v403 = vld [vmem:[%s1 + $0x384] sm:$0xf]
        %v404 = vld [vmem:[%s1 + $0x388] sm:$0xf]
        %v405 = vld [vmem:[%s1 + $0x38c] sm:$0xf]
        %v406 = vld [vmem:[%s1 + $0x390] sm:$0xf]
        %v407 = vld [vmem:[%s1 + $0x394] sm:$0xf]
        %v408 = vld [vmem:[%s1 + $0x398] sm:$0xf]
        %v409 = vld [vmem:[%s1 + $0x39c] sm:$0xf]
        %v410 = vld [vmem:[%s1 + $0x3a0] sm:$0xf]
        %v411 = vld [vmem:[%s1 + $0x3a4] sm:$0xf]
        %v412 = vld [vmem:[%s1 + $0x3a8] sm:$0xf]
        %v413 = vld [vmem:[%s1 + $0x3ac] sm:$0xf]
        %v414 = vld [vmem:[%s1 + $0x3b0] sm:$0xf]
        %v415 = vld [vmem:[%s1 + $0x3b4] sm:$0xf]
        %v416 = vld [vmem:[%s1 + $0x3b8] sm:$0xf]
        %v417 = vld [vmem:[%s1 + $0x3bc] sm:$0xf]
        %v418 = vld [vmem:[%s1 + $0x3c0] sm:$0xf]
        %v419 = vld [vmem:[%s1 + $0x3c4] sm:$0xf]
        %v420 = vld [vmem:[%s1 + $0x3c8] sm:$0xf]
        %v421 = vld [vmem:[%s1 + $0x3cc] sm:$0xf]
        %v422 = vld [vmem:[%s1 + $0x3d0] sm:$0xf]
        %v423 = vld [vmem:[%s1 + $0x3d4] sm:$0xf]
        %v424 = vld [vmem:[%s1 + $0x3d8] sm:$0xf]
        %v425 = vld [vmem:[%s1 + $0x3dc] sm:$0xf]
        %v426 = vld [vmem:[%s1 + $0x3e0] sm:$0xf]
        %v427 = vld [vmem:[%s1 + $0x3e4] sm:$0xf]
        %v428 = vld [vmem:[%s1 + $0x3e8] sm:$0xf]
        %v429 = vld [vmem:[%s1 + $0x3ec] sm:$0xf]
        %v430 = vld [vmem:[%s1 + $0x3f0] sm:$0xf]
        %v431 = vld [vmem:[%s1 + $0x3f4] sm:$0xf]
        %v432 = vld [vmem:[%s1 + $0x3f8] sm:$0xf]
        %v433 = vld [vmem:[%s1 + $0x3fc] sm:$0xf]
        %v434 = vld [vmem:[%s1 + $0x400] sm:$0xf]
        %v435 = vld [vmem:[%s1 + $0x404] sm:$0xf]
        %v436 = vld [vmem:[%s1 + $0x408] sm:$0xf]
        %v437 = vld [vmem:[%s1 + $0x40c] sm:$0xf]
        %v438 = vld [vmem:[%s1 + $0x410] sm:$0xf]
        %v439 = vld [vmem:[%s1 + $0x414] sm:$0xf]
        %v440 = vld [vmem:[%s1 + $0x418] sm:$0xf]
        %v441 = vld [vmem:[%s1 + $0x41c] sm:$0xf]
        %v442 = vld [vmem:[%s1 + $0x420] sm:$0xf]
        %v443 = vld [vmem:[%s1 + $0x424] sm:$0xf]
        %v444 = vld [vmem:[%s1 + $0x428] sm:$0xf]
        %v445 = vld [vmem:[%s1 + $0x42c] sm:$0xf]
        %v446 = vld [vmem:[%s1 + $0x430] sm:$0xf]
        %v447 = vld [vmem:[%s1 + $0x434] sm:$0xf]
        %v448 = vld [vmem:[%s1 + $0x438] sm:$0xf]
        %v449 = vld [vmem:[%s1 + $0x43c] sm:$0xf]
        %v450 = vld [vmem:[%s1 + $0x440] sm:$0xf]
        %v451 = vld [vmem:[%s1 + $0x444] sm:$0xf]
        %v452 = vld [vmem:[%s1 + $0x448] sm:$0xf]
        %v453 = vld [vmem:[%s1 + $0x44c] sm:$0xf]
        %v454 = vld [vmem:[%s1 + $0x450] sm:$0xf]
        %v455 = vld [vmem:[%s1 + $0x454] sm:$0xf]
        %v456 = vld [vmem:[%s1 + $0x458] sm:$0xf]
        %v457 = vld [vmem:[%s1 + $0x45c] sm:$0xf]
        %v458 = vld [vmem:[%s1 + $0x460] sm:$0xf]
        %v459 = vld [vmem:[%s1 + $0x464] sm:$0xf]
        %v460 = vld [vmem:[%s1 + $0x468] sm:$0xf]
        %v461 = vld [vmem:[%s1 + $0x46c] sm:$0xf]
        %v462 = vld [vmem:[%s1 + $0x470] sm:$0xf]
        %v463 = vld [vmem:[%s1 + $0x474] sm:$0xf]
        %v464 = vld [vmem:[%s1 + $0x478] sm:$0xf]
        %v465 = vld [vmem:[%s1 + $0x47c] sm:$0xf]
        %v466 = vld [vmem:[%s2] sm:$0x1]
        %v468 = vlaneseq
        %v469 = vshrl.u32 %v468, 7
        %v470 = vsub.s32 0, %v469
        %v471 = vrot.slane %v466, %v470
        %v482 = vunpack.c.l.b16 %v169
        %v483 = vunpack.c.h.b16 %v169
        %v484 = vunpack.c.l.b16 %v170
        %v485 = vunpack.c.h.b16 %v170
        %v486 = vunpack.c.l.b16 %v171
        %v487 = vunpack.c.h.b16 %v171
        %v488 = vunpack.c.l.b16 %v172
        %v489 = vunpack.c.h.b16 %v172
        %v490 = vunpack.c.l.b16 %v173
        %v491 = vunpack.c.h.b16 %v173
        %v492 = vunpack.c.l.b16 %v174
        %v493 = vunpack.c.h.b16 %v174
        %v494 = vunpack.c.l.b16 %v175
        %v495 = vunpack.c.h.b16 %v175
        %v496 = vunpack.c.l.b16 %v176
        %v497 = vunpack.c.h.b16 %v176
        %v498 = vunpack.c.l.b16 %v177
        %v499 = vunpack.c.h.b16 %v177
        %v500 = vpack.c.b16 %v482, %v482
        %v501 = vpack.c.b16 %v483, %v483
        %v502 = vpack.c.b16 %v484, %v484
        %v503 = vpack.c.b16 %v485, %v485
        %v504 = vpack.c.b16 %v486, %v486
        %v505 = vpack.c.b16 %v487, %v487
        %v506 = vpack.c.b16 %v488, %v488
        %v507 = vpack.c.b16 %v489, %v489
        %v508 = vpack.c.b16 %v490, %v490
        %v509 = vpack.c.b16 %v491, %v491
        %v510 = vpack.c.b16 %v492, %v492
        %v511 = vpack.c.b16 %v493, %v493
        %v512 = vpack.c.b16 %v494, %v494
        %v513 = vpack.c.b16 %v495, %v495
        %v514 = vpack.c.b16 %v496, %v496
        %v515 = vpack.c.b16 %v497, %v497
        %v516 = vpack.c.b16 %v498, %v498
        %v517 = vpack.c.b16 %v499, %v499
        %v824 = vunpack.c.l.b16 %v178
        %v825 = vunpack.c.l.b16 %v179
        %v826 = vunpack.c.l.b16 %v180
        %v827 = vunpack.c.l.b16 %v181
        %v828 = vunpack.c.l.b16 %v182
        %v829 = vunpack.c.l.b16 %v183
        %v830 = vunpack.c.l.b16 %v184
        %v831 = vunpack.c.l.b16 %v185
        %v832 = vunpack.c.l.b16 %v186
        %v833 = vunpack.c.l.b16 %v187
        %v834 = vunpack.c.l.b16 %v188
        %v835 = vunpack.c.l.b16 %v189
        %v836 = vunpack.c.l.b16 %v190
        %v837 = vunpack.c.l.b16 %v191
        %v838 = vunpack.c.l.b16 %v192
        %v839 = vunpack.c.l.b16 %v193
        %v840 = vunpack.c.l.b16 %v194
        %v841 = vunpack.c.l.b16 %v195
        %v842 = vunpack.c.l.b16 %v196
        %v843 = vunpack.c.l.b16 %v197
        %v844 = vunpack.c.l.b16 %v198
        %v845 = vunpack.c.l.b16 %v199
        %v846 = vunpack.c.l.b16 %v200
        %v847 = vunpack.c.l.b16 %v201
        %v848 = vunpack.c.l.b16 %v202
        %v849 = vunpack.c.l.b16 %v203
        %v850 = vunpack.c.l.b16 %v204
        %v851 = vunpack.c.l.b16 %v205
        %v852 = vunpack.c.l.b16 %v206
        %v853 = vunpack.c.l.b16 %v207
        %v854 = vunpack.c.l.b16 %v208
        %v855 = vunpack.c.l.b16 %v209
        %v856 = vunpack.c.l.b16 %v210
        %v857 = vunpack.c.l.b16 %v211
        %v858 = vunpack.c.l.b16 %v212
        %v859 = vunpack.c.l.b16 %v213
        %v860 = vunpack.c.l.b16 %v214
        %v861 = vunpack.c.l.b16 %v215
        %v862 = vunpack.c.l.b16 %v216
        %v863 = vunpack.c.l.b16 %v217
        %v864 = vunpack.c.l.b16 %v218
        %v865 = vunpack.c.l.b16 %v219
        %v866 = vunpack.c.l.b16 %v220
        %v867 = vunpack.c.l.b16 %v221
        %v868 = vunpack.c.l.b16 %v222
        %v869 = vunpack.c.l.b16 %v223
        %v870 = vunpack.c.l.b16 %v224
        %v871 = vunpack.c.l.b16 %v225
        %v872 = vunpack.c.l.b16 %v226
        %v873 = vunpack.c.l.b16 %v227
        %v874 = vunpack.c.l.b16 %v228
        %v875 = vunpack.c.l.b16 %v229
        %v876 = vunpack.c.l.b16 %v230
        %v877 = vunpack.c.l.b16 %v231
        %v878 = vunpack.c.l.b16 %v232
        %v879 = vunpack.c.l.b16 %v233
        %v880 = vunpack.c.l.b16 %v234
        %v881 = vunpack.c.l.b16 %v235
        %v882 = vunpack.c.l.b16 %v236
        %v883 = vunpack.c.l.b16 %v237
        %v884 = vunpack.c.l.b16 %v238
        %v885 = vunpack.c.l.b16 %v239
        %v886 = vunpack.c.l.b16 %v240
        %v887 = vunpack.c.l.b16 %v241
        %v888 = vunpack.c.l.b16 %v242
        %v889 = vunpack.c.l.b16 %v243
        %v890 = vunpack.c.l.b16 %v244
        %v891 = vunpack.c.l.b16 %v245
        %v892 = vunpack.c.l.b16 %v246
        %v893 = vunpack.c.l.b16 %v247
        %v894 = vunpack.c.l.b16 %v248
        %v895 = vunpack.c.l.b16 %v249
        %v896 = vunpack.c.l.b16 %v250
        %v897 = vunpack.c.l.b16 %v251
        %v898 = vunpack.c.l.b16 %v252
        %v899 = vunpack.c.l.b16 %v253
        %v900 = vunpack.c.l.b16 %v254
        %v901 = vunpack.c.l.b16 %v255
        %v902 = vunpack.c.l.b16 %v256
        %v903 = vunpack.c.l.b16 %v257
        %v904 = vunpack.c.l.b16 %v258
        %v905 = vunpack.c.l.b16 %v259
        %v906 = vunpack.c.l.b16 %v260
        %v907 = vunpack.c.l.b16 %v261
        %v908 = vunpack.c.l.b16 %v262
        %v909 = vunpack.c.l.b16 %v263
        %v910 = vunpack.c.l.b16 %v264
        %v911 = vunpack.c.l.b16 %v265
        %v912 = vunpack.c.l.b16 %v266
        %v913 = vunpack.c.l.b16 %v267
        %v914 = vunpack.c.l.b16 %v268
        %v915 = vunpack.c.l.b16 %v269
        %v916 = vunpack.c.l.b16 %v270
        %v917 = vunpack.c.l.b16 %v271
        %v918 = vunpack.c.l.b16 %v272
        %v919 = vunpack.c.l.b16 %v273
        %v920 = vunpack.c.l.b16 %v274
        %v921 = vunpack.c.l.b16 %v275
        %v922 = vunpack.c.l.b16 %v276
        %v923 = vunpack.c.l.b16 %v277
        %v924 = vunpack.c.l.b16 %v278
        %v925 = vunpack.c.l.b16 %v279
        %v926 = vunpack.c.l.b16 %v280
        %v927 = vunpack.c.l.b16 %v281
        %v928 = vunpack.c.l.b16 %v282
        %v929 = vunpack.c.l.b16 %v283
        %v930 = vunpack.c.l.b16 %v284
        %v931 = vunpack.c.l.b16 %v285
        %v932 = vunpack.c.l.b16 %v286
        %v933 = vunpack.c.l.b16 %v287
        %v934 = vunpack.c.l.b16 %v288
        %v935 = vunpack.c.l.b16 %v289
        %v936 = vunpack.c.l.b16 %v290
        %v937 = vunpack.c.l.b16 %v291
        %v938 = vunpack.c.l.b16 %v292
        %v939 = vunpack.c.l.b16 %v293
        %v940 = vunpack.c.l.b16 %v294
        %v941 = vunpack.c.l.b16 %v295
        %v942 = vunpack.c.l.b16 %v296
        %v943 = vunpack.c.l.b16 %v297
        %v944 = vunpack.c.l.b16 %v298
        %v945 = vunpack.c.l.b16 %v299
        %v946 = vunpack.c.l.b16 %v300
        %v947 = vunpack.c.l.b16 %v301
        %v948 = vunpack.c.l.b16 %v302
        %v949 = vunpack.c.l.b16 %v303
        %v950 = vunpack.c.l.b16 %v304
        %v951 = vunpack.c.l.b16 %v305
        %v952 = vunpack.c.l.b16 %v306
        %v953 = vunpack.c.l.b16 %v307
        %v954 = vunpack.c.l.b16 %v308
        %v955 = vunpack.c.l.b16 %v309
        %v956 = vunpack.c.l.b16 %v310
        %v957 = vunpack.c.l.b16 %v311
        %v958 = vunpack.c.l.b16 %v312
        %v959 = vunpack.c.l.b16 %v313
        %v960 = vunpack.c.l.b16 %v314
        %v961 = vunpack.c.l.b16 %v315
        %v962 = vunpack.c.l.b16 %v316
        %v963 = vunpack.c.l.b16 %v317
        %v964 = vunpack.c.l.b16 %v318
        %v965 = vunpack.c.l.b16 %v319
        %v966 = vunpack.c.l.b16 %v320
        %v967 = vunpack.c.l.b16 %v321
        %v968 = vunpack.c.l.b16 %v322
        %v969 = vunpack.c.l.b16 %v323
        %v970 = vunpack.c.l.b16 %v324
        %v971 = vunpack.c.l.b16 %v325
        %v972 = vunpack.c.l.b16 %v326
        %v973 = vunpack.c.l.b16 %v327
        %v974 = vunpack.c.l.b16 %v328
        %v975 = vunpack.c.l.b16 %v329
        %v976 = vunpack.c.l.b16 %v330
        %v977 = vunpack.c.l.b16 %v331
        %v978 = vunpack.c.l.b16 %v332
        %v979 = vunpack.c.l.b16 %v333
        %v980 = vunpack.c.l.b16 %v334
        %v981 = vunpack.c.l.b16 %v335
        %v982 = vunpack.c.l.b16 %v336
        %v983 = vunpack.c.l.b16 %v337
        %v984 = vunpack.c.l.b16 %v338
        %v985 = vunpack.c.l.b16 %v339
        %v986 = vunpack.c.l.b16 %v340
        %v987 = vunpack.c.l.b16 %v341
        %v988 = vunpack.c.l.b16 %v342
        %v989 = vunpack.c.l.b16 %v343
        %v990 = vunpack.c.l.b16 %v344
        %v991 = vunpack.c.l.b16 %v345
        %v992 = vunpack.c.l.b16 %v346
        %v993 = vunpack.c.l.b16 %v347
        %v994 = vunpack.c.l.b16 %v348
        %v995 = vunpack.c.l.b16 %v349
        %v996 = vunpack.c.l.b16 %v350
        %v997 = vunpack.c.l.b16 %v351
        %v998 = vunpack.c.l.b16 %v352
        %v999 = vunpack.c.l.b16 %v353
        %v1000 = vunpack.c.l.b16 %v354
        %v1001 = vunpack.c.l.b16 %v355
        %v1002 = vunpack.c.l.b16 %v356
        %v1003 = vunpack.c.l.b16 %v357
        %v1004 = vunpack.c.l.b16 %v358
        %v1005 = vunpack.c.l.b16 %v359
        %v1006 = vunpack.c.l.b16 %v360
        %v1007 = vunpack.c.l.b16 %v361
        %v1008 = vunpack.c.l.b16 %v362
        %v1009 = vunpack.c.l.b16 %v363
        %v1010 = vunpack.c.l.b16 %v364
        %v1011 = vunpack.c.l.b16 %v365
        %v1012 = vunpack.c.l.b16 %v366
        %v1013 = vunpack.c.l.b16 %v367
        %v1014 = vunpack.c.l.b16 %v368
        %v1015 = vunpack.c.l.b16 %v369
        %v1016 = vunpack.c.l.b16 %v370
        %v1017 = vunpack.c.l.b16 %v371
        %v1018 = vunpack.c.l.b16 %v372
        %v1019 = vunpack.c.l.b16 %v373
        %v1020 = vunpack.c.l.b16 %v374
        %v1021 = vunpack.c.l.b16 %v375
        %v1022 = vunpack.c.l.b16 %v376
        %v1023 = vunpack.c.l.b16 %v377
        %v1024 = vunpack.c.l.b16 %v378
        %v1025 = vunpack.c.l.b16 %v379
        %v1026 = vunpack.c.l.b16 %v380
        %v1027 = vunpack.c.l.b16 %v381
        %v1028 = vunpack.c.l.b16 %v382
        %v1029 = vunpack.c.l.b16 %v383
        %v1030 = vunpack.c.l.b16 %v384
        %v1031 = vunpack.c.l.b16 %v385
        %v1032 = vunpack.c.l.b16 %v386
        %v1033 = vunpack.c.l.b16 %v387
        %v1034 = vunpack.c.l.b16 %v388
        %v1035 = vunpack.c.l.b16 %v389
        %v1036 = vunpack.c.l.b16 %v390
        %v1037 = vunpack.c.l.b16 %v391
        %v1038 = vunpack.c.l.b16 %v392
        %v1039 = vunpack.c.l.b16 %v393
        %v1040 = vunpack.c.l.b16 %v394
        %v1041 = vunpack.c.l.b16 %v395
        %v1042 = vunpack.c.l.b16 %v396
        %v1043 = vunpack.c.l.b16 %v397
        %v1044 = vunpack.c.l.b16 %v398
        %v1045 = vunpack.c.l.b16 %v399
        %v1046 = vunpack.c.l.b16 %v400
        %v1047 = vunpack.c.l.b16 %v401
        %v1048 = vunpack.c.l.b16 %v402
        %v1049 = vunpack.c.l.b16 %v403
        %v1050 = vunpack.c.l.b16 %v404
        %v1051 = vunpack.c.l.b16 %v405
        %v1052 = vunpack.c.l.b16 %v406
        %v1053 = vunpack.c.l.b16 %v407
        %v1054 = vunpack.c.l.b16 %v408
        %v1055 = vunpack.c.l.b16 %v409
        %v1056 = vunpack.c.l.b16 %v410
        %v1057 = vunpack.c.l.b16 %v411
        %v1058 = vunpack.c.l.b16 %v412
        %v1059 = vunpack.c.l.b16 %v413
        %v1060 = vunpack.c.l.b16 %v414
        %v1061 = vunpack.c.l.b16 %v415
        %v1062 = vunpack.c.l.b16 %v416
        %v1063 = vunpack.c.l.b16 %v417
        %v1064 = vunpack.c.l.b16 %v418
        %v1065 = vunpack.c.l.b16 %v419
        %v1066 = vunpack.c.l.b16 %v420
        %v1067 = vunpack.c.l.b16 %v421
        %v1068 = vunpack.c.l.b16 %v422
        %v1069 = vunpack.c.l.b16 %v423
        %v1070 = vunpack.c.l.b16 %v424
        %v1071 = vunpack.c.l.b16 %v425
        %v1072 = vunpack.c.l.b16 %v426
        %v1073 = vunpack.c.l.b16 %v427
        %v1074 = vunpack.c.l.b16 %v428
        %v1075 = vunpack.c.l.b16 %v429
        %v1076 = vunpack.c.l.b16 %v430
        %v1077 = vunpack.c.l.b16 %v431
        %v1078 = vunpack.c.l.b16 %v432
        %v1079 = vunpack.c.l.b16 %v433
        %v1080 = vunpack.c.l.b16 %v434
        %v1081 = vunpack.c.l.b16 %v435
        %v1082 = vunpack.c.l.b16 %v436
        %v1083 = vunpack.c.l.b16 %v437
        %v1084 = vunpack.c.l.b16 %v438
        %v1085 = vunpack.c.l.b16 %v439
        %v1086 = vunpack.c.l.b16 %v440
        %v1087 = vunpack.c.l.b16 %v441
        %v1088 = vunpack.c.l.b16 %v442
        %v1089 = vunpack.c.l.b16 %v443
        %v1090 = vunpack.c.l.b16 %v444
        %v1091 = vunpack.c.l.b16 %v445
        %v1092 = vunpack.c.l.b16 %v446
        %v1093 = vunpack.c.l.b16 %v447
        %v1094 = vunpack.c.l.b16 %v448
        %v1095 = vunpack.c.l.b16 %v449
        %v1096 = vunpack.c.l.b16 %v450
        %v1097 = vunpack.c.l.b16 %v451
        %v1098 = vunpack.c.l.b16 %v452
        %v1099 = vunpack.c.l.b16 %v453
        %v1100 = vunpack.c.l.b16 %v454
        %v1101 = vunpack.c.l.b16 %v455
        %v1102 = vunpack.c.l.b16 %v456
        %v1103 = vunpack.c.l.b16 %v457
        %v1104 = vunpack.c.l.b16 %v458
        %v1105 = vunpack.c.l.b16 %v459
        %v1106 = vunpack.c.l.b16 %v460
        %v1107 = vunpack.c.l.b16 %v461
        %v1108 = vunpack.c.l.b16 %v462
        %v1109 = vunpack.c.l.b16 %v463
        %v1110 = vunpack.c.l.b16 %v464
        %v1111 = vunpack.c.l.b16 %v465
        %v1112 = vpack.c.b16 %v825, %v824
        %v1113 = vpack.c.b16 %v827, %v826
        %v1114 = vpack.c.b16 %v829, %v828
        %v1115 = vpack.c.b16 %v831, %v830
        %v1116 = vpack.c.b16 %v833, %v832
        %v1117 = vpack.c.b16 %v835, %v834
        %v1118 = vpack.c.b16 %v837, %v836
        %v1119 = vpack.c.b16 %v839, %v838
        %v1120 = vpack.c.b16 %v841, %v840
        %v1121 = vpack.c.b16 %v843, %v842
        %v1122 = vpack.c.b16 %v845, %v844
        %v1123 = vpack.c.b16 %v847, %v846
        %v1124 = vpack.c.b16 %v849, %v848
        %v1125 = vpack.c.b16 %v851, %v850
        %v1126 = vpack.c.b16 %v853, %v852
        %v1127 = vpack.c.b16 %v855, %v854
        %v1128 = vpack.c.b16 %v857, %v856
        %v1129 = vpack.c.b16 %v859, %v858
        %v1130 = vpack.c.b16 %v861, %v860
        %v1131 = vpack.c.b16 %v863, %v862
        %v1132 = vpack.c.b16 %v865, %v864
        %v1133 = vpack.c.b16 %v867, %v866
        %v1134 = vpack.c.b16 %v869, %v868
        %v1135 = vpack.c.b16 %v871, %v870
        %v1136 = vpack.c.b16 %v873, %v872
        %v1137 = vpack.c.b16 %v875, %v874
        %v1138 = vpack.c.b16 %v877, %v876
        %v1139 = vpack.c.b16 %v879, %v878
        %v1140 = vpack.c.b16 %v881, %v880
        %v1141 = vpack.c.b16 %v883, %v882
        %v1142 = vpack.c.b16 %v885, %v884
        %v1143 = vpack.c.b16 %v887, %v886
        %v1144 = vpack.c.b16 %v889, %v888
        %v1145 = vpack.c.b16 %v891, %v890
        %v1146 = vpack.c.b16 %v893, %v892
        %v1147 = vpack.c.b16 %v895, %v894
        %v1148 = vpack.c.b16 %v897, %v896
        %v1149 = vpack.c.b16 %v899, %v898
        %v1150 = vpack.c.b16 %v901, %v900
        %v1151 = vpack.c.b16 %v903, %v902
        %v1152 = vpack.c.b16 %v905, %v904
        %v1153 = vpack.c.b16 %v907, %v906
        %v1154 = vpack.c.b16 %v909, %v908
        %v1155 = vpack.c.b16 %v911, %v910
        %v1156 = vpack.c.b16 %v913, %v912
        %v1157 = vpack.c.b16 %v915, %v914
        %v1158 = vpack.c.b16 %v917, %v916
        %v1159 = vpack.c.b16 %v919, %v918
        %v1160 = vpack.c.b16 %v921, %v920
        %v1161 = vpack.c.b16 %v923, %v922
        %v1162 = vpack.c.b16 %v925, %v924
        %v1163 = vpack.c.b16 %v927, %v926
        %v1164 = vpack.c.b16 %v929, %v928
        %v1165 = vpack.c.b16 %v931, %v930
        %v1166 = vpack.c.b16 %v933, %v932
        %v1167 = vpack.c.b16 %v935, %v934
        %v1168 = vpack.c.b16 %v937, %v936
        %v1169 = vpack.c.b16 %v939, %v938
        %v1170 = vpack.c.b16 %v941, %v940
        %v1171 = vpack.c.b16 %v943, %v942
        %v1172 = vpack.c.b16 %v945, %v944
        %v1173 = vpack.c.b16 %v947, %v946
        %v1174 = vpack.c.b16 %v949, %v948
        %v1175 = vpack.c.b16 %v951, %v950
        %v1176 = vpack.c.b16 %v953, %v952
        %v1177 = vpack.c.b16 %v955, %v954
        %v1178 = vpack.c.b16 %v957, %v956
        %v1179 = vpack.c.b16 %v959, %v958
        %v1180 = vpack.c.b16 %v961, %v960
        %v1181 = vpack.c.b16 %v963, %v962
        %v1182 = vpack.c.b16 %v965, %v964
        %v1183 = vpack.c.b16 %v967, %v966
        %v1184 = vpack.c.b16 %v969, %v968
        %v1185 = vpack.c.b16 %v971, %v970
        %v1186 = vpack.c.b16 %v973, %v972
        %v1187 = vpack.c.b16 %v975, %v974
        %v1188 = vpack.c.b16 %v977, %v976
        %v1189 = vpack.c.b16 %v979, %v978
        %v1190 = vpack.c.b16 %v981, %v980
        %v1191 = vpack.c.b16 %v983, %v982
        %v1192 = vpack.c.b16 %v985, %v984
        %v1193 = vpack.c.b16 %v987, %v986
        %v1194 = vpack.c.b16 %v989, %v988
        %v1195 = vpack.c.b16 %v991, %v990
        %v1196 = vpack.c.b16 %v993, %v992
        %v1197 = vpack.c.b16 %v995, %v994
        %v1198 = vpack.c.b16 %v997, %v996
        %v1199 = vpack.c.b16 %v999, %v998
        %v1200 = vpack.c.b16 %v1001, %v1000
        %v1201 = vpack.c.b16 %v1003, %v1002
        %v1202 = vpack.c.b16 %v1005, %v1004
        %v1203 = vpack.c.b16 %v1007, %v1006
        %v1204 = vpack.c.b16 %v1009, %v1008
        %v1205 = vpack.c.b16 %v1011, %v1010
        %v1206 = vpack.c.b16 %v1013, %v1012
        %v1207 = vpack.c.b16 %v1015, %v1014
        %v1208 = vpack.c.b16 %v1017, %v1016
        %v1209 = vpack.c.b16 %v1019, %v1018
        %v1210 = vpack.c.b16 %v1021, %v1020
        %v1211 = vpack.c.b16 %v1023, %v1022
        %v1212 = vpack.c.b16 %v1025, %v1024
        %v1213 = vpack.c.b16 %v1027, %v1026
        %v1214 = vpack.c.b16 %v1029, %v1028
        %v1215 = vpack.c.b16 %v1031, %v1030
        %v1216 = vpack.c.b16 %v1033, %v1032
        %v1217 = vpack.c.b16 %v1035, %v1034
        %v1218 = vpack.c.b16 %v1037, %v1036
        %v1219 = vpack.c.b16 %v1039, %v1038
        %v1220 = vpack.c.b16 %v1041, %v1040
        %v1221 = vpack.c.b16 %v1043, %v1042
        %v1222 = vpack.c.b16 %v1045, %v1044
        %v1223 = vpack.c.b16 %v1047, %v1046
        %v1224 = vpack.c.b16 %v1049, %v1048
        %v1225 = vpack.c.b16 %v1051, %v1050
        %v1226 = vpack.c.b16 %v1053, %v1052
        %v1227 = vpack.c.b16 %v1055, %v1054
        %v1228 = vpack.c.b16 %v1057, %v1056
        %v1229 = vpack.c.b16 %v1059, %v1058
        %v1230 = vpack.c.b16 %v1061, %v1060
        %v1231 = vpack.c.b16 %v1063, %v1062
        %v1232 = vpack.c.b16 %v1065, %v1064
        %v1233 = vpack.c.b16 %v1067, %v1066
        %v1234 = vpack.c.b16 %v1069, %v1068
        %v1235 = vpack.c.b16 %v1071, %v1070
        %v1236 = vpack.c.b16 %v1073, %v1072
        %v1237 = vpack.c.b16 %v1075, %v1074
        %v1238 = vpack.c.b16 %v1077, %v1076
        %v1239 = vpack.c.b16 %v1079, %v1078
        %v1240 = vpack.c.b16 %v1081, %v1080
        %v1241 = vpack.c.b16 %v1083, %v1082
        %v1242 = vpack.c.b16 %v1085, %v1084
        %v1243 = vpack.c.b16 %v1087, %v1086
        %v1244 = vpack.c.b16 %v1089, %v1088
        %v1245 = vpack.c.b16 %v1091, %v1090
        %v1246 = vpack.c.b16 %v1093, %v1092
        %v1247 = vpack.c.b16 %v1095, %v1094
        %v1248 = vpack.c.b16 %v1097, %v1096
        %v1249 = vpack.c.b16 %v1099, %v1098
        %v1250 = vpack.c.b16 %v1101, %v1100
        %v1251 = vpack.c.b16 %v1103, %v1102
        %v1252 = vpack.c.b16 %v1105, %v1104
        %v1253 = vpack.c.b16 %v1107, %v1106
        %v1254 = vpack.c.b16 %v1109, %v1108
        %v1255 = vpack.c.b16 %v1111, %v1110
        %1400 = vmatprep.subr.bf16.mxu0 0
        %1401 = vmatpush1.bf16.msra.mxu0 %v1119
        %1402 = vmatprep.subr.bf16.mxu0 0
        %1403 = vmatpush1.bf16.msra.mxu0 %v1118
        %1404 = vmatprep.subr.bf16.mxu0 0
        %1405 = vmatpush1.bf16.msra.mxu0 %v1117
        %1406 = vmatprep.subr.bf16.mxu0 0
        %1407 = vmatpush1.bf16.msra.mxu0 %v1116
        %1408 = vmatprep.subr.bf16.mxu0 0
        %1409 = vmatpush1.bf16.msra.mxu0 %v1115
        %1410 = vmatprep.subr.bf16.mxu0 0
        %1411 = vmatpush1.bf16.msra.mxu0 %v1114
        %1412 = vmatprep.subr.bf16.mxu0 0
        %1413 = vmatpush1.bf16.msra.mxu0 %v1113
        %1414 = vmatprep.subr.bf16.mxu0 0
        %1415 = vmatpush1.bf16.msra.mxu0 %v1112
        %1416 = vmatprep.subr.bf16.mxu0 0
        %1417 = vmatpush2.bf16.msra.mxu0 %v1127
        %1418 = vmatprep.subr.bf16.mxu0 0
        %1419 = vmatpush2.bf16.msra.mxu0 %v1126
        %1420 = vmatprep.subr.bf16.mxu0 0
        %1421 = vmatpush2.bf16.msra.mxu0 %v1125
        %1422 = vmatprep.subr.bf16.mxu0 0
        %1423 = vmatpush2.bf16.msra.mxu0 %v1124
        %1424 = vmatprep.subr.bf16.mxu0 0
        %1425 = vmatpush2.bf16.msra.mxu0 %v1123
        %1426 = vmatprep.subr.bf16.mxu0 0
        %1427 = vmatpush2.bf16.msra.mxu0 %v1122
        %1428 = vmatprep.subr.bf16.mxu0 0
        %1429 = vmatpush2.bf16.msra.mxu0 %v1121
        %1430 = vmatprep.subr.bf16.mxu0 0
        %1431 = vmatpush2.bf16.msra.mxu0 %v1120
        %1432 = vmatprep.mubr.bf16.mxu0 %v501
        %1433 = vmatmul.mubr.bf16.gmra.mxu0 %v500
        %v1434 = vpop.f32.mrf.mxu0
        %v1435 = vadd.f32 %v471, %v1434
        %v1436 = vpop.f32.mrf.mxu0
        %v1437 = vpop.f32.mrf.mxu0
        %v1438 = vpop.f32.mrf.mxu0
        %1439 = vdwg.mxu0
        %1440 = vmatprep.subr.bf16.mxu0 0
        %1441 = vmatpush1.bf16.msra.mxu0 %v1135
        %1442 = vmatprep.subr.bf16.mxu0 0
        %1443 = vmatpush1.bf16.msra.mxu0 %v1134
        %1444 = vmatprep.subr.bf16.mxu0 0
        %1445 = vmatpush1.bf16.msra.mxu0 %v1133
        %1446 = vmatprep.subr.bf16.mxu0 0
        %1447 = vmatpush1.bf16.msra.mxu0 %v1132
        %1448 = vmatprep.subr.bf16.mxu0 0
        %1449 = vmatpush1.bf16.msra.mxu0 %v1131
        %1450 = vmatprep.subr.bf16.mxu0 0
        %1451 = vmatpush1.bf16.msra.mxu0 %v1130
        %1452 = vmatprep.subr.bf16.mxu0 0
        %1453 = vmatpush1.bf16.msra.mxu0 %v1129
        %1454 = vmatprep.subr.bf16.mxu0 0
        %1455 = vmatpush1.bf16.msra.mxu0 %v1128
        %1456 = vmatprep.subr.bf16.mxu0 0
        %1457 = vmatpush2.bf16.msra.mxu0 %v1143
        %1458 = vmatprep.subr.bf16.mxu0 0
        %1459 = vmatpush2.bf16.msra.mxu0 %v1142
        %1460 = vmatprep.subr.bf16.mxu0 0
        %1461 = vmatpush2.bf16.msra.mxu0 %v1141
        %1462 = vmatprep.subr.bf16.mxu0 0
        %1463 = vmatpush2.bf16.msra.mxu0 %v1140
        %1464 = vmatprep.subr.bf16.mxu0 0
        %1465 = vmatpush2.bf16.msra.mxu0 %v1139
        %1466 = vmatprep.subr.bf16.mxu0 0
        %1467 = vmatpush2.bf16.msra.mxu0 %v1138
        %1468 = vmatprep.subr.bf16.mxu0 0
        %1469 = vmatpush2.bf16.msra.mxu0 %v1137
        %1470 = vmatprep.subr.bf16.mxu0 0
        %1471 = vmatpush2.bf16.msra.mxu0 %v1136
        %1472 = vmatprep.mubr.bf16.mxu0 %v503
        %1473 = vmatmul.mubr.bf16.gmra.mxu0 %v502
        %v1474 = vpop.f32.mrf.mxu0
        %v1475 = vadd.f32 %v1435, %v1474
        %v1476 = vpop.f32.mrf.mxu0
        %v1477 = vpop.f32.mrf.mxu0
        %v1478 = vpop.f32.mrf.mxu0
        %1479 = vdwg.mxu0
        %1480 = vmatprep.subr.bf16.mxu0 0
        %1481 = vmatpush1.bf16.msra.mxu0 %v1151
        %1482 = vmatprep.subr.bf16.mxu0 0
        %1483 = vmatpush1.bf16.msra.mxu0 %v1150
        %1484 = vmatprep.subr.bf16.mxu0 0
        %1485 = vmatpush1.bf16.msra.mxu0 %v1149
        %1486 = vmatprep.subr.bf16.mxu0 0
        %1487 = vmatpush1.bf16.msra.mxu0 %v1148
        %1488 = vmatprep.subr.bf16.mxu0 0
        %1489 = vmatpush1.bf16.msra.mxu0 %v1147
        %1490 = vmatprep.subr.bf16.mxu0 0
        %1491 = vmatpush1.bf16.msra.mxu0 %v1146
        %1492 = vmatprep.subr.bf16.mxu0 0
        %1493 = vmatpush1.bf16.msra.mxu0 %v1145
        %1494 = vmatprep.subr.bf16.mxu0 0
        %1495 = vmatpush1.bf16.msra.mxu0 %v1144
        %1496 = vmatprep.subr.bf16.mxu0 0
        %1497 = vmatpush2.bf16.msra.mxu0 %v1159
        %1498 = vmatprep.subr.bf16.mxu0 0
        %1499 = vmatpush2.bf16.msra.mxu0 %v1158
        %1500 = vmatprep.subr.bf16.mxu0 0
        %1501 = vmatpush2.bf16.msra.mxu0 %v1157
        %1502 = vmatprep.subr.bf16.mxu0 0
        %1503 = vmatpush2.bf16.msra.mxu0 %v1156
        %1504 = vmatprep.subr.bf16.mxu0 0
        %1505 = vmatpush2.bf16.msra.mxu0 %v1155
        %1506 = vmatprep.subr.bf16.mxu0 0
        %1507 = vmatpush2.bf16.msra.mxu0 %v1154
        %1508 = vmatprep.subr.bf16.mxu0 0
        %1509 = vmatpush2.bf16.msra.mxu0 %v1153
        %1510 = vmatprep.subr.bf16.mxu0 0
        %1511 = vmatpush2.bf16.msra.mxu0 %v1152
        %1512 = vmatprep.mubr.bf16.mxu0 %v505
        %1513 = vmatmul.mubr.bf16.gmra.mxu0 %v504
        %v1514 = vpop.f32.mrf.mxu0
        %v1515 = vadd.f32 %v1475, %v1514
        %v1516 = vpop.f32.mrf.mxu0
        %v1517 = vpop.f32.mrf.mxu0
        %v1518 = vpop.f32.mrf.mxu0
        %1519 = vdwg.mxu0
        %1520 = vmatprep.subr.bf16.mxu0 0
        %1521 = vmatpush1.bf16.msra.mxu0 %v1167
        %1522 = vmatprep.subr.bf16.mxu0 0
        %1523 = vmatpush1.bf16.msra.mxu0 %v1166
        %1524 = vmatprep.subr.bf16.mxu0 0
        %1525 = vmatpush1.bf16.msra.mxu0 %v1165
        %1526 = vmatprep.subr.bf16.mxu0 0
        %1527 = vmatpush1.bf16.msra.mxu0 %v1164
        %1528 = vmatprep.subr.bf16.mxu0 0
        %1529 = vmatpush1.bf16.msra.mxu0 %v1163
        %1530 = vmatprep.subr.bf16.mxu0 0
        %1531 = vmatpush1.bf16.msra.mxu0 %v1162
        %1532 = vmatprep.subr.bf16.mxu0 0
        %1533 = vmatpush1.bf16.msra.mxu0 %v1161
        %1534 = vmatprep.subr.bf16.mxu0 0
        %1535 = vmatpush1.bf16.msra.mxu0 %v1160
        %1536 = vmatprep.subr.bf16.mxu0 0
        %1537 = vmatpush2.bf16.msra.mxu0 %v1175
        %1538 = vmatprep.subr.bf16.mxu0 0
        %1539 = vmatpush2.bf16.msra.mxu0 %v1174
        %1540 = vmatprep.subr.bf16.mxu0 0
        %1541 = vmatpush2.bf16.msra.mxu0 %v1173
        %1542 = vmatprep.subr.bf16.mxu0 0
        %1543 = vmatpush2.bf16.msra.mxu0 %v1172
        %1544 = vmatprep.subr.bf16.mxu0 0
        %1545 = vmatpush2.bf16.msra.mxu0 %v1171
        %1546 = vmatprep.subr.bf16.mxu0 0
        %1547 = vmatpush2.bf16.msra.mxu0 %v1170
        %1548 = vmatprep.subr.bf16.mxu0 0
        %1549 = vmatpush2.bf16.msra.mxu0 %v1169
        %1550 = vmatprep.subr.bf16.mxu0 0
        %1551 = vmatpush2.bf16.msra.mxu0 %v1168
        %1552 = vmatprep.mubr.bf16.mxu0 %v507
        %1553 = vmatmul.mubr.bf16.gmra.mxu0 %v506
        %v1554 = vpop.f32.mrf.mxu0
        %v1555 = vadd.f32 %v1515, %v1554
        %v1556 = vpop.f32.mrf.mxu0
        %v1557 = vpop.f32.mrf.mxu0
        %v1558 = vpop.f32.mrf.mxu0
        %1559 = vdwg.mxu0
        %1560 = vmatprep.subr.bf16.mxu0 0
        %1561 = vmatpush1.bf16.msra.mxu0 %v1183
        %1562 = vmatprep.subr.bf16.mxu0 0
        %1563 = vmatpush1.bf16.msra.mxu0 %v1182
        %1564 = vmatprep.subr.bf16.mxu0 0
        %1565 = vmatpush1.bf16.msra.mxu0 %v1181
        %1566 = vmatprep.subr.bf16.mxu0 0
        %1567 = vmatpush1.bf16.msra.mxu0 %v1180
        %1568 = vmatprep.subr.bf16.mxu0 0
        %1569 = vmatpush1.bf16.msra.mxu0 %v1179
        %1570 = vmatprep.subr.bf16.mxu0 0
        %1571 = vmatpush1.bf16.msra.mxu0 %v1178
        %1572 = vmatprep.subr.bf16.mxu0 0
        %1573 = vmatpush1.bf16.msra.mxu0 %v1177
        %1574 = vmatprep.subr.bf16.mxu0 0
        %1575 = vmatpush1.bf16.msra.mxu0 %v1176
        %1576 = vmatprep.subr.bf16.mxu0 0
        %1577 = vmatpush2.bf16.msra.mxu0 %v1191
        %1578 = vmatprep.subr.bf16.mxu0 0
        %1579 = vmatpush2.bf16.msra.mxu0 %v1190
        %1580 = vmatprep.subr.bf16.mxu0 0
        %1581 = vmatpush2.bf16.msra.mxu0 %v1189
        %1582 = vmatprep.subr.bf16.mxu0 0
        %1583 = vmatpush2.bf16.msra.mxu0 %v1188
        %1584 = vmatprep.subr.bf16.mxu0 0
        %1585 = vmatpush2.bf16.msra.mxu0 %v1187
        %1586 = vmatprep.subr.bf16.mxu0 0
        %1587 = vmatpush2.bf16.msra.mxu0 %v1186
        %1588 = vmatprep.subr.bf16.mxu0 0
        %1589 = vmatpush2.bf16.msra.mxu0 %v1185
        %1590 = vmatprep.subr.bf16.mxu0 0
        %1591 = vmatpush2.bf16.msra.mxu0 %v1184
        %1592 = vmatprep.mubr.bf16.mxu0 %v509
        %1593 = vmatmul.mubr.bf16.gmra.mxu0 %v508
        %v1594 = vpop.f32.mrf.mxu0
        %v1595 = vadd.f32 %v1555, %v1594
        %v1596 = vpop.f32.mrf.mxu0
        %v1597 = vpop.f32.mrf.mxu0
        %v1598 = vpop.f32.mrf.mxu0
        %1599 = vdwg.mxu0
        %1600 = vmatprep.subr.bf16.mxu0 0
        %1601 = vmatpush1.bf16.msra.mxu0 %v1199
        %1602 = vmatprep.subr.bf16.mxu0 0
        %1603 = vmatpush1.bf16.msra.mxu0 %v1198
        %1604 = vmatprep.subr.bf16.mxu0 0
        %1605 = vmatpush1.bf16.msra.mxu0 %v1197
        %1606 = vmatprep.subr.bf16.mxu0 0
        %1607 = vmatpush1.bf16.msra.mxu0 %v1196
        %1608 = vmatprep.subr.bf16.mxu0 0
        %1609 = vmatpush1.bf16.msra.mxu0 %v1195
        %1610 = vmatprep.subr.bf16.mxu0 0
        %1611 = vmatpush1.bf16.msra.mxu0 %v1194
        %1612 = vmatprep.subr.bf16.mxu0 0
        %1613 = vmatpush1.bf16.msra.mxu0 %v1193
        %1614 = vmatprep.subr.bf16.mxu0 0
        %1615 = vmatpush1.bf16.msra.mxu0 %v1192
        %1616 = vmatprep.subr.bf16.mxu0 0
        %1617 = vmatpush2.bf16.msra.mxu0 %v1207
        %1618 = vmatprep.subr.bf16.mxu0 0
        %1619 = vmatpush2.bf16.msra.mxu0 %v1206
        %1620 = vmatprep.subr.bf16.mxu0 0
        %1621 = vmatpush2.bf16.msra.mxu0 %v1205
        %1622 = vmatprep.subr.bf16.mxu0 0
        %1623 = vmatpush2.bf16.msra.mxu0 %v1204
        %1624 = vmatprep.subr.bf16.mxu0 0
        %1625 = vmatpush2.bf16.msra.mxu0 %v1203
        %1626 = vmatprep.subr.bf16.mxu0 0
        %1627 = vmatpush2.bf16.msra.mxu0 %v1202
        %1628 = vmatprep.subr.bf16.mxu0 0
        %1629 = vmatpush2.bf16.msra.mxu0 %v1201
        %1630 = vmatprep.subr.bf16.mxu0 0
        %1631 = vmatpush2.bf16.msra.mxu0 %v1200
        %1632 = vmatprep.mubr.bf16.mxu0 %v511
        %1633 = vmatmul.mubr.bf16.gmra.mxu0 %v510
        %v1634 = vpop.f32.mrf.mxu0
        %v1635 = vadd.f32 %v1595, %v1634
        %v1636 = vpop.f32.mrf.mxu0
        %v1637 = vpop.f32.mrf.mxu0
        %v1638 = vpop.f32.mrf.mxu0
        %1639 = vdwg.mxu0
        %1640 = vmatprep.subr.bf16.mxu0 0
        %1641 = vmatpush1.bf16.msra.mxu0 %v1215
        %1642 = vmatprep.subr.bf16.mxu0 0
        %1643 = vmatpush1.bf16.msra.mxu0 %v1214
        %1644 = vmatprep.subr.bf16.mxu0 0
        %1645 = vmatpush1.bf16.msra.mxu0 %v1213
        %1646 = vmatprep.subr.bf16.mxu0 0
        %1647 = vmatpush1.bf16.msra.mxu0 %v1212
        %1648 = vmatprep.subr.bf16.mxu0 0
        %1649 = vmatpush1.bf16.msra.mxu0 %v1211
        %1650 = vmatprep.subr.bf16.mxu0 0
        %1651 = vmatpush1.bf16.msra.mxu0 %v1210
        %1652 = vmatprep.subr.bf16.mxu0 0
        %1653 = vmatpush1.bf16.msra.mxu0 %v1209
        %1654 = vmatprep.subr.bf16.mxu0 0
        %1655 = vmatpush1.bf16.msra.mxu0 %v1208
        %1656 = vmatprep.subr.bf16.mxu0 0
        %1657 = vmatpush2.bf16.msra.mxu0 %v1223
        %1658 = vmatprep.subr.bf16.mxu0 0
        %1659 = vmatpush2.bf16.msra.mxu0 %v1222
        %1660 = vmatprep.subr.bf16.mxu0 0
        %1661 = vmatpush2.bf16.msra.mxu0 %v1221
        %1662 = vmatprep.subr.bf16.mxu0 0
        %1663 = vmatpush2.bf16.msra.mxu0 %v1220
        %1664 = vmatprep.subr.bf16.mxu0 0
        %1665 = vmatpush2.bf16.msra.mxu0 %v1219
        %1666 = vmatprep.subr.bf16.mxu0 0
        %1667 = vmatpush2.bf16.msra.mxu0 %v1218
        %1668 = vmatprep.subr.bf16.mxu0 0
        %1669 = vmatpush2.bf16.msra.mxu0 %v1217
        %1670 = vmatprep.subr.bf16.mxu0 0
        %1671 = vmatpush2.bf16.msra.mxu0 %v1216
        %1672 = vmatprep.mubr.bf16.mxu0 %v513
        %1673 = vmatmul.mubr.bf16.gmra.mxu0 %v512
        %v1674 = vpop.f32.mrf.mxu0
        %v1675 = vadd.f32 %v1635, %v1674
        %v1676 = vpop.f32.mrf.mxu0
        %v1677 = vpop.f32.mrf.mxu0
        %v1678 = vpop.f32.mrf.mxu0
        %1679 = vdwg.mxu0
        %1680 = vmatprep.subr.bf16.mxu0 0
        %1681 = vmatpush1.bf16.msra.mxu0 %v1231
        %1682 = vmatprep.subr.bf16.mxu0 0
        %1683 = vmatpush1.bf16.msra.mxu0 %v1230
        %1684 = vmatprep.subr.bf16.mxu0 0
        %1685 = vmatpush1.bf16.msra.mxu0 %v1229
        %1686 = vmatprep.subr.bf16.mxu0 0
        %1687 = vmatpush1.bf16.msra.mxu0 %v1228
        %1688 = vmatprep.subr.bf16.mxu0 0
        %1689 = vmatpush1.bf16.msra.mxu0 %v1227
        %1690 = vmatprep.subr.bf16.mxu0 0
        %1691 = vmatpush1.bf16.msra.mxu0 %v1226
        %1692 = vmatprep.subr.bf16.mxu0 0
        %1693 = vmatpush1.bf16.msra.mxu0 %v1225
        %1694 = vmatprep.subr.bf16.mxu0 0
        %1695 = vmatpush1.bf16.msra.mxu0 %v1224
        %1696 = vmatprep.subr.bf16.mxu0 0
        %1697 = vmatpush2.bf16.msra.mxu0 %v1239
        %1698 = vmatprep.subr.bf16.mxu0 0
        %1699 = vmatpush2.bf16.msra.mxu0 %v1238
        %1700 = vmatprep.subr.bf16.mxu0 0
        %1701 = vmatpush2.bf16.msra.mxu0 %v1237
        %1702 = vmatprep.subr.bf16.mxu0 0
        %1703 = vmatpush2.bf16.msra.mxu0 %v1236
        %1704 = vmatprep.subr.bf16.mxu0 0
        %1705 = vmatpush2.bf16.msra.mxu0 %v1235
        %1706 = vmatprep.subr.bf16.mxu0 0
        %1707 = vmatpush2.bf16.msra.mxu0 %v1234
        %1708 = vmatprep.subr.bf16.mxu0 0
        %1709 = vmatpush2.bf16.msra.mxu0 %v1233
        %1710 = vmatprep.subr.bf16.mxu0 0
        %1711 = vmatpush2.bf16.msra.mxu0 %v1232
        %1712 = vmatprep.mubr.bf16.mxu0 %v515
        %1713 = vmatmul.mubr.bf16.gmra.mxu0 %v514
        %v1714 = vpop.f32.mrf.mxu0
        %v1715 = vadd.f32 %v1675, %v1714
        %v1716 = vpop.f32.mrf.mxu0
        %v1717 = vpop.f32.mrf.mxu0
        %v1718 = vpop.f32.mrf.mxu0
        %1719 = vdwg.mxu0
        %1720 = vmatprep.subr.bf16.mxu0 0
        %1721 = vmatpush1.bf16.msra.mxu0 %v1247
        %1722 = vmatprep.subr.bf16.mxu0 0
        %1723 = vmatpush1.bf16.msra.mxu0 %v1246
        %1724 = vmatprep.subr.bf16.mxu0 0
        %1725 = vmatpush1.bf16.msra.mxu0 %v1245
        %1726 = vmatprep.subr.bf16.mxu0 0
        %1727 = vmatpush1.bf16.msra.mxu0 %v1244
        %1728 = vmatprep.subr.bf16.mxu0 0
        %1729 = vmatpush1.bf16.msra.mxu0 %v1243
        %1730 = vmatprep.subr.bf16.mxu0 0
        %1731 = vmatpush1.bf16.msra.mxu0 %v1242
        %1732 = vmatprep.subr.bf16.mxu0 0
        %1733 = vmatpush1.bf16.msra.mxu0 %v1241
        %1734 = vmatprep.subr.bf16.mxu0 0
        %1735 = vmatpush1.bf16.msra.mxu0 %v1240
        %1736 = vmatprep.subr.bf16.mxu0 0
        %1737 = vmatpush2.bf16.msra.mxu0 %v1255
        %1738 = vmatprep.subr.bf16.mxu0 0
        %1739 = vmatpush2.bf16.msra.mxu0 %v1254
        %1740 = vmatprep.subr.bf16.mxu0 0
        %1741 = vmatpush2.bf16.msra.mxu0 %v1253
        %1742 = vmatprep.subr.bf16.mxu0 0
        %1743 = vmatpush2.bf16.msra.mxu0 %v1252
        %1744 = vmatprep.subr.bf16.mxu0 0
        %1745 = vmatpush2.bf16.msra.mxu0 %v1251
        %1746 = vmatprep.subr.bf16.mxu0 0
        %1747 = vmatpush2.bf16.msra.mxu0 %v1250
        %1748 = vmatprep.subr.bf16.mxu0 0
        %1749 = vmatpush2.bf16.msra.mxu0 %v1249
        %1750 = vmatprep.subr.bf16.mxu0 0
        %1751 = vmatpush2.bf16.msra.mxu0 %v1248
        %1752 = vmatprep.mubr.bf16.mxu0 %v517
        %1753 = vmatmul.mubr.bf16.gmra.mxu0 %v516
        %v1754 = vpop.f32.mrf.mxu0
        %v1755 = vadd.f32 %v1715, %v1754
        %v1756 = vpop.f32.mrf.mxu0
        %v1757 = vpop.f32.mrf.mxu0
        %v1758 = vpop.f32.mrf.mxu0
        %1759 = vdwg.mxu0
        %v1760 = vxor.u32 %v1755, 2147483648
        %v1761 = vmul.f32 %v1760, 1.442695
        %v1762 = vpow.pop %v1761
        %v1763 = vadd.f32 %v1762, 1.0
        %v1764 = vrcp.pop %v1763
        %v1765 = vmul.f32 1.0, %v1764
        %v1766 = vmul.f32 %v1755, %v1765
        %v1767 = vlaneseq
        %v1768 = vshrl.u32 %v1767, 7
        %vm1769 = vcmp.lt.s32.totalorder %v1768, 4
        %v1770 = vsel %vm1769, %v1766, 0.0
        %v1771 = vrot.slane %v1770, 4
        %v1772 = vadd.f32 %v1770, %v1771
        %v1773 = vrot.slane %v1772, 2
        %v1774 = vadd.f32 %v1772, %v1773
        %v1775 = vrot.slane %v1774, 1
        %v1776 = vadd.f32 %v1774, %v1775
        %v1777 = vmul.f32 %v1776, 0.25
        %1778 = vst [vmem:[%s162] sm:$0x1] %v1777
        %s1779 = sand.u32 %s93, 1
        %s1780 = scalar_lea.sflag [#allocation3], %s1779
        %s1781 = sand.u32 %s93, 1
        %s1782 = scalar_lea.vmem [#allocation2], %s1781
        // Predicated region
        $region33: #{_lambda_.7} parent=31 // pred_check
          %p1783 = pneg %p103
        $region34: #{_lambda_.7} parent=31 // pred_check_branch
          %1785 = sbr.rel (%p1783) target = $region36
        $region35: #{_lambda_.7} parent=31 // pred_region
          %s1787 = ssub.s32 16, 16
          %1788 = vsyncadd %s1780, %s1787
          %s1789 = smul.addr %s17, 16
          %s1790 = scalar_lea.hbm %s3, %s1789
          %s1792 = sshll.u32 %s1782, 4
          %s1793 = int_to_ptr.vmem [resolvable:$true] %s1792
          %1795 = dma.vmem_to_hbm [thread:$0]  %s1793, 16, %s1790, %s1780
        $region36: #{_lambda_.7} parent=31 // pred_fallthru
          _
      $region32: #{_lambda_.7} parent=5 // pred_fallthru
        _
      %p1796 = scmp.le.s32.totalorder 2, %s12
      // Predicated region
      $region37: #{_lambda_.7} parent=5 // pred_check
        %p1797 = pneg %p1796
      $region38: #{_lambda_.7} parent=5 // pred_check_branch
        %1799 = sbr.rel (%p1797) target = $region40
      $region39: #{_lambda_.7} parent=5 // pred_region
        %s1800 = ssub.s32 %s12, 2
        // Predicated region
        $region41: #{_lambda_.7} parent=39 // pred_check
          %p1801 = pneg %p109
        $region42: #{_lambda_.7} parent=39 // pred_check_branch
          %1803 = sbr.rel (%p1801) target = $region44
        $region43: #{_lambda_.7} parent=39 // pred_region
          %s1804 = sand.u32 %s94, 1
          %s1805 = scalar_lea.sflag [#allocation3], %s1804
          %s1806 = sand.u32 %s94, 1
          %s1807 = scalar_lea.vmem [#allocation2], %s1806
          %1808 = dma.done %s1805, 16
        $region44: #{_lambda_.7} parent=39 // pred_fallthru
          _
      $region40: #{_lambda_.7} parent=5 // pred_fallthru
        _
    $region6: #{_lambda_.7} parent=1 // loop_footer
      %s16 = sadd.s32 1, %s12
    $region7: #{_lambda_.7} parent=1 // loop_footer_branch
      %11 = sbr.rel target = $region3
    $region8: #{_lambda_.7} parent=1 // loop_exit
      _
    %1809 = vsyncpa [#allocation3], 1
    %s1810 = scalar_lea.sflag [#allocation3], 1
    %1811 = vsyncpa %s1810, 1

</llo_original>
